<compile_context>
chip_gen: v6e
topology: v6e:2x2x1
jax: 0.10.0
libtpu: 0.0.40
codegen_flags: <defaults>
</compile_context>

<pallas_src>
import math

import jax
import jax.numpy as jnp
from jax.experimental import pallas as pl
from jax.experimental.pallas import tpu as pltpu

# Logical (PyTorch-module) dimensions.
INPUT_DIM = 5 * 256          # 1280
HIDDEN_1 = INPUT_DIM // 3    # 426
HIDDEN_2 = INPUT_DIM // 8    # 160
LATENT_DIM = 8
OUTPUT_DIM = 256

# Lane-aligned (multiple-of-128) padded dimensions used inside the kernel.
HIDDEN_1_PAD = 512
HIDDEN_2_PAD = 256
LATENT_PAD = 128
HEAD_PAD = 2 * LATENT_PAD    # fused mu | log_var head width


def _round_up(n, m):
    return ((n + m - 1) // m) * m


def vae_kernel(x_ref, eps_ref,
               w1_ref, b1_ref, w2_ref, b2_ref,
               wh_ref, bh_ref,
               wd1_ref, bd1_ref, wd2_ref, bd2_ref, wd3_ref, bd3_ref,
               recon_ref, head_ref):
    # Encoder: Linear -> ReLU -> Linear -> ReLU (bf16 matmuls, f32 accumulate).
    x = x_ref[...].astype(jnp.bfloat16)
    h1 = jnp.dot(x, w1_ref[...], preferred_element_type=jnp.float32) + b1_ref[...]
    h1 = jnp.maximum(h1, 0.0)
    h2 = jnp.dot(h1.astype(jnp.bfloat16), w2_ref[...],
                 preferred_element_type=jnp.float32) + b2_ref[...]
    h2 = jnp.maximum(h2, 0.0)

    # Fused mu|log_var head: one matmul, mu in lanes [0:128), log_var in [128:256).
    head = jnp.dot(h2.astype(jnp.bfloat16), wh_ref[...],
                   preferred_element_type=jnp.float32) + bh_ref[...]
    mu = head[:, :LATENT_PAD]
    log_var = head[:, LATENT_PAD:]

    # Reparameterize: z = mu + eps * exp(0.5 * log_var).
    # Padded latent lanes stay exactly zero (mu=0, log_var=0 -> std=1, eps=0).
    z = mu + eps_ref[...] * jnp.exp(0.5 * log_var)

    # Decoder: Linear -> ReLU -> Linear -> ReLU -> Linear -> Tanh, then * 6.
    d1 = jnp.dot(z.astype(jnp.bfloat16), wd1_ref[...],
                 preferred_element_type=jnp.float32) + bd1_ref[...]
    d1 = jnp.maximum(d1, 0.0)
    d2 = jnp.dot(d1.astype(jnp.bfloat16), wd2_ref[...],
                 preferred_element_type=jnp.float32) + bd2_ref[...]
    d2 = jnp.maximum(d2, 0.0)
    d3 = jnp.dot(d2.astype(jnp.bfloat16), wd3_ref[...],
                 preferred_element_type=jnp.float32) + bd3_ref[...]

    recon_ref[...] = jnp.tanh(d3) * 6.0
    head_ref[...] = head


def _linear_params(key, in_dim, out_dim):
    """Deterministic PyTorch-style init: U(-1/sqrt(fan_in), 1/sqrt(fan_in))."""
    kw, kb = jax.random.split(key)
    bound = 1.0 / math.sqrt(in_dim)
    w = jax.random.uniform(kw, (in_dim, out_dim), jnp.float32, -bound, bound)
    b = jax.random.uniform(kb, (1, out_dim), jnp.float32, -bound, bound)
    return w, b


def init_vae_params(key):
    """Logical (unpadded) f32 parameters, weights stored as [in, out]."""
    keys = jax.random.split(key, 7)
    w1, b1 = _linear_params(keys[0], INPUT_DIM, HIDDEN_1)
    w2, b2 = _linear_params(keys[1], HIDDEN_1, HIDDEN_2)
    wmu, bmu = _linear_params(keys[2], HIDDEN_2, LATENT_DIM)
    wlv, blv = _linear_params(keys[3], HIDDEN_2, LATENT_DIM)
    wd1, bd1 = _linear_params(keys[4], LATENT_DIM, HIDDEN_2)
    wd2, bd2 = _linear_params(keys[5], HIDDEN_2, HIDDEN_1)
    wd3, bd3 = _linear_params(keys[6], HIDDEN_1, OUTPUT_DIM)
    return (w1, b1, w2, b2, wmu, bmu, wlv, blv,
            wd1, bd1, wd2, bd2, wd3, bd3)


def pack_vae_params(params):
    """Zero-pad to lane-aligned shapes, fuse mu|log_var head, cast weights to bf16."""
    (w1, b1, w2, b2, wmu, bmu, wlv, blv,
     wd1, bd1, wd2, bd2, wd3, bd3) = params

    def pad_w(w, rows, cols):
        out = jnp.zeros((rows, cols), jnp.float32)
        return out.at[:w.shape[0], :w.shape[1]].set(w)

    def pad_b(b, cols):
        out = jnp.zeros((1, cols), jnp.float32)
        return out.at[:, :b.shape[1]].set(b)

    w1p = pad_w(w1, INPUT_DIM, HIDDEN_1_PAD).astype(jnp.bfloat16)
    b1p = pad_b(b1, HIDDEN_1_PAD)
    w2p = pad_w(w2, HIDDEN_1_PAD, HIDDEN_2_PAD).astype(jnp.bfloat16)
    b2p = pad_b(b2, HIDDEN_2_PAD)

    # Fused mu | log_var head.
    wh = jnp.zeros((HIDDEN_2_PAD, HEAD_PAD), jnp.float32)
    wh = wh.at[:HIDDEN_2, :LATENT_DIM].set(wmu)
    wh = wh.at[:HIDDEN_2, LATENT_PAD:LATENT_PAD + LATENT_DIM].set(wlv)
    bh = jnp.zeros((1, HEAD_PAD), jnp.float32)
    bh = bh.at[:, :LATENT_DIM].set(bmu)
    bh = bh.at[:, LATENT_PAD:LATENT_PAD + LATENT_DIM].set(blv)

    wd1p = pad_w(wd1, LATENT_PAD, HIDDEN_2_PAD).astype(jnp.bfloat16)
    bd1p = pad_b(bd1, HIDDEN_2_PAD)
    wd2p = pad_w(wd2, HIDDEN_2_PAD, HIDDEN_1_PAD).astype(jnp.bfloat16)
    bd2p = pad_b(bd2, HIDDEN_1_PAD)
    wd3p = pad_w(wd3, HIDDEN_1_PAD, OUTPUT_DIM).astype(jnp.bfloat16)
    bd3p = pad_b(bd3, OUTPUT_DIM)

    return (w1p, b1p, w2p, b2p, wh.astype(jnp.bfloat16), bh,
            wd1p, bd1p, wd2p, bd2p, wd3p, bd3p)


def vae_forward(x, eps, packed_params, *, batch_tile=128):
    """Fused VAE forward. x: [B, INPUT_DIM] f32, eps: [B, LATENT_DIM] f32.

    Returns (recon [B, OUTPUT_DIM], mu [B, LATENT_DIM], log_var [B, LATENT_DIM]).
    """
    b = x.shape[0]
    tb = min(batch_tile, _round_up(b, 8))      # batch tile (multiple of 8 sublanes)
    b_pad = _round_up(b, tb)

    x_p = x if b_pad == b else jnp.pad(x, ((0, b_pad - b), (0, 0)))
    eps_p = jnp.pad(eps, ((0, b_pad - b), (0, LATENT_PAD - LATENT_DIM)))

    grid = (b_pad // tb,)

    def batch_spec(cols):
        return pl.BlockSpec((tb, cols), lambda i: (i, 0))

    def resident_spec(arr):
        # Full-array block, constant index -> stays VMEM-resident across batch tiles.
        return pl.BlockSpec(arr.shape, lambda i: (0, 0))

    in_specs = [batch_spec(INPUT_DIM), batch_spec(LATENT_PAD)]
    in_specs += [resident_spec(p) for p in packed_params]

    out_shape = (
        jax.ShapeDtypeStruct((b_pad, OUTPUT_DIM), jnp.float32),
        jax.ShapeDtypeStruct((b_pad, HEAD_PAD), jnp.float32),
    )
    out_specs = (batch_spec(OUTPUT_DIM), batch_spec(HEAD_PAD))

    recon_p, head_p = pl.pallas_call(
        vae_kernel,
        grid=grid,
        in_specs=in_specs,
        out_specs=out_specs,
        out_shape=out_shape,
        compiler_params=pltpu.CompilerParams(
            dimension_semantics=("parallel",)),
    )(x_p, eps_p, *packed_params)

    recon = recon_p[:b]
    mu = head_p[:b, :LATENT_DIM]
    log_var = head_p[:b, LATENT_PAD:LATENT_PAD + LATENT_DIM]
    return recon, mu, log_var


def vae_reference(x, eps, params):
    """Pure-JAX f32 reference of the PyTorch forward (for a loose sanity check)."""
    (w1, b1, w2, b2, wmu, bmu, wlv, blv,
     wd1, bd1, wd2, bd2, wd3, bd3) = params
    h = jnp.maximum(x @ w1 + b1, 0.0)
    h = jnp.maximum(h @ w2 + b2, 0.0)
    mu = h @ wmu + bmu
    lv = h @ wlv + blv
    z = mu + eps * jnp.exp(0.5 * lv)
    d = jnp.maximum(z @ wd1 + bd1, 0.0)
    d = jnp.maximum(d @ wd2 + bd2, 0.0)
    recon = jnp.tanh(d @ wd3 + bd3) * 6.0
    return recon, mu, lv


if __name__ == "__main__":
    key = jax.random.PRNGKey(0)
    k_params, k_x, k_eps = jax.random.split(key, 3)

    params = init_vae_params(k_params)
    packed = pack_vae_params(params)

    batch = 8
    x = jax.random.normal(k_x, (batch, INPUT_DIM), jnp.float32)
    # torch.randn_like(std) has no cross-framework deterministic match, so the
    # Gaussian noise is sampled once outside and fed to the kernel.
    eps = jax.random.normal(k_eps, (batch, LATENT_DIM), jnp.float32)

    recon, mu, log_var = vae_forward(x, eps, packed)
    jax.block_until_ready((recon, mu, log_var))

    assert recon.shape == (batch, OUTPUT_DIM)
    assert mu.shape == (batch, LATENT_DIM)
    assert log_var.shape == (batch, LATENT_DIM)

    # Loose sanity check vs. f32 reference (kernel uses bf16 weights/matmuls).
    r_ref, mu_ref, lv_ref = vae_reference(x, eps, params)
    assert float(jnp.max(jnp.abs(recon - r_ref))) < 0.25
    assert float(jnp.max(jnp.abs(mu - mu_ref))) < 0.25
    assert float(jnp.max(jnp.abs(log_var - lv_ref))) < 0.25

    print("KERNEL_OK")
</pallas_src>

<mosaic_0001>
module attributes {stable_mosaic.version = 11 : i64} {
  func.func @vae_kernel(%arg0: i32, %arg1: memref<8x1280xf32, #tpu.memory_space<vmem>>, %arg2: memref<8x128xf32, #tpu.memory_space<vmem>>, %arg3: memref<1280x512xbf16, #tpu.memory_space<vmem>>, %arg4: memref<1x512xf32, #tpu.memory_space<vmem>>, %arg5: memref<512x256xbf16, #tpu.memory_space<vmem>>, %arg6: memref<1x256xf32, #tpu.memory_space<vmem>>, %arg7: memref<256x256xbf16, #tpu.memory_space<vmem>>, %arg8: memref<1x256xf32, #tpu.memory_space<vmem>>, %arg9: memref<128x256xbf16, #tpu.memory_space<vmem>>, %arg10: memref<1x256xf32, #tpu.memory_space<vmem>>, %arg11: memref<256x512xbf16, #tpu.memory_space<vmem>>, %arg12: memref<1x512xf32, #tpu.memory_space<vmem>>, %arg13: memref<512x256xbf16, #tpu.memory_space<vmem>>, %arg14: memref<1x256xf32, #tpu.memory_space<vmem>>, %arg15: memref<8x256xf32, #tpu.memory_space<vmem>>, %arg16: memref<8x256xf32, #tpu.memory_space<vmem>>) attributes {dimension_semantics = [#tpu.dimension_semantics<parallel>], iteration_bounds = array<i64: 1>, scalar_prefetch = 0 : i64, scratch_operands = 0 : i64, tpu.core_type = #tpu.core_type<tc>, window_params = [{transform_indices = @transform_0, window_bounds = array<i64: 8, 1280>}, {transform_indices = @transform_1, window_bounds = array<i64: 8, 128>}, {pipeline_mode = #tpu.pipeline_mode<synchronous>, transform_indices = @transform_2, window_bounds = array<i64: 1280, 512>}, {pipeline_mode = #tpu.pipeline_mode<synchronous>, transform_indices = @transform_3, window_bounds = array<i64: 1, 512>}, {pipeline_mode = #tpu.pipeline_mode<synchronous>, transform_indices = @transform_4, window_bounds = array<i64: 512, 256>}, {pipeline_mode = #tpu.pipeline_mode<synchronous>, transform_indices = @transform_5, window_bounds = array<i64: 1, 256>}, {pipeline_mode = #tpu.pipeline_mode<synchronous>, transform_indices = @transform_6, window_bounds = array<i64: 256, 256>}, {pipeline_mode = #tpu.pipeline_mode<synchronous>, transform_indices = @transform_7, window_bounds = array<i64: 1, 256>}, {pipeline_mode = #tpu.pipeline_mode<synchronous>, transform_indices = @transform_8, window_bounds = array<i64: 128, 256>}, {pipeline_mode = #tpu.pipeline_mode<synchronous>, transform_indices = @transform_9, window_bounds = array<i64: 1, 256>}, {pipeline_mode = #tpu.pipeline_mode<synchronous>, transform_indices = @transform_10, window_bounds = array<i64: 256, 512>}, {pipeline_mode = #tpu.pipeline_mode<synchronous>, transform_indices = @transform_11, window_bounds = array<i64: 1, 512>}, {pipeline_mode = #tpu.pipeline_mode<synchronous>, transform_indices = @transform_12, window_bounds = array<i64: 512, 256>}, {pipeline_mode = #tpu.pipeline_mode<synchronous>, transform_indices = @transform_13, window_bounds = array<i64: 1, 256>}, {transform_indices = @transform_14, window_bounds = array<i64: 8, 256>}, {transform_indices = @transform_15, window_bounds = array<i64: 8, 256>}]} {
    %c0 = arith.constant 0 : index
    %c0_0 = arith.constant 0 : index
    %0 = vector.load %arg1[%c0, %c0_0] : memref<8x1280xf32, #tpu.memory_space<vmem>>, vector<8x1280xf32>
    %1 = arith.truncf %0 : vector<8x1280xf32> to vector<8x1280xbf16>
    %c0_1 = arith.constant 0 : index
    %c0_2 = arith.constant 0 : index
    %2 = vector.load %arg3[%c0_1, %c0_2] : memref<1280x512xbf16, #tpu.memory_space<vmem>>, vector<1280x512xbf16>
    %cst = arith.constant dense<0.000000e+00> : vector<8x512xf32>
    %3 = tpu.matmul %1, %2, %cst {dimension_numbers = #tpu.dot_dimension_numbers<[1], [0], [0], [1], [0, 0, 1, 1], [], []>} : vector<8x1280xbf16>, vector<1280x512xbf16>, vector<8x512xf32> -> vector<8x512xf32>
    %c0_3 = arith.constant 0 : index
    %c0_4 = arith.constant 0 : index
    %4 = vector.load %arg4[%c0_3, %c0_4] : memref<1x512xf32, #tpu.memory_space<vmem>>, vector<1x512xf32>
    %5 = vector.broadcast %4 : vector<1x512xf32> to vector<8x512xf32>
    %6 = arith.addf %3, %5 : vector<8x512xf32>
    %cst_5 = arith.constant 0.000000e+00 : f32
    %7 = vector.broadcast %cst_5 : f32 to vector<8x512xf32>
    %8 = arith.maximumf %6, %7 : vector<8x512xf32>
    %9 = arith.truncf %8 : vector<8x512xf32> to vector<8x512xbf16>
    %c0_6 = arith.constant 0 : index
    %c0_7 = arith.constant 0 : index
    %10 = vector.load %arg5[%c0_6, %c0_7] : memref<512x256xbf16, #tpu.memory_space<vmem>>, vector<512x256xbf16>
    %cst_8 = arith.constant dense<0.000000e+00> : vector<8x256xf32>
    %11 = tpu.matmul %9, %10, %cst_8 {dimension_numbers = #tpu.dot_dimension_numbers<[1], [0], [0], [1], [0, 0, 1, 1], [], []>} : vector<8x512xbf16>, vector<512x256xbf16>, vector<8x256xf32> -> vector<8x256xf32>
    %c0_9 = arith.constant 0 : index
    %c0_10 = arith.constant 0 : index
    %12 = vector.load %arg6[%c0_9, %c0_10] : memref<1x256xf32, #tpu.memory_space<vmem>>, vector<1x256xf32>
    %13 = vector.broadcast %12 : vector<1x256xf32> to vector<8x256xf32>
    %14 = arith.addf %11, %13 : vector<8x256xf32>
    %cst_11 = arith.constant 0.000000e+00 : f32
    %15 = vector.broadcast %cst_11 : f32 to vector<8x256xf32>
    %16 = arith.maximumf %14, %15 : vector<8x256xf32>
    %17 = arith.truncf %16 : vector<8x256xf32> to vector<8x256xbf16>
    %c0_12 = arith.constant 0 : index
    %c0_13 = arith.constant 0 : index
    %18 = vector.load %arg7[%c0_12, %c0_13] : memref<256x256xbf16, #tpu.memory_space<vmem>>, vector<256x256xbf16>
    %cst_14 = arith.constant dense<0.000000e+00> : vector<8x256xf32>
    %19 = tpu.matmul %17, %18, %cst_14 {dimension_numbers = #tpu.dot_dimension_numbers<[1], [0], [0], [1], [0, 0, 1, 1], [], []>} : vector<8x256xbf16>, vector<256x256xbf16>, vector<8x256xf32> -> vector<8x256xf32>
    %c0_15 = arith.constant 0 : index
    %c0_16 = arith.constant 0 : index
    %20 = vector.load %arg8[%c0_15, %c0_16] : memref<1x256xf32, #tpu.memory_space<vmem>>, vector<1x256xf32>
    %21 = vector.broadcast %20 : vector<1x256xf32> to vector<8x256xf32>
    %22 = arith.addf %19, %21 : vector<8x256xf32>
    %23 = vector.extract_strided_slice %22 {offsets = [0, 0], sizes = [8, 128], strides = [1, 1]} : vector<8x256xf32> to vector<8x128xf32>
    %24 = vector.extract_strided_slice %22 {offsets = [0, 128], sizes = [8, 128], strides = [1, 1]} : vector<8x256xf32> to vector<8x128xf32>
    %c0_17 = arith.constant 0 : index
    %c0_18 = arith.constant 0 : index
    %25 = vector.load %arg2[%c0_17, %c0_18] : memref<8x128xf32, #tpu.memory_space<vmem>>, vector<8x128xf32>
    %cst_19 = arith.constant 5.000000e-01 : f32
    %26 = vector.broadcast %cst_19 : f32 to vector<8x128xf32>
    %27 = arith.mulf %26, %24 : vector<8x128xf32>
    %28 = math.exp %27 : vector<8x128xf32>
    %29 = arith.mulf %25, %28 : vector<8x128xf32>
    %30 = arith.addf %23, %29 : vector<8x128xf32>
    %31 = arith.truncf %30 : vector<8x128xf32> to vector<8x128xbf16>
    %c0_20 = arith.constant 0 : index
    %c0_21 = arith.constant 0 : index
    %32 = vector.load %arg9[%c0_20, %c0_21] : memref<128x256xbf16, #tpu.memory_space<vmem>>, vector<128x256xbf16>
    %cst_22 = arith.constant dense<0.000000e+00> : vector<8x256xf32>
    %33 = tpu.matmul %31, %32, %cst_22 {dimension_numbers = #tpu.dot_dimension_numbers<[1], [0], [0], [1], [0, 0, 1, 1], [], []>} : vector<8x128xbf16>, vector<128x256xbf16>, vector<8x256xf32> -> vector<8x256xf32>
    %c0_23 = arith.constant 0 : index
    %c0_24 = arith.constant 0 : index
    %34 = vector.load %arg10[%c0_23, %c0_24] : memref<1x256xf32, #tpu.memory_space<vmem>>, vector<1x256xf32>
    %35 = vector.broadcast %34 : vector<1x256xf32> to vector<8x256xf32>
    %36 = arith.addf %33, %35 : vector<8x256xf32>
    %cst_25 = arith.constant 0.000000e+00 : f32
    %37 = vector.broadcast %cst_25 : f32 to vector<8x256xf32>
    %38 = arith.maximumf %36, %37 : vector<8x256xf32>
    %39 = arith.truncf %38 : vector<8x256xf32> to vector<8x256xbf16>
    %c0_26 = arith.constant 0 : index
    %c0_27 = arith.constant 0 : index
    %40 = vector.load %arg11[%c0_26, %c0_27] : memref<256x512xbf16, #tpu.memory_space<vmem>>, vector<256x512xbf16>
    %cst_28 = arith.constant dense<0.000000e+00> : vector<8x512xf32>
    %41 = tpu.matmul %39, %40, %cst_28 {dimension_numbers = #tpu.dot_dimension_numbers<[1], [0], [0], [1], [0, 0, 1, 1], [], []>} : vector<8x256xbf16>, vector<256x512xbf16>, vector<8x512xf32> -> vector<8x512xf32>
    %c0_29 = arith.constant 0 : index
    %c0_30 = arith.constant 0 : index
    %42 = vector.load %arg12[%c0_29, %c0_30] : memref<1x512xf32, #tpu.memory_space<vmem>>, vector<1x512xf32>
    %43 = vector.broadcast %42 : vector<1x512xf32> to vector<8x512xf32>
    %44 = arith.addf %41, %43 : vector<8x512xf32>
    %cst_31 = arith.constant 0.000000e+00 : f32
    %45 = vector.broadcast %cst_31 : f32 to vector<8x512xf32>
    %46 = arith.maximumf %44, %45 : vector<8x512xf32>
    %47 = arith.truncf %46 : vector<8x512xf32> to vector<8x512xbf16>
    %c0_32 = arith.constant 0 : index
    %c0_33 = arith.constant 0 : index
    %48 = vector.load %arg13[%c0_32, %c0_33] : memref<512x256xbf16, #tpu.memory_space<vmem>>, vector<512x256xbf16>
    %cst_34 = arith.constant dense<0.000000e+00> : vector<8x256xf32>
    %49 = tpu.matmul %47, %48, %cst_34 {dimension_numbers = #tpu.dot_dimension_numbers<[1], [0], [0], [1], [0, 0, 1, 1], [], []>} : vector<8x512xbf16>, vector<512x256xbf16>, vector<8x256xf32> -> vector<8x256xf32>
    %c0_35 = arith.constant 0 : index
    %c0_36 = arith.constant 0 : index
    %50 = vector.load %arg14[%c0_35, %c0_36] : memref<1x256xf32, #tpu.memory_space<vmem>>, vector<1x256xf32>
    %51 = vector.broadcast %50 : vector<1x256xf32> to vector<8x256xf32>
    %52 = arith.addf %49, %51 : vector<8x256xf32>
    %53 = math.tanh %52 : vector<8x256xf32>
    %cst_37 = arith.constant 6.000000e+00 : f32
    %54 = vector.broadcast %cst_37 : f32 to vector<8x256xf32>
    %55 = arith.mulf %53, %54 : vector<8x256xf32>
    %c0_38 = arith.constant 0 : index
    %c0_39 = arith.constant 0 : index
    %56 = vector.load %arg15[%c0_38, %c0_39] : memref<8x256xf32, #tpu.memory_space<vmem>>, vector<8x256xf32>
    tpu.vector_store %arg15[%c0_38, %c0_39], %55 {strides = array<i32>} : memref<8x256xf32, #tpu.memory_space<vmem>>, vector<8x256xf32>,
    %c0_40 = arith.constant 0 : index
    %c0_41 = arith.constant 0 : index
    %57 = vector.load %arg16[%c0_40, %c0_41] : memref<8x256xf32, #tpu.memory_space<vmem>>, vector<8x256xf32>
    tpu.vector_store %arg16[%c0_40, %c0_41], %22 {strides = array<i32>} : memref<8x256xf32, #tpu.memory_space<vmem>>, vector<8x256xf32>,
    return
  }
  func.func @transform_0(%arg0: i32) -> (i32, i32) {
    %c0_i32 = arith.constant 0 : i32
    %c0_i32_0 = arith.constant 0 : i32
    return %arg0, %c0_i32 : i32, i32
  }
  func.func @transform_1(%arg0: i32) -> (i32, i32) {
    %c0_i32 = arith.constant 0 : i32
    %c0_i32_0 = arith.constant 0 : i32
    return %arg0, %c0_i32 : i32, i32
  }
  func.func @transform_2(%arg0: i32) -> (i32, i32) {
    %c0_i32 = arith.constant 0 : i32
    %c0_i32_0 = arith.constant 0 : i32
    %c0_i32_1 = arith.constant 0 : i32
    return %c0_i32, %c0_i32_0 : i32, i32
  }
  func.func @transform_3(%arg0: i32) -> (i32, i32) {
    %c0_i32 = arith.constant 0 : i32
    %c0_i32_0 = arith.constant 0 : i32
    %c0_i32_1 = arith.constant 0 : i32
    return %c0_i32, %c0_i32_0 : i32, i32
  }
  func.func @transform_4(%arg0: i32) -> (i32, i32) {
    %c0_i32 = arith.constant 0 : i32
    %c0_i32_0 = arith.constant 0 : i32
    %c0_i32_1 = arith.constant 0 : i32
    return %c0_i32, %c0_i32_0 : i32, i32
  }
  func.func @transform_5(%arg0: i32) -> (i32, i32) {
    %c0_i32 = arith.constant 0 : i32
    %c0_i32_0 = arith.constant 0 : i32
    %c0_i32_1 = arith.constant 0 : i32
    return %c0_i32, %c0_i32_0 : i32, i32
  }
  func.func @transform_6(%arg0: i32) -> (i32, i32) {
    %c0_i32 = arith.constant 0 : i32
    %c0_i32_0 = arith.constant 0 : i32
    %c0_i32_1 = arith.constant 0 : i32
    return %c0_i32, %c0_i32_0 : i32, i32
  }
  func.func @transform_7(%arg0: i32) -> (i32, i32) {
    %c0_i32 = arith.constant 0 : i32
    %c0_i32_0 = arith.constant 0 : i32
    %c0_i32_1 = arith.constant 0 : i32
    return %c0_i32, %c0_i32_0 : i32, i32
  }
  func.func @transform_8(%arg0: i32) -> (i32, i32) {
    %c0_i32 = arith.constant 0 : i32
    %c0_i32_0 = arith.constant 0 : i32
    %c0_i32_1 = arith.constant 0 : i32
    return %c0_i32, %c0_i32_0 : i32, i32
  }
  func.func @transform_9(%arg0: i32) -> (i32, i32) {
    %c0_i32 = arith.constant 0 : i32
    %c0_i32_0 = arith.constant 0 : i32
    %c0_i32_1 = arith.constant 0 : i32
    return %c0_i32, %c0_i32_0 : i32, i32
  }
  func.func @transform_10(%arg0: i32) -> (i32, i32) {
    %c0_i32 = arith.constant 0 : i32
    %c0_i32_0 = arith.constant 0 : i32
    %c0_i32_1 = arith.constant 0 : i32
    return %c0_i32, %c0_i32_0 : i32, i32
  }
  func.func @transform_11(%arg0: i32) -> (i32, i32) {
    %c0_i32 = arith.constant 0 : i32
    %c0_i32_0 = arith.constant 0 : i32
    %c0_i32_1 = arith.constant 0 : i32
    return %c0_i32, %c0_i32_0 : i32, i32
  }
  func.func @transform_12(%arg0: i32) -> (i32, i32) {
    %c0_i32 = arith.constant 0 : i32
    %c0_i32_0 = arith.constant 0 : i32
    %c0_i32_1 = arith.constant 0 : i32
    return %c0_i32, %c0_i32_0 : i32, i32
  }
  func.func @transform_13(%arg0: i32) -> (i32, i32) {
    %c0_i32 = arith.constant 0 : i32
    %c0_i32_0 = arith.constant 0 : i32
    %c0_i32_1 = arith.constant 0 : i32
    return %c0_i32, %c0_i32_0 : i32, i32
  }
  func.func @transform_14(%arg0: i32) -> (i32, i32) {
    %c0_i32 = arith.constant 0 : i32
    %c0_i32_0 = arith.constant 0 : i32
    return %arg0, %c0_i32 : i32, i32
  }
  func.func @transform_15(%arg0: i32) -> (i32, i32) {
    %c0_i32 = arith.constant 0 : i32
    %c0_i32_0 = arith.constant 0 : i32
    return %arg0, %c0_i32 : i32, i32
  }
}

</mosaic_0001>

<llo_original>
// kernel: tpu_custom_call.1
$region0: #{tpu_custom_call.1}
  #allocation0 [shape = 'u32[]', space=smem, size = 0x4, offset = 0x4, fixed_abs, tag = 'smem constant byte address 0x4 - core index']
  #allocation1 [shape = 'u32[144,128]{1,0:T(1,128)}', space=vmem, size = 0x12000, scoped, tag = 'internal scratch']
  %s0 = inlined_call_operand.hbm [shape: f32[8,1280], index: 0, kind: input, shape index: {}]
  %s1 = inlined_call_operand.hbm [shape: f32[8,128], index: 1, kind: input, shape index: {}]
  %s2 = inlined_call_operand.hbm [shape: bf16[1280,512], index: 2, kind: input, shape index: {}]
  %s3 = inlined_call_operand.hbm [shape: f32[1,512], index: 3, kind: input, shape index: {}]
  %s4 = inlined_call_operand.hbm [shape: bf16[512,256], index: 4, kind: input, shape index: {}]
  %s5 = inlined_call_operand.hbm [shape: f32[1,256], index: 5, kind: input, shape index: {}]
  %s6 = inlined_call_operand.hbm [shape: bf16[256,256], index: 6, kind: input, shape index: {}]
  %s7 = inlined_call_operand.hbm [shape: f32[1,256], index: 7, kind: input, shape index: {}]
  %s8 = inlined_call_operand.hbm [shape: bf16[128,256], index: 8, kind: input, shape index: {}]
  %s9 = inlined_call_operand.hbm [shape: f32[1,256], index: 9, kind: input, shape index: {}]
  %s10 = inlined_call_operand.hbm [shape: bf16[256,512], index: 10, kind: input, shape index: {}]
  %s11 = inlined_call_operand.hbm [shape: f32[1,512], index: 11, kind: input, shape index: {}]
  %s12 = inlined_call_operand.hbm [shape: bf16[512,256], index: 12, kind: input, shape index: {}]
  %s13 = inlined_call_operand.hbm [shape: f32[1,256], index: 13, kind: input, shape index: {}]
  %s14 = inlined_call_operand.hbm [shape: f32[8,256], index: 14, kind: output, shape index: {0}]
  %s15 = inlined_call_operand.hbm [shape: f32[8,256], index: 15, kind: output, shape index: {1}]
  %16 = xla_tuple %s14, %s15
  %s17 = sld [smem:[#allocation0]]
  $region130: #{tpu_custom_call.1} parent=0
    _
  %s19 = ssub.s32 1, %s17
  %s20 = scalar_select 0, %s19, %s17
  $region1: #{tpu_custom_call.1} parent=0
    #allocation2 [shape = 'u8[40960]{0}', space=vmem, size = 0xa000, scoped, tag = 'input window, operand 0, single buffered']
    #allocation3 [shape = 's32[1]{0}', space=sflag, size = 0x4, scoped, tag = 'scoped memory for tpu_custom_call.1']
    #allocation4 [shape = 's32[1]{0}', space=sflag, size = 0x4, scoped, tag = 'scoped memory for tpu_custom_call.1']
    #allocation5 [shape = 'u8[4096]{0}', space=vmem, size = 0x1000, scoped, tag = 'input window, operand 1, single buffered']
    #allocation6 [shape = 's32[1]{0}', space=sflag, size = 0x4, scoped, tag = 'scoped memory for tpu_custom_call.1']
    #allocation7 [shape = 'u8[1310720]{0}', space=vmem, size = 0x140000, scoped, tag = 'input window, operand 2, single buffered']
    #allocation8 [shape = 'u8[2048]{0}', space=vmem, size = 0x800, scoped, tag = 'input window, operand 3, single buffered']
    #allocation9 [shape = 's32[1]{0}', space=sflag, size = 0x4, scoped, tag = 'scoped memory for tpu_custom_call.1']
    #allocation10 [shape = 'u8[262144]{0}', space=vmem, size = 0x40000, scoped, tag = 'input window, operand 4, single buffered']
    #allocation11 [shape = 'u8[1024]{0}', space=vmem, size = 0x400, scoped, tag = 'input window, operand 5, single buffered']
    #allocation12 [shape = 's32[1]{0}', space=sflag, size = 0x4, scoped, tag = 'scoped memory for tpu_custom_call.1']
    #allocation13 [shape = 'u8[131072]{0}', space=vmem, size = 0x20000, scoped, tag = 'input window, operand 6, single buffered']
    #allocation14 [shape = 'u8[1024]{0}', space=vmem, size = 0x400, scoped, tag = 'input window, operand 7, single buffered']
    #allocation15 [shape = 's32[1]{0}', space=sflag, size = 0x4, scoped, tag = 'scoped memory for tpu_custom_call.1']
    #allocation16 [shape = 'u8[65536]{0}', space=vmem, size = 0x10000, scoped, tag = 'input window, operand 8, single buffered']
    #allocation17 [shape = 'u8[1024]{0}', space=vmem, size = 0x400, scoped, tag = 'input window, operand 9, single buffered']
    #allocation18 [shape = 's32[1]{0}', space=sflag, size = 0x4, scoped, tag = 'scoped memory for tpu_custom_call.1']
    #allocation19 [shape = 'u8[262144]{0}', space=vmem, size = 0x40000, scoped, tag = 'input window, operand 10, single buffered']
    #allocation20 [shape = 'u8[2048]{0}', space=vmem, size = 0x800, scoped, tag = 'input window, operand 11, single buffered']
    #allocation21 [shape = 's32[1]{0}', space=sflag, size = 0x4, scoped, tag = 'scoped memory for tpu_custom_call.1']
    #allocation22 [shape = 'u8[262144]{0}', space=vmem, size = 0x40000, scoped, tag = 'input window, operand 12, single buffered']
    #allocation23 [shape = 'u8[1024]{0}', space=vmem, size = 0x400, scoped, tag = 'input window, operand 13, single buffered']
    #allocation24 [shape = 's32[1]{0}', space=sflag, size = 0x4, scoped, tag = 'scoped memory for tpu_custom_call.1']
    #allocation25 [shape = 'u8[8192]{0}', space=vmem, size = 0x2000, scoped, tag = 'output window, operand 0, single buffered']
    #allocation26 [shape = 'u8[8192]{0}', space=vmem, size = 0x2000, scoped, tag = 'output window, operand 1, single buffered']
    #allocation27 [shape = 's32[1]{0}', space=sflag, size = 0x4, scoped, tag = 'scoped memory for tpu_custom_call.1']
    %21 = vsyncpa [#allocation3], 0
    %22 = vsyncpa [#allocation6], 0
    %23 = vsyncpa [#allocation9], 0
    %24 = vsyncpa [#allocation12], 0
    %25 = vsyncpa [#allocation15], 0
    %26 = vsyncpa [#allocation18], 0
    %27 = vsyncpa [#allocation21], 0
    %28 = vsyncpa [#allocation24], 0
    %29 = vsyncpa [#allocation4], 0
    %30 = vsyncpa [#allocation27], 0
    // Predicated region
    $region2: #{tpu_custom_call.1} parent=1 // pred_check
      _
    $region3: #{tpu_custom_call.1} parent=1 // pred_check_branch
      %32 = sbr.rel (0) target = $region5
    $region4: #{tpu_custom_call.1} parent=1 // pred_region
      %s34 = ssub.s32 1280, 1280
      %35 = vsyncadd [#allocation3], %s34
      %s37 = sshll.u32 [#allocation2], 4
      %s38 = int_to_ptr.vmem [resolvable:$true] %s37
      %40 = dma.hbm_to_vmem [thread:$0]  %s0, 1280, %s38, [#allocation3]
    $region5: #{tpu_custom_call.1} parent=1 // pred_fallthru
      _
    // Predicated region
    $region6: #{tpu_custom_call.1} parent=1 // pred_check
      _
    $region7: #{tpu_custom_call.1} parent=1 // pred_check_branch
      %42 = sbr.rel (0) target = $region9
    $region8: #{tpu_custom_call.1} parent=1 // pred_region
      %s44 = ssub.s32 128, 128
      %45 = vsyncadd [#allocation6], %s44
      %s47 = sshll.u32 [#allocation5], 4
      %s48 = int_to_ptr.vmem [resolvable:$true] %s47
      %50 = dma.hbm_to_vmem [thread:$0]  %s1, 128, %s48, [#allocation6]
    $region9: #{tpu_custom_call.1} parent=1 // pred_fallthru
      _
    // Predicated region
    $region10: #{tpu_custom_call.1} parent=1 // pred_check
      _
    $region11: #{tpu_custom_call.1} parent=1 // pred_check_branch
      %52 = sbr.rel (0) target = $region13
    $region12: #{tpu_custom_call.1} parent=1 // pred_region
      %s54 = ssub.s32 40960, 40960
      %55 = vsyncadd [#allocation6], %s54
      %s56 = sshll.u32 [#allocation7], 4
      %s57 = int_to_ptr.vmem [resolvable:$true] %s56
      %62 = dma.hbm_to_vmem [thread:$0]  %s2, 40960, %s57, [#allocation6], 256, 256, 16
    $region13: #{tpu_custom_call.1} parent=1 // pred_fallthru
      _
    // Predicated region
    $region14: #{tpu_custom_call.1} parent=1 // pred_check
      _
    $region15: #{tpu_custom_call.1} parent=1 // pred_check_branch
      %64 = sbr.rel (0) target = $region17
    $region16: #{tpu_custom_call.1} parent=1 // pred_region
      %s66 = ssub.s32 64, 64
      %67 = vsyncadd [#allocation9], %s66
      %s69 = sshll.u32 [#allocation8], 4
      %s70 = int_to_ptr.vmem [resolvable:$true] %s69
      %72 = dma.hbm_to_vmem [thread:$0]  %s3, 64, %s70, [#allocation9]
    $region17: #{tpu_custom_call.1} parent=1 // pred_fallthru
      _
    // Predicated region
    $region18: #{tpu_custom_call.1} parent=1 // pred_check
      _
    $region19: #{tpu_custom_call.1} parent=1 // pred_check_branch
      %74 = sbr.rel (0) target = $region21
    $region20: #{tpu_custom_call.1} parent=1 // pred_region
      %s76 = ssub.s32 8192, 8192
      %77 = vsyncadd [#allocation9], %s76
      %s78 = sshll.u32 [#allocation10], 4
      %s79 = int_to_ptr.vmem [resolvable:$true] %s78
      %84 = dma.hbm_to_vmem [thread:$0]  %s4, 8192, %s79, [#allocation9], 128, 128, 8
    $region21: #{tpu_custom_call.1} parent=1 // pred_fallthru
      _
    // Predicated region
    $region22: #{tpu_custom_call.1} parent=1 // pred_check
      _
    $region23: #{tpu_custom_call.1} parent=1 // pred_check_branch
      %86 = sbr.rel (0) target = $region25
    $region24: #{tpu_custom_call.1} parent=1 // pred_region
      %s88 = ssub.s32 32, 32
      %89 = vsyncadd [#allocation12], %s88
      %s91 = sshll.u32 [#allocation11], 4
      %s92 = int_to_ptr.vmem [resolvable:$true] %s91
      %94 = dma.hbm_to_vmem [thread:$0]  %s5, 32, %s92, [#allocation12]
    $region25: #{tpu_custom_call.1} parent=1 // pred_fallthru
      _
    // Predicated region
    $region26: #{tpu_custom_call.1} parent=1 // pred_check
      _
    $region27: #{tpu_custom_call.1} parent=1 // pred_check_branch
      %96 = sbr.rel (0) target = $region29
    $region28: #{tpu_custom_call.1} parent=1 // pred_region
      %s98 = ssub.s32 4096, 4096
      %99 = vsyncadd [#allocation12], %s98
      %s100 = sshll.u32 [#allocation13], 4
      %s101 = int_to_ptr.vmem [resolvable:$true] %s100
      %106 = dma.hbm_to_vmem [thread:$0]  %s6, 4096, %s101, [#allocation12], 128, 128, 8
    $region29: #{tpu_custom_call.1} parent=1 // pred_fallthru
      _
    // Predicated region
    $region30: #{tpu_custom_call.1} parent=1 // pred_check
      _
    $region31: #{tpu_custom_call.1} parent=1 // pred_check_branch
      %108 = sbr.rel (0) target = $region33
    $region32: #{tpu_custom_call.1} parent=1 // pred_region
      %s110 = ssub.s32 32, 32
      %111 = vsyncadd [#allocation15], %s110
      %s113 = sshll.u32 [#allocation14], 4
      %s114 = int_to_ptr.vmem [resolvable:$true] %s113
      %116 = dma.hbm_to_vmem [thread:$0]  %s7, 32, %s114, [#allocation15]
    $region33: #{tpu_custom_call.1} parent=1 // pred_fallthru
      _
    // Predicated region
    $region34: #{tpu_custom_call.1} parent=1 // pred_check
      _
    $region35: #{tpu_custom_call.1} parent=1 // pred_check_branch
      %118 = sbr.rel (0) target = $region37
    $region36: #{tpu_custom_call.1} parent=1 // pred_region
      %s120 = ssub.s32 2048, 2048
      %121 = vsyncadd [#allocation15], %s120
      %s122 = sshll.u32 [#allocation16], 4
      %s123 = int_to_ptr.vmem [resolvable:$true] %s122
      %128 = dma.hbm_to_vmem [thread:$0]  %s8, 2048, %s123, [#allocation15], 128, 128, 8
    $region37: #{tpu_custom_call.1} parent=1 // pred_fallthru
      _
    // Predicated region
    $region38: #{tpu_custom_call.1} parent=1 // pred_check
      _
    $region39: #{tpu_custom_call.1} parent=1 // pred_check_branch
      %130 = sbr.rel (0) target = $region41
    $region40: #{tpu_custom_call.1} parent=1 // pred_region
      %s132 = ssub.s32 32, 32
      %133 = vsyncadd [#allocation18], %s132
      %s135 = sshll.u32 [#allocation17], 4
      %s136 = int_to_ptr.vmem [resolvable:$true] %s135
      %138 = dma.hbm_to_vmem [thread:$0]  %s9, 32, %s136, [#allocation18]
    $region41: #{tpu_custom_call.1} parent=1 // pred_fallthru
      _
    // Predicated region
    $region42: #{tpu_custom_call.1} parent=1 // pred_check
      _
    $region43: #{tpu_custom_call.1} parent=1 // pred_check_branch
      %140 = sbr.rel (0) target = $region45
    $region44: #{tpu_custom_call.1} parent=1 // pred_region
      %s142 = ssub.s32 8192, 8192
      %143 = vsyncadd [#allocation18], %s142
      %s144 = sshll.u32 [#allocation19], 4
      %s145 = int_to_ptr.vmem [resolvable:$true] %s144
      %150 = dma.hbm_to_vmem [thread:$0]  %s10, 8192, %s145, [#allocation18], 256, 256, 16
    $region45: #{tpu_custom_call.1} parent=1 // pred_fallthru
      _
    // Predicated region
    $region46: #{tpu_custom_call.1} parent=1 // pred_check
      _
    $region47: #{tpu_custom_call.1} parent=1 // pred_check_branch
      %152 = sbr.rel (0) target = $region49
    $region48: #{tpu_custom_call.1} parent=1 // pred_region
      %s154 = ssub.s32 64, 64
      %155 = vsyncadd [#allocation21], %s154
      %s157 = sshll.u32 [#allocation20], 4
      %s158 = int_to_ptr.vmem [resolvable:$true] %s157
      %160 = dma.hbm_to_vmem [thread:$0]  %s11, 64, %s158, [#allocation21]
    $region49: #{tpu_custom_call.1} parent=1 // pred_fallthru
      _
    // Predicated region
    $region50: #{tpu_custom_call.1} parent=1 // pred_check
      _
    $region51: #{tpu_custom_call.1} parent=1 // pred_check_branch
      %162 = sbr.rel (0) target = $region53
    $region52: #{tpu_custom_call.1} parent=1 // pred_region
      %s164 = ssub.s32 8192, 8192
      %165 = vsyncadd [#allocation21], %s164
      %s166 = sshll.u32 [#allocation22], 4
      %s167 = int_to_ptr.vmem [resolvable:$true] %s166
      %172 = dma.hbm_to_vmem [thread:$0]  %s12, 8192, %s167, [#allocation21], 128, 128, 8
    $region53: #{tpu_custom_call.1} parent=1 // pred_fallthru
      _
    // Predicated region
    $region54: #{tpu_custom_call.1} parent=1 // pred_check
      _
    $region55: #{tpu_custom_call.1} parent=1 // pred_check_branch
      %174 = sbr.rel (0) target = $region57
    $region56: #{tpu_custom_call.1} parent=1 // pred_region
      %s176 = ssub.s32 32, 32
      %177 = vsyncadd [#allocation24], %s176
      %s179 = sshll.u32 [#allocation23], 4
      %s180 = int_to_ptr.vmem [resolvable:$true] %s179
      %182 = dma.hbm_to_vmem [thread:$0]  %s13, 32, %s180, [#allocation24]
    $region57: #{tpu_custom_call.1} parent=1 // pred_fallthru
      _
    // Predicated region
    $region58: #{tpu_custom_call.1} parent=1 // pred_check
      _
    $region59: #{tpu_custom_call.1} parent=1 // pred_check_branch
      %184 = sbr.rel (0) target = $region61
    $region60: #{tpu_custom_call.1} parent=1 // pred_region
      %185 = dma.done [#allocation3], 1280
    $region61: #{tpu_custom_call.1} parent=1 // pred_fallthru
      _
    // Predicated region
    $region62: #{tpu_custom_call.1} parent=1 // pred_check
      _
    $region63: #{tpu_custom_call.1} parent=1 // pred_check_branch
      %187 = sbr.rel (0) target = $region65
    $region64: #{tpu_custom_call.1} parent=1 // pred_region
      %188 = dma.done [#allocation6], 128
    $region65: #{tpu_custom_call.1} parent=1 // pred_fallthru
      _
    // Predicated region
    $region66: #{tpu_custom_call.1} parent=1 // pred_check
      _
    $region67: #{tpu_custom_call.1} parent=1 // pred_check_branch
      %190 = sbr.rel (0) target = $region69
    $region68: #{tpu_custom_call.1} parent=1 // pred_region
      %191 = dma.done [#allocation6], 40960
    $region69: #{tpu_custom_call.1} parent=1 // pred_fallthru
      _
    // Predicated region
    $region70: #{tpu_custom_call.1} parent=1 // pred_check
      _
    $region71: #{tpu_custom_call.1} parent=1 // pred_check_branch
      %193 = sbr.rel (0) target = $region73
    $region72: #{tpu_custom_call.1} parent=1 // pred_region
      %194 = dma.done [#allocation9], 64
    $region73: #{tpu_custom_call.1} parent=1 // pred_fallthru
      _
    // Predicated region
    $region74: #{tpu_custom_call.1} parent=1 // pred_check
      _
    $region75: #{tpu_custom_call.1} parent=1 // pred_check_branch
      %196 = sbr.rel (0) target = $region77
    $region76: #{tpu_custom_call.1} parent=1 // pred_region
      %197 = dma.done [#allocation9], 8192
    $region77: #{tpu_custom_call.1} parent=1 // pred_fallthru
      _
    // Predicated region
    $region78: #{tpu_custom_call.1} parent=1 // pred_check
      _
    $region79: #{tpu_custom_call.1} parent=1 // pred_check_branch
      %199 = sbr.rel (0) target = $region81
    $region80: #{tpu_custom_call.1} parent=1 // pred_region
      %200 = dma.done [#allocation12], 32
    $region81: #{tpu_custom_call.1} parent=1 // pred_fallthru
      _
    // Predicated region
    $region82: #{tpu_custom_call.1} parent=1 // pred_check
      _
    $region83: #{tpu_custom_call.1} parent=1 // pred_check_branch
      %202 = sbr.rel (0) target = $region85
    $region84: #{tpu_custom_call.1} parent=1 // pred_region
      %203 = dma.done [#allocation12], 4096
    $region85: #{tpu_custom_call.1} parent=1 // pred_fallthru
      _
    // Predicated region
    $region86: #{tpu_custom_call.1} parent=1 // pred_check
      _
    $region87: #{tpu_custom_call.1} parent=1 // pred_check_branch
      %205 = sbr.rel (0) target = $region89
    $region88: #{tpu_custom_call.1} parent=1 // pred_region
      %206 = dma.done [#allocation15], 32
    $region89: #{tpu_custom_call.1} parent=1 // pred_fallthru
      _
    // Predicated region
    $region90: #{tpu_custom_call.1} parent=1 // pred_check
      _
    $region91: #{tpu_custom_call.1} parent=1 // pred_check_branch
      %208 = sbr.rel (0) target = $region93
    $region92: #{tpu_custom_call.1} parent=1 // pred_region
      %209 = dma.done [#allocation15], 2048
    $region93: #{tpu_custom_call.1} parent=1 // pred_fallthru
      _
    // Predicated region
    $region94: #{tpu_custom_call.1} parent=1 // pred_check
      _
    $region95: #{tpu_custom_call.1} parent=1 // pred_check_branch
      %211 = sbr.rel (0) target = $region97
    $region96: #{tpu_custom_call.1} parent=1 // pred_region
      %212 = dma.done [#allocation18], 32
    $region97: #{tpu_custom_call.1} parent=1 // pred_fallthru
      _
    // Predicated region
    $region98: #{tpu_custom_call.1} parent=1 // pred_check
      _
    $region99: #{tpu_custom_call.1} parent=1 // pred_check_branch
      %214 = sbr.rel (0) target = $region101
    $region100: #{tpu_custom_call.1} parent=1 // pred_region
      %215 = dma.done [#allocation18], 8192
    $region101: #{tpu_custom_call.1} parent=1 // pred_fallthru
      _
    // Predicated region
    $region102: #{tpu_custom_call.1} parent=1 // pred_check
      _
    $region103: #{tpu_custom_call.1} parent=1 // pred_check_branch
      %217 = sbr.rel (0) target = $region105
    $region104: #{tpu_custom_call.1} parent=1 // pred_region
      %218 = dma.done [#allocation21], 64
    $region105: #{tpu_custom_call.1} parent=1 // pred_fallthru
      _
    // Predicated region
    $region106: #{tpu_custom_call.1} parent=1 // pred_check
      _
    $region107: #{tpu_custom_call.1} parent=1 // pred_check_branch
      %220 = sbr.rel (0) target = $region109
    $region108: #{tpu_custom_call.1} parent=1 // pred_region
      %221 = dma.done [#allocation21], 8192
    $region109: #{tpu_custom_call.1} parent=1 // pred_fallthru
      _
    // Predicated region
    $region110: #{tpu_custom_call.1} parent=1 // pred_check
      _
    $region111: #{tpu_custom_call.1} parent=1 // pred_check_branch
      %223 = sbr.rel (0) target = $region113
    $region112: #{tpu_custom_call.1} parent=1 // pred_region
      %224 = dma.done [#allocation24], 32
    $region113: #{tpu_custom_call.1} parent=1 // pred_fallthru
      _
    %v226 = vld [vmem:[#allocation2] sm:$0xff]
    %v227 = vld [vmem:[#allocation2 + $0x8] sm:$0xff]
    %v228 = vld [vmem:[#allocation2 + $0x10] sm:$0xff]
    %v229 = vld [vmem:[#allocation2 + $0x18] sm:$0xff]
    %v230 = vld [vmem:[#allocation2 + $0x20] sm:$0xff]
    %v231 = vld [vmem:[#allocation2 + $0x28] sm:$0xff]
    %v232 = vld [vmem:[#allocation2 + $0x30] sm:$0xff]
    %v233 = vld [vmem:[#allocation2 + $0x38] sm:$0xff]
    %v234 = vld [vmem:[#allocation2 + $0x40] sm:$0xff]
    %v235 = vld [vmem:[#allocation2 + $0x48] sm:$0xff]
    %v236 = vpack.c.bf16 %v226, %v226
    %v237 = vpack.c.bf16 %v227, %v227
    %v238 = vpack.c.bf16 %v228, %v228
    %v239 = vpack.c.bf16 %v229, %v229
    %v240 = vpack.c.bf16 %v230, %v230
    %v241 = vpack.c.bf16 %v231, %v231
    %v242 = vpack.c.bf16 %v232, %v232
    %v243 = vpack.c.bf16 %v233, %v233
    %v244 = vpack.c.bf16 %v234, %v234
    %v245 = vpack.c.bf16 %v235, %v235
    %v246 = vld [vmem:[#allocation7] sm:$0xff]
    %v247 = vld [vmem:[#allocation7 + $0x8] sm:$0xff]
    %v248 = vld [vmem:[#allocation7 + $0x10] sm:$0xff]
    %v249 = vld [vmem:[#allocation7 + $0x18] sm:$0xff]
    %v250 = vld [vmem:[#allocation7 + $0x20] sm:$0xff]
    %v251 = vld [vmem:[#allocation7 + $0x28] sm:$0xff]
    %v252 = vld [vmem:[#allocation7 + $0x30] sm:$0xff]
    %v253 = vld [vmem:[#allocation7 + $0x38] sm:$0xff]
    %v254 = vld [vmem:[#allocation7 + $0x40] sm:$0xff]
    %v255 = vld [vmem:[#allocation7 + $0x48] sm:$0xff]
    %v256 = vld [vmem:[#allocation7 + $0x50] sm:$0xff]
    %v257 = vld [vmem:[#allocation7 + $0x58] sm:$0xff]
    %v258 = vld [vmem:[#allocation7 + $0x60] sm:$0xff]
    %v259 = vld [vmem:[#allocation7 + $0x68] sm:$0xff]
    %v260 = vld [vmem:[#allocation7 + $0x70] sm:$0xff]
    %v261 = vld [vmem:[#allocation7 + $0x78] sm:$0xff]
    %v262 = vld [vmem:[#allocation7 + $0x80] sm:$0xff]
    %v263 = vld [vmem:[#allocation7 + $0x88] sm:$0xff]
    %v264 = vld [vmem:[#allocation7 + $0x90] sm:$0xff]
    %v265 = vld [vmem:[#allocation7 + $0x98] sm:$0xff]
    %v266 = vld [vmem:[#allocation7 + $0xa0] sm:$0xff]
    %v267 = vld [vmem:[#allocation7 + $0xa8] sm:$0xff]
    %v268 = vld [vmem:[#allocation7 + $0xb0] sm:$0xff]
    %v269 = vld [vmem:[#allocation7 + $0xb8] sm:$0xff]
    %v270 = vld [vmem:[#allocation7 + $0xc0] sm:$0xff]
    %v271 = vld [vmem:[#allocation7 + $0xc8] sm:$0xff]
    %v272 = vld [vmem:[#allocation7 + $0xd0] sm:$0xff]
    %v273 = vld [vmem:[#allocation7 + $0xd8] sm:$0xff]
    %v274 = vld [vmem:[#allocation7 + $0xe0] sm:$0xff]
    %v275 = vld [vmem:[#allocation7 + $0xe8] sm:$0xff]
    %v276 = vld [vmem:[#allocation7 + $0xf0] sm:$0xff]
    %v277 = vld [vmem:[#allocation7 + $0xf8] sm:$0xff]
    %v278 = vld [vmem:[#allocation7 + $0x100] sm:$0xff]
    %v279 = vld [vmem:[#allocation7 + $0x108] sm:$0xff]
    %v280 = vld [vmem:[#allocation7 + $0x110] sm:$0xff]
    %v281 = vld [vmem:[#allocation7 + $0x118] sm:$0xff]
    %v282 = vld [vmem:[#allocation7 + $0x120] sm:$0xff]
    %v283 = vld [vmem:[#allocation7 + $0x128] sm:$0xff]
    %v284 = vld [vmem:[#allocation7 + $0x130] sm:$0xff]
    %v285 = vld [vmem:[#allocation7 + $0x138] sm:$0xff]
    %v286 = vld [vmem:[#allocation7 + $0x140] sm:$0xff]
    %v287 = vld [vmem:[#allocation7 + $0x148] sm:$0xff]
    %v288 = vld [vmem:[#allocation7 + $0x150] sm:$0xff]
    %v289 = vld [vmem:[#allocation7 + $0x158] sm:$0xff]
    %v290 = vld [vmem:[#allocation7 + $0x160] sm:$0xff]
    %v291 = vld [vmem:[#allocation7 + $0x168] sm:$0xff]
    %v292 = vld [vmem:[#allocation7 + $0x170] sm:$0xff]
    %v293 = vld [vmem:[#allocation7 + $0x178] sm:$0xff]
    %v294 = vld [vmem:[#allocation7 + $0x180] sm:$0xff]
    %v295 = vld [vmem:[#allocation7 + $0x188] sm:$0xff]
    %v296 = vld [vmem:[#allocation7 + $0x190] sm:$0xff]
    %v297 = vld [vmem:[#allocation7 + $0x198] sm:$0xff]
    %v298 = vld [vmem:[#allocation7 + $0x1a0] sm:$0xff]
    %v299 = vld [vmem:[#allocation7 + $0x1a8] sm:$0xff]
    %v300 = vld [vmem:[#allocation7 + $0x1b0] sm:$0xff]
    %v301 = vld [vmem:[#allocation7 + $0x1b8] sm:$0xff]
    %v302 = vld [vmem:[#allocation7 + $0x1c0] sm:$0xff]
    %v303 = vld [vmem:[#allocation7 + $0x1c8] sm:$0xff]
    %v304 = vld [vmem:[#allocation7 + $0x1d0] sm:$0xff]
    %v305 = vld [vmem:[#allocation7 + $0x1d8] sm:$0xff]
    %v306 = vld [vmem:[#allocation7 + $0x1e0] sm:$0xff]
    %v307 = vld [vmem:[#allocation7 + $0x1e8] sm:$0xff]
    %v308 = vld [vmem:[#allocation7 + $0x1f0] sm:$0xff]
    %v309 = vld [vmem:[#allocation7 + $0x1f8] sm:$0xff]
    %v310 = vld [vmem:[#allocation7 + $0x200] sm:$0xff]
    %v311 = vld [vmem:[#allocation7 + $0x208] sm:$0xff]
    %v312 = vld [vmem:[#allocation7 + $0x210] sm:$0xff]
    %v313 = vld [vmem:[#allocation7 + $0x218] sm:$0xff]
    %v314 = vld [vmem:[#allocation7 + $0x220] sm:$0xff]
    %v315 = vld [vmem:[#allocation7 + $0x228] sm:$0xff]
    %v316 = vld [vmem:[#allocation7 + $0x230] sm:$0xff]
    %v317 = vld [vmem:[#allocation7 + $0x238] sm:$0xff]
    %v318 = vld [vmem:[#allocation7 + $0x240] sm:$0xff]
    %v319 = vld [vmem:[#allocation7 + $0x248] sm:$0xff]
    %v320 = vld [vmem:[#allocation7 + $0x250] sm:$0xff]
    %v321 = vld [vmem:[#allocation7 + $0x258] sm:$0xff]
    %v322 = vld [vmem:[#allocation7 + $0x260] sm:$0xff]
    %v323 = vld [vmem:[#allocation7 + $0x268] sm:$0xff]
    %v324 = vld [vmem:[#allocation7 + $0x270] sm:$0xff]
    %v325 = vld [vmem:[#allocation7 + $0x278] sm:$0xff]
    %v326 = vld [vmem:[#allocation7 + $0x280] sm:$0xff]
    %v327 = vld [vmem:[#allocation7 + $0x288] sm:$0xff]
    %v328 = vld [vmem:[#allocation7 + $0x290] sm:$0xff]
    %v329 = vld [vmem:[#allocation7 + $0x298] sm:$0xff]
    %v330 = vld [vmem:[#allocation7 + $0x2a0] sm:$0xff]
    %v331 = vld [vmem:[#allocation7 + $0x2a8] sm:$0xff]
    %v332 = vld [vmem:[#allocation7 + $0x2b0] sm:$0xff]
    %v333 = vld [vmem:[#allocation7 + $0x2b8] sm:$0xff]
    %v334 = vld [vmem:[#allocation7 + $0x2c0] sm:$0xff]
    %v335 = vld [vmem:[#allocation7 + $0x2c8] sm:$0xff]
    %v336 = vld [vmem:[#allocation7 + $0x2d0] sm:$0xff]
    %v337 = vld [vmem:[#allocation7 + $0x2d8] sm:$0xff]
    %v338 = vld [vmem:[#allocation7 + $0x2e0] sm:$0xff]
    %v339 = vld [vmem:[#allocation7 + $0x2e8] sm:$0xff]
    %v340 = vld [vmem:[#allocation7 + $0x2f0] sm:$0xff]
    %v341 = vld [vmem:[#allocation7 + $0x2f8] sm:$0xff]
    %v342 = vld [vmem:[#allocation7 + $0x300] sm:$0xff]
    %v343 = vld [vmem:[#allocation7 + $0x308] sm:$0xff]
    %v344 = vld [vmem:[#allocation7 + $0x310] sm:$0xff]
    %v345 = vld [vmem:[#allocation7 + $0x318] sm:$0xff]
    %v346 = vld [vmem:[#allocation7 + $0x320] sm:$0xff]
    %v347 = vld [vmem:[#allocation7 + $0x328] sm:$0xff]
    %v348 = vld [vmem:[#allocation7 + $0x330] sm:$0xff]
    %v349 = vld [vmem:[#allocation7 + $0x338] sm:$0xff]
    %v350 = vld [vmem:[#allocation7 + $0x340] sm:$0xff]
    %v351 = vld [vmem:[#allocation7 + $0x348] sm:$0xff]
    %v352 = vld [vmem:[#allocation7 + $0x350] sm:$0xff]
    %v353 = vld [vmem:[#allocation7 + $0x358] sm:$0xff]
    %v354 = vld [vmem:[#allocation7 + $0x360] sm:$0xff]
    %v355 = vld [vmem:[#allocation7 + $0x368] sm:$0xff]
    %v356 = vld [vmem:[#allocation7 + $0x370] sm:$0xff]
    %v357 = vld [vmem:[#allocation7 + $0x378] sm:$0xff]
    %v358 = vld [vmem:[#allocation7 + $0x380] sm:$0xff]
    %v359 = vld [vmem:[#allocation7 + $0x388] sm:$0xff]
    %v360 = vld [vmem:[#allocation7 + $0x390] sm:$0xff]
    %v361 = vld [vmem:[#allocation7 + $0x398] sm:$0xff]
    %v362 = vld [vmem:[#allocation7 + $0x3a0] sm:$0xff]
    %v363 = vld [vmem:[#allocation7 + $0x3a8] sm:$0xff]
    %v364 = vld [vmem:[#allocation7 + $0x3b0] sm:$0xff]
    %v365 = vld [vmem:[#allocation7 + $0x3b8] sm:$0xff]
    %v366 = vld [vmem:[#allocation7 + $0x3c0] sm:$0xff]
    %v367 = vld [vmem:[#allocation7 + $0x3c8] sm:$0xff]
    %v368 = vld [vmem:[#allocation7 + $0x3d0] sm:$0xff]
    %v369 = vld [vmem:[#allocation7 + $0x3d8] sm:$0xff]
    %v370 = vld [vmem:[#allocation7 + $0x3e0] sm:$0xff]
    %v371 = vld [vmem:[#allocation7 + $0x3e8] sm:$0xff]
    %v372 = vld [vmem:[#allocation7 + $0x3f0] sm:$0xff]
    %v373 = vld [vmem:[#allocation7 + $0x3f8] sm:$0xff]
    %v374 = vld [vmem:[#allocation7 + $0x400] sm:$0xff]
    %v375 = vld [vmem:[#allocation7 + $0x408] sm:$0xff]
    %v376 = vld [vmem:[#allocation7 + $0x410] sm:$0xff]
    %v377 = vld [vmem:[#allocation7 + $0x418] sm:$0xff]
    %v378 = vld [vmem:[#allocation7 + $0x420] sm:$0xff]
    %v379 = vld [vmem:[#allocation7 + $0x428] sm:$0xff]
    %v380 = vld [vmem:[#allocation7 + $0x430] sm:$0xff]
    %v381 = vld [vmem:[#allocation7 + $0x438] sm:$0xff]
    %v382 = vld [vmem:[#allocation7 + $0x440] sm:$0xff]
    %v383 = vld [vmem:[#allocation7 + $0x448] sm:$0xff]
    %v384 = vld [vmem:[#allocation7 + $0x450] sm:$0xff]
    %v385 = vld [vmem:[#allocation7 + $0x458] sm:$0xff]
    %v386 = vld [vmem:[#allocation7 + $0x460] sm:$0xff]
    %v387 = vld [vmem:[#allocation7 + $0x468] sm:$0xff]
    %v388 = vld [vmem:[#allocation7 + $0x470] sm:$0xff]
    %v389 = vld [vmem:[#allocation7 + $0x478] sm:$0xff]
    %v390 = vld [vmem:[#allocation7 + $0x480] sm:$0xff]
    %v391 = vld [vmem:[#allocation7 + $0x488] sm:$0xff]
    %v392 = vld [vmem:[#allocation7 + $0x490] sm:$0xff]
    %v393 = vld [vmem:[#allocation7 + $0x498] sm:$0xff]
    %v394 = vld [vmem:[#allocation7 + $0x4a0] sm:$0xff]
    %v395 = vld [vmem:[#allocation7 + $0x4a8] sm:$0xff]
    %v396 = vld [vmem:[#allocation7 + $0x4b0] sm:$0xff]
    %v397 = vld [vmem:[#allocation7 + $0x4b8] sm:$0xff]
    %v398 = vld [vmem:[#allocation7 + $0x4c0] sm:$0xff]
    %v399 = vld [vmem:[#allocation7 + $0x4c8] sm:$0xff]
    %v400 = vld [vmem:[#allocation7 + $0x4d0] sm:$0xff]
    %v401 = vld [vmem:[#allocation7 + $0x4d8] sm:$0xff]
    %v402 = vld [vmem:[#allocation7 + $0x4e0] sm:$0xff]
    %v403 = vld [vmem:[#allocation7 + $0x4e8] sm:$0xff]
    %v404 = vld [vmem:[#allocation7 + $0x4f0] sm:$0xff]
    %v405 = vld [vmem:[#allocation7 + $0x4f8] sm:$0xff]
    %v406 = vld [vmem:[#allocation7 + $0x500] sm:$0xff]
    %v407 = vld [vmem:[#allocation7 + $0x508] sm:$0xff]
    %v408 = vld [vmem:[#allocation7 + $0x510] sm:$0xff]
    %v409 = vld [vmem:[#allocation7 + $0x518] sm:$0xff]
    %v410 = vld [vmem:[#allocation7 + $0x520] sm:$0xff]
    %v411 = vld [vmem:[#allocation7 + $0x528] sm:$0xff]
    %v412 = vld [vmem:[#allocation7 + $0x530] sm:$0xff]
    %v413 = vld [vmem:[#allocation7 + $0x538] sm:$0xff]
    %v414 = vld [vmem:[#allocation7 + $0x540] sm:$0xff]
    %v415 = vld [vmem:[#allocation7 + $0x548] sm:$0xff]
    %v416 = vld [vmem:[#allocation7 + $0x550] sm:$0xff]
    %v417 = vld [vmem:[#allocation7 + $0x558] sm:$0xff]
    %v418 = vld [vmem:[#allocation7 + $0x560] sm:$0xff]
    %v419 = vld [vmem:[#allocation7 + $0x568] sm:$0xff]
    %v420 = vld [vmem:[#allocation7 + $0x570] sm:$0xff]
    %v421 = vld [vmem:[#allocation7 + $0x578] sm:$0xff]
    %v422 = vld [vmem:[#allocation7 + $0x580] sm:$0xff]
    %v423 = vld [vmem:[#allocation7 + $0x588] sm:$0xff]
    %v424 = vld [vmem:[#allocation7 + $0x590] sm:$0xff]
    %v425 = vld [vmem:[#allocation7 + $0x598] sm:$0xff]
    %v426 = vld [vmem:[#allocation7 + $0x5a0] sm:$0xff]
    %v427 = vld [vmem:[#allocation7 + $0x5a8] sm:$0xff]
    %v428 = vld [vmem:[#allocation7 + $0x5b0] sm:$0xff]
    %v429 = vld [vmem:[#allocation7 + $0x5b8] sm:$0xff]
    %v430 = vld [vmem:[#allocation7 + $0x5c0] sm:$0xff]
    %v431 = vld [vmem:[#allocation7 + $0x5c8] sm:$0xff]
    %v432 = vld [vmem:[#allocation7 + $0x5d0] sm:$0xff]
    %v433 = vld [vmem:[#allocation7 + $0x5d8] sm:$0xff]
    %v434 = vld [vmem:[#allocation7 + $0x5e0] sm:$0xff]
    %v435 = vld [vmem:[#allocation7 + $0x5e8] sm:$0xff]
    %v436 = vld [vmem:[#allocation7 + $0x5f0] sm:$0xff]
    %v437 = vld [vmem:[#allocation7 + $0x5f8] sm:$0xff]
    %v438 = vld [vmem:[#allocation7 + $0x600] sm:$0xff]
    %v439 = vld [vmem:[#allocation7 + $0x608] sm:$0xff]
    %v440 = vld [vmem:[#allocation7 + $0x610] sm:$0xff]
    %v441 = vld [vmem:[#allocation7 + $0x618] sm:$0xff]
    %v442 = vld [vmem:[#allocation7 + $0x620] sm:$0xff]
    %v443 = vld [vmem:[#allocation7 + $0x628] sm:$0xff]
    %v444 = vld [vmem:[#allocation7 + $0x630] sm:$0xff]
    %v445 = vld [vmem:[#allocation7 + $0x638] sm:$0xff]
    %v446 = vld [vmem:[#allocation7 + $0x640] sm:$0xff]
    %v447 = vld [vmem:[#allocation7 + $0x648] sm:$0xff]
    %v448 = vld [vmem:[#allocation7 + $0x650] sm:$0xff]
    %v449 = vld [vmem:[#allocation7 + $0x658] sm:$0xff]
    %v450 = vld [vmem:[#allocation7 + $0x660] sm:$0xff]
    %v451 = vld [vmem:[#allocation7 + $0x668] sm:$0xff]
    %v452 = vld [vmem:[#allocation7 + $0x670] sm:$0xff]
    %v453 = vld [vmem:[#allocation7 + $0x678] sm:$0xff]
    %v454 = vld [vmem:[#allocation7 + $0x680] sm:$0xff]
    %v455 = vld [vmem:[#allocation7 + $0x688] sm:$0xff]
    %v456 = vld [vmem:[#allocation7 + $0x690] sm:$0xff]
    %v457 = vld [vmem:[#allocation7 + $0x698] sm:$0xff]
    %v458 = vld [vmem:[#allocation7 + $0x6a0] sm:$0xff]
    %v459 = vld [vmem:[#allocation7 + $0x6a8] sm:$0xff]
    %v460 = vld [vmem:[#allocation7 + $0x6b0] sm:$0xff]
    %v461 = vld [vmem:[#allocation7 + $0x6b8] sm:$0xff]
    %v462 = vld [vmem:[#allocation7 + $0x6c0] sm:$0xff]
    %v463 = vld [vmem:[#allocation7 + $0x6c8] sm:$0xff]
    %v464 = vld [vmem:[#allocation7 + $0x6d0] sm:$0xff]
    %v465 = vld [vmem:[#allocation7 + $0x6d8] sm:$0xff]
    %v466 = vld [vmem:[#allocation7 + $0x6e0] sm:$0xff]
    %v467 = vld [vmem:[#allocation7 + $0x6e8] sm:$0xff]
    %v468 = vld [vmem:[#allocation7 + $0x6f0] sm:$0xff]
    %v469 = vld [vmem:[#allocation7 + $0x6f8] sm:$0xff]
    %v470 = vld [vmem:[#allocation7 + $0x700] sm:$0xff]
    %v471 = vld [vmem:[#allocation7 + $0x708] sm:$0xff]
    %v472 = vld [vmem:[#allocation7 + $0x710] sm:$0xff]
    %v473 = vld [vmem:[#allocation7 + $0x718] sm:$0xff]
    %v474 = vld [vmem:[#allocation7 + $0x720] sm:$0xff]
    %v475 = vld [vmem:[#allocation7 + $0x728] sm:$0xff]
    %v476 = vld [vmem:[#allocation7 + $0x730] sm:$0xff]
    %v477 = vld [vmem:[#allocation7 + $0x738] sm:$0xff]
    %v478 = vld [vmem:[#allocation7 + $0x740] sm:$0xff]
    %v479 = vld [vmem:[#allocation7 + $0x748] sm:$0xff]
    %v480 = vld [vmem:[#allocation7 + $0x750] sm:$0xff]
    %v481 = vld [vmem:[#allocation7 + $0x758] sm:$0xff]
    %v482 = vld [vmem:[#allocation7 + $0x760] sm:$0xff]
    %v483 = vld [vmem:[#allocation7 + $0x768] sm:$0xff]
    %v484 = vld [vmem:[#allocation7 + $0x770] sm:$0xff]
    %v485 = vld [vmem:[#allocation7 + $0x778] sm:$0xff]
    %v486 = vld [vmem:[#allocation7 + $0x780] sm:$0xff]
    %v487 = vld [vmem:[#allocation7 + $0x788] sm:$0xff]
    %v488 = vld [vmem:[#allocation7 + $0x790] sm:$0xff]
    %v489 = vld [vmem:[#allocation7 + $0x798] sm:$0xff]
    %v490 = vld [vmem:[#allocation7 + $0x7a0] sm:$0xff]
    %v491 = vld [vmem:[#allocation7 + $0x7a8] sm:$0xff]
    %v492 = vld [vmem:[#allocation7 + $0x7b0] sm:$0xff]
    %v493 = vld [vmem:[#allocation7 + $0x7b8] sm:$0xff]
    %v494 = vld [vmem:[#allocation7 + $0x7c0] sm:$0xff]
    %v495 = vld [vmem:[#allocation7 + $0x7c8] sm:$0xff]
    %v496 = vld [vmem:[#allocation7 + $0x7d0] sm:$0xff]
    %v497 = vld [vmem:[#allocation7 + $0x7d8] sm:$0xff]
    %v498 = vld [vmem:[#allocation7 + $0x7e0] sm:$0xff]
    %v499 = vld [vmem:[#allocation7 + $0x7e8] sm:$0xff]
    %v500 = vld [vmem:[#allocation7 + $0x7f0] sm:$0xff]
    %v501 = vld [vmem:[#allocation7 + $0x7f8] sm:$0xff]
    %v502 = vld [vmem:[#allocation7 + $0x800] sm:$0xff]
    %v503 = vld [vmem:[#allocation7 + $0x808] sm:$0xff]
    %v504 = vld [vmem:[#allocation7 + $0x810] sm:$0xff]
    %v505 = vld [vmem:[#allocation7 + $0x818] sm:$0xff]
    %v506 = vld [vmem:[#allocation7 + $0x820] sm:$0xff]
    %v507 = vld [vmem:[#allocation7 + $0x828] sm:$0xff]
    %v508 = vld [vmem:[#allocation7 + $0x830] sm:$0xff]
    %v509 = vld [vmem:[#allocation7 + $0x838] sm:$0xff]
    %v510 = vld [vmem:[#allocation7 + $0x840] sm:$0xff]
    %v511 = vld [vmem:[#allocation7 + $0x848] sm:$0xff]
    %v512 = vld [vmem:[#allocation7 + $0x850] sm:$0xff]
    %v513 = vld [vmem:[#allocation7 + $0x858] sm:$0xff]
    %v514 = vld [vmem:[#allocation7 + $0x860] sm:$0xff]
    %v515 = vld [vmem:[#allocation7 + $0x868] sm:$0xff]
    %v516 = vld [vmem:[#allocation7 + $0x870] sm:$0xff]
    %v517 = vld [vmem:[#allocation7 + $0x878] sm:$0xff]
    %v518 = vld [vmem:[#allocation7 + $0x880] sm:$0xff]
    %v519 = vld [vmem:[#allocation7 + $0x888] sm:$0xff]
    %v520 = vld [vmem:[#allocation7 + $0x890] sm:$0xff]
    %v521 = vld [vmem:[#allocation7 + $0x898] sm:$0xff]
    %v522 = vld [vmem:[#allocation7 + $0x8a0] sm:$0xff]
    %v523 = vld [vmem:[#allocation7 + $0x8a8] sm:$0xff]
    %v524 = vld [vmem:[#allocation7 + $0x8b0] sm:$0xff]
    %v525 = vld [vmem:[#allocation7 + $0x8b8] sm:$0xff]
    %v526 = vld [vmem:[#allocation7 + $0x8c0] sm:$0xff]
    %v527 = vld [vmem:[#allocation7 + $0x8c8] sm:$0xff]
    %v528 = vld [vmem:[#allocation7 + $0x8d0] sm:$0xff]
    %v529 = vld [vmem:[#allocation7 + $0x8d8] sm:$0xff]
    %v530 = vld [vmem:[#allocation7 + $0x8e0] sm:$0xff]
    %v531 = vld [vmem:[#allocation7 + $0x8e8] sm:$0xff]
    %v532 = vld [vmem:[#allocation7 + $0x8f0] sm:$0xff]
    %v533 = vld [vmem:[#allocation7 + $0x8f8] sm:$0xff]
    %v534 = vld [vmem:[#allocation7 + $0x900] sm:$0xff]
    %v535 = vld [vmem:[#allocation7 + $0x908] sm:$0xff]
    %v536 = vld [vmem:[#allocation7 + $0x910] sm:$0xff]
    %v537 = vld [vmem:[#allocation7 + $0x918] sm:$0xff]
    %v538 = vld [vmem:[#allocation7 + $0x920] sm:$0xff]
    %v539 = vld [vmem:[#allocation7 + $0x928] sm:$0xff]
    %v540 = vld [vmem:[#allocation7 + $0x930] sm:$0xff]
    %v541 = vld [vmem:[#allocation7 + $0x938] sm:$0xff]
    %v542 = vld [vmem:[#allocation7 + $0x940] sm:$0xff]
    %v543 = vld [vmem:[#allocation7 + $0x948] sm:$0xff]
    %v544 = vld [vmem:[#allocation7 + $0x950] sm:$0xff]
    %v545 = vld [vmem:[#allocation7 + $0x958] sm:$0xff]
    %v546 = vld [vmem:[#allocation7 + $0x960] sm:$0xff]
    %v547 = vld [vmem:[#allocation7 + $0x968] sm:$0xff]
    %v548 = vld [vmem:[#allocation7 + $0x970] sm:$0xff]
    %v549 = vld [vmem:[#allocation7 + $0x978] sm:$0xff]
    %v550 = vld [vmem:[#allocation7 + $0x980] sm:$0xff]
    %v551 = vld [vmem:[#allocation7 + $0x988] sm:$0xff]
    %v552 = vld [vmem:[#allocation7 + $0x990] sm:$0xff]
    %v553 = vld [vmem:[#allocation7 + $0x998] sm:$0xff]
    %v554 = vld [vmem:[#allocation7 + $0x9a0] sm:$0xff]
    %v555 = vld [vmem:[#allocation7 + $0x9a8] sm:$0xff]
    %v556 = vld [vmem:[#allocation7 + $0x9b0] sm:$0xff]
    %v557 = vld [vmem:[#allocation7 + $0x9b8] sm:$0xff]
    %v558 = vld [vmem:[#allocation7 + $0x9c0] sm:$0xff]
    %v559 = vld [vmem:[#allocation7 + $0x9c8] sm:$0xff]
    %v560 = vld [vmem:[#allocation7 + $0x9d0] sm:$0xff]
    %v561 = vld [vmem:[#allocation7 + $0x9d8] sm:$0xff]
    %v562 = vld [vmem:[#allocation7 + $0x9e0] sm:$0xff]
    %v563 = vld [vmem:[#allocation7 + $0x9e8] sm:$0xff]
    %v564 = vld [vmem:[#allocation7 + $0x9f0] sm:$0xff]
    %v565 = vld [vmem:[#allocation7 + $0x9f8] sm:$0xff]
    %v566 = vld [vmem:[#allocation8] sm:$0xf]
    %v568 = vlaneseq
    %v569 = vshrl.u32 %v568, 7
    %v570 = vsub.s32 0, %v569
    %v571 = vrot.slane %v566, %v570
    %v572 = vlaneseq
    %v573 = vshrl.u32 %v572, 7
    %v574 = vsub.s32 1, %v573
    %v575 = vrot.slane %v566, %v574
    %v576 = vlaneseq
    %v577 = vshrl.u32 %v576, 7
    %v578 = vsub.s32 2, %v577
    %v579 = vrot.slane %v566, %v578
    %v580 = vlaneseq
    %v581 = vshrl.u32 %v580, 7
    %v582 = vsub.s32 3, %v581
    %v583 = vrot.slane %v566, %v582
    %v908 = vunpack.c.l.b16 %v246
    %v909 = vunpack.c.h.b16 %v246
    %v910 = vunpack.c.l.b16 %v247
    %v911 = vunpack.c.h.b16 %v247
    %v912 = vunpack.c.l.b16 %v248
    %v913 = vunpack.c.h.b16 %v248
    %v914 = vunpack.c.l.b16 %v249
    %v915 = vunpack.c.h.b16 %v249
    %v916 = vunpack.c.l.b16 %v250
    %v917 = vunpack.c.h.b16 %v250
    %v918 = vunpack.c.l.b16 %v251
    %v919 = vunpack.c.h.b16 %v251
    %v920 = vunpack.c.l.b16 %v252
    %v921 = vunpack.c.h.b16 %v252
    %v922 = vunpack.c.l.b16 %v253
    %v923 = vunpack.c.h.b16 %v253
    %v924 = vunpack.c.l.b16 %v254
    %v925 = vunpack.c.h.b16 %v254
    %v926 = vunpack.c.l.b16 %v255
    %v927 = vunpack.c.h.b16 %v255
    %v928 = vunpack.c.l.b16 %v256
    %v929 = vunpack.c.h.b16 %v256
    %v930 = vunpack.c.l.b16 %v257
    %v931 = vunpack.c.h.b16 %v257
    %v932 = vunpack.c.l.b16 %v258
    %v933 = vunpack.c.h.b16 %v258
    %v934 = vunpack.c.l.b16 %v259
    %v935 = vunpack.c.h.b16 %v259
    %v936 = vunpack.c.l.b16 %v260
    %v937 = vunpack.c.h.b16 %v260
    %v938 = vunpack.c.l.b16 %v261
    %v939 = vunpack.c.h.b16 %v261
    %v940 = vunpack.c.l.b16 %v262
    %v941 = vunpack.c.h.b16 %v262
    %v942 = vunpack.c.l.b16 %v263
    %v943 = vunpack.c.h.b16 %v263
    %v944 = vunpack.c.l.b16 %v264
    %v945 = vunpack.c.h.b16 %v264
    %v946 = vunpack.c.l.b16 %v265
    %v947 = vunpack.c.h.b16 %v265
    %v948 = vunpack.c.l.b16 %v266
    %v949 = vunpack.c.h.b16 %v266
    %v950 = vunpack.c.l.b16 %v267
    %v951 = vunpack.c.h.b16 %v267
    %v952 = vunpack.c.l.b16 %v268
    %v953 = vunpack.c.h.b16 %v268
    %v954 = vunpack.c.l.b16 %v269
    %v955 = vunpack.c.h.b16 %v269
    %v956 = vunpack.c.l.b16 %v270
    %v957 = vunpack.c.h.b16 %v270
    %v958 = vunpack.c.l.b16 %v271
    %v959 = vunpack.c.h.b16 %v271
    %v960 = vunpack.c.l.b16 %v272
    %v961 = vunpack.c.h.b16 %v272
    %v962 = vunpack.c.l.b16 %v273
    %v963 = vunpack.c.h.b16 %v273
    %v964 = vunpack.c.l.b16 %v274
    %v965 = vunpack.c.h.b16 %v274
    %v966 = vunpack.c.l.b16 %v275
    %v967 = vunpack.c.h.b16 %v275
    %v968 = vunpack.c.l.b16 %v276
    %v969 = vunpack.c.h.b16 %v276
    %v970 = vunpack.c.l.b16 %v277
    %v971 = vunpack.c.h.b16 %v277
    %v972 = vunpack.c.l.b16 %v278
    %v973 = vunpack.c.h.b16 %v278
    %v974 = vunpack.c.l.b16 %v279
    %v975 = vunpack.c.h.b16 %v279
    %v976 = vunpack.c.l.b16 %v280
    %v977 = vunpack.c.h.b16 %v280
    %v978 = vunpack.c.l.b16 %v281
    %v979 = vunpack.c.h.b16 %v281
    %v980 = vunpack.c.l.b16 %v282
    %v981 = vunpack.c.h.b16 %v282
    %v982 = vunpack.c.l.b16 %v283
    %v983 = vunpack.c.h.b16 %v283
    %v984 = vunpack.c.l.b16 %v284
    %v985 = vunpack.c.h.b16 %v284
    %v986 = vunpack.c.l.b16 %v285
    %v987 = vunpack.c.h.b16 %v285
    %v988 = vunpack.c.l.b16 %v286
    %v989 = vunpack.c.h.b16 %v286
    %v990 = vunpack.c.l.b16 %v287
    %v991 = vunpack.c.h.b16 %v287
    %v992 = vunpack.c.l.b16 %v288
    %v993 = vunpack.c.h.b16 %v288
    %v994 = vunpack.c.l.b16 %v289
    %v995 = vunpack.c.h.b16 %v289
    %v996 = vunpack.c.l.b16 %v290
    %v997 = vunpack.c.h.b16 %v290
    %v998 = vunpack.c.l.b16 %v291
    %v999 = vunpack.c.h.b16 %v291
    %v1000 = vunpack.c.l.b16 %v292
    %v1001 = vunpack.c.h.b16 %v292
    %v1002 = vunpack.c.l.b16 %v293
    %v1003 = vunpack.c.h.b16 %v293
    %v1004 = vunpack.c.l.b16 %v294
    %v1005 = vunpack.c.h.b16 %v294
    %v1006 = vunpack.c.l.b16 %v295
    %v1007 = vunpack.c.h.b16 %v295
    %v1008 = vunpack.c.l.b16 %v296
    %v1009 = vunpack.c.h.b16 %v296
    %v1010 = vunpack.c.l.b16 %v297
    %v1011 = vunpack.c.h.b16 %v297
    %v1012 = vunpack.c.l.b16 %v298
    %v1013 = vunpack.c.h.b16 %v298
    %v1014 = vunpack.c.l.b16 %v299
    %v1015 = vunpack.c.h.b16 %v299
    %v1016 = vunpack.c.l.b16 %v300
    %v1017 = vunpack.c.h.b16 %v300
    %v1018 = vunpack.c.l.b16 %v301
    %v1019 = vunpack.c.h.b16 %v301
    %v1020 = vunpack.c.l.b16 %v302
    %v1021 = vunpack.c.h.b16 %v302
    %v1022 = vunpack.c.l.b16 %v303
    %v1023 = vunpack.c.h.b16 %v303
    %v1024 = vunpack.c.l.b16 %v304
    %v1025 = vunpack.c.h.b16 %v304
    %v1026 = vunpack.c.l.b16 %v305
    %v1027 = vunpack.c.h.b16 %v305
    %v1028 = vunpack.c.l.b16 %v306
    %v1029 = vunpack.c.h.b16 %v306
    %v1030 = vunpack.c.l.b16 %v307
    %v1031 = vunpack.c.h.b16 %v307
    %v1032 = vunpack.c.l.b16 %v308
    %v1033 = vunpack.c.h.b16 %v308
    %v1034 = vunpack.c.l.b16 %v309
    %v1035 = vunpack.c.h.b16 %v309
    %v1036 = vunpack.c.l.b16 %v310
    %v1037 = vunpack.c.h.b16 %v310
    %v1038 = vunpack.c.l.b16 %v311
    %v1039 = vunpack.c.h.b16 %v311
    %v1040 = vunpack.c.l.b16 %v312
    %v1041 = vunpack.c.h.b16 %v312
    %v1042 = vunpack.c.l.b16 %v313
    %v1043 = vunpack.c.h.b16 %v313
    %v1044 = vunpack.c.l.b16 %v314
    %v1045 = vunpack.c.h.b16 %v314
    %v1046 = vunpack.c.l.b16 %v315
    %v1047 = vunpack.c.h.b16 %v315
    %v1048 = vunpack.c.l.b16 %v316
    %v1049 = vunpack.c.h.b16 %v316
    %v1050 = vunpack.c.l.b16 %v317
    %v1051 = vunpack.c.h.b16 %v317
    %v1052 = vunpack.c.l.b16 %v318
    %v1053 = vunpack.c.h.b16 %v318
    %v1054 = vunpack.c.l.b16 %v319
    %v1055 = vunpack.c.h.b16 %v319
    %v1056 = vunpack.c.l.b16 %v320
    %v1057 = vunpack.c.h.b16 %v320
    %v1058 = vunpack.c.l.b16 %v321
    %v1059 = vunpack.c.h.b16 %v321
    %v1060 = vunpack.c.l.b16 %v322
    %v1061 = vunpack.c.h.b16 %v322
    %v1062 = vunpack.c.l.b16 %v323
    %v1063 = vunpack.c.h.b16 %v323
    %v1064 = vunpack.c.l.b16 %v324
    %v1065 = vunpack.c.h.b16 %v324
    %v1066 = vunpack.c.l.b16 %v325
    %v1067 = vunpack.c.h.b16 %v325
    %v1068 = vunpack.c.l.b16 %v326
    %v1069 = vunpack.c.h.b16 %v326
    %v1070 = vunpack.c.l.b16 %v327
    %v1071 = vunpack.c.h.b16 %v327
    %v1072 = vunpack.c.l.b16 %v328
    %v1073 = vunpack.c.h.b16 %v328
    %v1074 = vunpack.c.l.b16 %v329
    %v1075 = vunpack.c.h.b16 %v329
    %v1076 = vunpack.c.l.b16 %v330
    %v1077 = vunpack.c.h.b16 %v330
    %v1078 = vunpack.c.l.b16 %v331
    %v1079 = vunpack.c.h.b16 %v331
    %v1080 = vunpack.c.l.b16 %v332
    %v1081 = vunpack.c.h.b16 %v332
    %v1082 = vunpack.c.l.b16 %v333
    %v1083 = vunpack.c.h.b16 %v333
    %v1084 = vunpack.c.l.b16 %v334
    %v1085 = vunpack.c.h.b16 %v334
    %v1086 = vunpack.c.l.b16 %v335
    %v1087 = vunpack.c.h.b16 %v335
    %v1088 = vunpack.c.l.b16 %v336
    %v1089 = vunpack.c.h.b16 %v336
    %v1090 = vunpack.c.l.b16 %v337
    %v1091 = vunpack.c.h.b16 %v337
    %v1092 = vunpack.c.l.b16 %v338
    %v1093 = vunpack.c.h.b16 %v338
    %v1094 = vunpack.c.l.b16 %v339
    %v1095 = vunpack.c.h.b16 %v339
    %v1096 = vunpack.c.l.b16 %v340
    %v1097 = vunpack.c.h.b16 %v340
    %v1098 = vunpack.c.l.b16 %v341
    %v1099 = vunpack.c.h.b16 %v341
    %v1100 = vunpack.c.l.b16 %v342
    %v1101 = vunpack.c.h.b16 %v342
    %v1102 = vunpack.c.l.b16 %v343
    %v1103 = vunpack.c.h.b16 %v343
    %v1104 = vunpack.c.l.b16 %v344
    %v1105 = vunpack.c.h.b16 %v344
    %v1106 = vunpack.c.l.b16 %v345
    %v1107 = vunpack.c.h.b16 %v345
    %v1108 = vunpack.c.l.b16 %v346
    %v1109 = vunpack.c.h.b16 %v346
    %v1110 = vunpack.c.l.b16 %v347
    %v1111 = vunpack.c.h.b16 %v347
    %v1112 = vunpack.c.l.b16 %v348
    %v1113 = vunpack.c.h.b16 %v348
    %v1114 = vunpack.c.l.b16 %v349
    %v1115 = vunpack.c.h.b16 %v349
    %v1116 = vunpack.c.l.b16 %v350
    %v1117 = vunpack.c.h.b16 %v350
    %v1118 = vunpack.c.l.b16 %v351
    %v1119 = vunpack.c.h.b16 %v351
    %v1120 = vunpack.c.l.b16 %v352
    %v1121 = vunpack.c.h.b16 %v352
    %v1122 = vunpack.c.l.b16 %v353
    %v1123 = vunpack.c.h.b16 %v353
    %v1124 = vunpack.c.l.b16 %v354
    %v1125 = vunpack.c.h.b16 %v354
    %v1126 = vunpack.c.l.b16 %v355
    %v1127 = vunpack.c.h.b16 %v355
    %v1128 = vunpack.c.l.b16 %v356
    %v1129 = vunpack.c.h.b16 %v356
    %v1130 = vunpack.c.l.b16 %v357
    %v1131 = vunpack.c.h.b16 %v357
    %v1132 = vunpack.c.l.b16 %v358
    %v1133 = vunpack.c.h.b16 %v358
    %v1134 = vunpack.c.l.b16 %v359
    %v1135 = vunpack.c.h.b16 %v359
    %v1136 = vunpack.c.l.b16 %v360
    %v1137 = vunpack.c.h.b16 %v360
    %v1138 = vunpack.c.l.b16 %v361
    %v1139 = vunpack.c.h.b16 %v361
    %v1140 = vunpack.c.l.b16 %v362
    %v1141 = vunpack.c.h.b16 %v362
    %v1142 = vunpack.c.l.b16 %v363
    %v1143 = vunpack.c.h.b16 %v363
    %v1144 = vunpack.c.l.b16 %v364
    %v1145 = vunpack.c.h.b16 %v364
    %v1146 = vunpack.c.l.b16 %v365
    %v1147 = vunpack.c.h.b16 %v365
    %v1148 = vunpack.c.l.b16 %v366
    %v1149 = vunpack.c.h.b16 %v366
    %v1150 = vunpack.c.l.b16 %v367
    %v1151 = vunpack.c.h.b16 %v367
    %v1152 = vunpack.c.l.b16 %v368
    %v1153 = vunpack.c.h.b16 %v368
    %v1154 = vunpack.c.l.b16 %v369
    %v1155 = vunpack.c.h.b16 %v369
    %v1156 = vunpack.c.l.b16 %v370
    %v1157 = vunpack.c.h.b16 %v370
    %v1158 = vunpack.c.l.b16 %v371
    %v1159 = vunpack.c.h.b16 %v371
    %v1160 = vunpack.c.l.b16 %v372
    %v1161 = vunpack.c.h.b16 %v372
    %v1162 = vunpack.c.l.b16 %v373
    %v1163 = vunpack.c.h.b16 %v373
    %v1164 = vunpack.c.l.b16 %v374
    %v1165 = vunpack.c.h.b16 %v374
    %v1166 = vunpack.c.l.b16 %v375
    %v1167 = vunpack.c.h.b16 %v375
    %v1168 = vunpack.c.l.b16 %v376
    %v1169 = vunpack.c.h.b16 %v376
    %v1170 = vunpack.c.l.b16 %v377
    %v1171 = vunpack.c.h.b16 %v377
    %v1172 = vunpack.c.l.b16 %v378
    %v1173 = vunpack.c.h.b16 %v378
    %v1174 = vunpack.c.l.b16 %v379
    %v1175 = vunpack.c.h.b16 %v379
    %v1176 = vunpack.c.l.b16 %v380
    %v1177 = vunpack.c.h.b16 %v380
    %v1178 = vunpack.c.l.b16 %v381
    %v1179 = vunpack.c.h.b16 %v381
    %v1180 = vunpack.c.l.b16 %v382
    %v1181 = vunpack.c.h.b16 %v382
    %v1182 = vunpack.c.l.b16 %v383
    %v1183 = vunpack.c.h.b16 %v383
    %v1184 = vunpack.c.l.b16 %v384
    %v1185 = vunpack.c.h.b16 %v384
    %v1186 = vunpack.c.l.b16 %v385
    %v1187 = vunpack.c.h.b16 %v385
    %v1188 = vunpack.c.l.b16 %v386
    %v1189 = vunpack.c.h.b16 %v386
    %v1190 = vunpack.c.l.b16 %v387
    %v1191 = vunpack.c.h.b16 %v387
    %v1192 = vunpack.c.l.b16 %v388
    %v1193 = vunpack.c.h.b16 %v388
    %v1194 = vunpack.c.l.b16 %v389
    %v1195 = vunpack.c.h.b16 %v389
    %v1196 = vunpack.c.l.b16 %v390
    %v1197 = vunpack.c.h.b16 %v390
    %v1198 = vunpack.c.l.b16 %v391
    %v1199 = vunpack.c.h.b16 %v391
    %v1200 = vunpack.c.l.b16 %v392
    %v1201 = vunpack.c.h.b16 %v392
    %v1202 = vunpack.c.l.b16 %v393
    %v1203 = vunpack.c.h.b16 %v393
    %v1204 = vunpack.c.l.b16 %v394
    %v1205 = vunpack.c.h.b16 %v394
    %v1206 = vunpack.c.l.b16 %v395
    %v1207 = vunpack.c.h.b16 %v395
    %v1208 = vunpack.c.l.b16 %v396
    %v1209 = vunpack.c.h.b16 %v396
    %v1210 = vunpack.c.l.b16 %v397
    %v1211 = vunpack.c.h.b16 %v397
    %v1212 = vunpack.c.l.b16 %v398
    %v1213 = vunpack.c.h.b16 %v398
    %v1214 = vunpack.c.l.b16 %v399
    %v1215 = vunpack.c.h.b16 %v399
    %v1216 = vunpack.c.l.b16 %v400
    %v1217 = vunpack.c.h.b16 %v400
    %v1218 = vunpack.c.l.b16 %v401
    %v1219 = vunpack.c.h.b16 %v401
    %v1220 = vunpack.c.l.b16 %v402
    %v1221 = vunpack.c.h.b16 %v402
    %v1222 = vunpack.c.l.b16 %v403
    %v1223 = vunpack.c.h.b16 %v403
    %v1224 = vunpack.c.l.b16 %v404
    %v1225 = vunpack.c.h.b16 %v404
    %v1226 = vunpack.c.l.b16 %v405
    %v1227 = vunpack.c.h.b16 %v405
    %v1228 = vunpack.c.l.b16 %v406
    %v1229 = vunpack.c.h.b16 %v406
    %v1230 = vunpack.c.l.b16 %v407
    %v1231 = vunpack.c.h.b16 %v407
    %v1232 = vunpack.c.l.b16 %v408
    %v1233 = vunpack.c.h.b16 %v408
    %v1234 = vunpack.c.l.b16 %v409
    %v1235 = vunpack.c.h.b16 %v409
    %v1236 = vunpack.c.l.b16 %v410
    %v1237 = vunpack.c.h.b16 %v410
    %v1238 = vunpack.c.l.b16 %v411
    %v1239 = vunpack.c.h.b16 %v411
    %v1240 = vunpack.c.l.b16 %v412
    %v1241 = vunpack.c.h.b16 %v412
    %v1242 = vunpack.c.l.b16 %v413
    %v1243 = vunpack.c.h.b16 %v413
    %v1244 = vunpack.c.l.b16 %v414
    %v1245 = vunpack.c.h.b16 %v414
    %v1246 = vunpack.c.l.b16 %v415
    %v1247 = vunpack.c.h.b16 %v415
    %v1248 = vunpack.c.l.b16 %v416
    %v1249 = vunpack.c.h.b16 %v416
    %v1250 = vunpack.c.l.b16 %v417
    %v1251 = vunpack.c.h.b16 %v417
    %v1252 = vunpack.c.l.b16 %v418
    %v1253 = vunpack.c.h.b16 %v418
    %v1254 = vunpack.c.l.b16 %v419
    %v1255 = vunpack.c.h.b16 %v419
    %v1256 = vunpack.c.l.b16 %v420
    %v1257 = vunpack.c.h.b16 %v420
    %v1258 = vunpack.c.l.b16 %v421
    %v1259 = vunpack.c.h.b16 %v421
    %v1260 = vunpack.c.l.b16 %v422
    %v1261 = vunpack.c.h.b16 %v422
    %v1262 = vunpack.c.l.b16 %v423
    %v1263 = vunpack.c.h.b16 %v423
    %v1264 = vunpack.c.l.b16 %v424
    %v1265 = vunpack.c.h.b16 %v424
    %v1266 = vunpack.c.l.b16 %v425
    %v1267 = vunpack.c.h.b16 %v425
    %v1268 = vunpack.c.l.b16 %v426
    %v1269 = vunpack.c.h.b16 %v426
    %v1270 = vunpack.c.l.b16 %v427
    %v1271 = vunpack.c.h.b16 %v427
    %v1272 = vunpack.c.l.b16 %v428
    %v1273 = vunpack.c.h.b16 %v428
    %v1274 = vunpack.c.l.b16 %v429
    %v1275 = vunpack.c.h.b16 %v429
    %v1276 = vunpack.c.l.b16 %v430
    %v1277 = vunpack.c.h.b16 %v430
    %v1278 = vunpack.c.l.b16 %v431
    %v1279 = vunpack.c.h.b16 %v431
    %v1280 = vunpack.c.l.b16 %v432
    %v1281 = vunpack.c.h.b16 %v432
    %v1282 = vunpack.c.l.b16 %v433
    %v1283 = vunpack.c.h.b16 %v433
    %v1284 = vunpack.c.l.b16 %v434
    %v1285 = vunpack.c.h.b16 %v434
    %v1286 = vunpack.c.l.b16 %v435
    %v1287 = vunpack.c.h.b16 %v435
    %v1288 = vunpack.c.l.b16 %v436
    %v1289 = vunpack.c.h.b16 %v436
    %v1290 = vunpack.c.l.b16 %v437
    %v1291 = vunpack.c.h.b16 %v437
    %v1292 = vunpack.c.l.b16 %v438
    %v1293 = vunpack.c.h.b16 %v438
    %v1294 = vunpack.c.l.b16 %v439
    %v1295 = vunpack.c.h.b16 %v439
    %v1296 = vunpack.c.l.b16 %v440
    %v1297 = vunpack.c.h.b16 %v440
    %v1298 = vunpack.c.l.b16 %v441
    %v1299 = vunpack.c.h.b16 %v441
    %v1300 = vunpack.c.l.b16 %v442
    %v1301 = vunpack.c.h.b16 %v442
    %v1302 = vunpack.c.l.b16 %v443
    %v1303 = vunpack.c.h.b16 %v443
    %v1304 = vunpack.c.l.b16 %v444
    %v1305 = vunpack.c.h.b16 %v444
    %v1306 = vunpack.c.l.b16 %v445
    %v1307 = vunpack.c.h.b16 %v445
    %v1308 = vunpack.c.l.b16 %v446
    %v1309 = vunpack.c.h.b16 %v446
    %v1310 = vunpack.c.l.b16 %v447
    %v1311 = vunpack.c.h.b16 %v447
    %v1312 = vunpack.c.l.b16 %v448
    %v1313 = vunpack.c.h.b16 %v448
    %v1314 = vunpack.c.l.b16 %v449
    %v1315 = vunpack.c.h.b16 %v449
    %v1316 = vunpack.c.l.b16 %v450
    %v1317 = vunpack.c.h.b16 %v450
    %v1318 = vunpack.c.l.b16 %v451
    %v1319 = vunpack.c.h.b16 %v451
    %v1320 = vunpack.c.l.b16 %v452
    %v1321 = vunpack.c.h.b16 %v452
    %v1322 = vunpack.c.l.b16 %v453
    %v1323 = vunpack.c.h.b16 %v453
    %v1324 = vunpack.c.l.b16 %v454
    %v1325 = vunpack.c.h.b16 %v454
    %v1326 = vunpack.c.l.b16 %v455
    %v1327 = vunpack.c.h.b16 %v455
    %v1328 = vunpack.c.l.b16 %v456
    %v1329 = vunpack.c.h.b16 %v456
    %v1330 = vunpack.c.l.b16 %v457
    %v1331 = vunpack.c.h.b16 %v457
    %v1332 = vunpack.c.l.b16 %v458
    %v1333 = vunpack.c.h.b16 %v458
    %v1334 = vunpack.c.l.b16 %v459
    %v1335 = vunpack.c.h.b16 %v459
    %v1336 = vunpack.c.l.b16 %v460
    %v1337 = vunpack.c.h.b16 %v460
    %v1338 = vunpack.c.l.b16 %v461
    %v1339 = vunpack.c.h.b16 %v461
    %v1340 = vunpack.c.l.b16 %v462
    %v1341 = vunpack.c.h.b16 %v462
    %v1342 = vunpack.c.l.b16 %v463
    %v1343 = vunpack.c.h.b16 %v463
    %v1344 = vunpack.c.l.b16 %v464
    %v1345 = vunpack.c.h.b16 %v464
    %v1346 = vunpack.c.l.b16 %v465
    %v1347 = vunpack.c.h.b16 %v465
    %v1348 = vunpack.c.l.b16 %v466
    %v1349 = vunpack.c.h.b16 %v466
    %v1350 = vunpack.c.l.b16 %v467
    %v1351 = vunpack.c.h.b16 %v467
    %v1352 = vunpack.c.l.b16 %v468
    %v1353 = vunpack.c.h.b16 %v468
    %v1354 = vunpack.c.l.b16 %v469
    %v1355 = vunpack.c.h.b16 %v469
    %v1356 = vunpack.c.l.b16 %v470
    %v1357 = vunpack.c.h.b16 %v470
    %v1358 = vunpack.c.l.b16 %v471
    %v1359 = vunpack.c.h.b16 %v471
    %v1360 = vunpack.c.l.b16 %v472
    %v1361 = vunpack.c.h.b16 %v472
    %v1362 = vunpack.c.l.b16 %v473
    %v1363 = vunpack.c.h.b16 %v473
    %v1364 = vunpack.c.l.b16 %v474
    %v1365 = vunpack.c.h.b16 %v474
    %v1366 = vunpack.c.l.b16 %v475
    %v1367 = vunpack.c.h.b16 %v475
    %v1368 = vunpack.c.l.b16 %v476
    %v1369 = vunpack.c.h.b16 %v476
    %v1370 = vunpack.c.l.b16 %v477
    %v1371 = vunpack.c.h.b16 %v477
    %v1372 = vunpack.c.l.b16 %v478
    %v1373 = vunpack.c.h.b16 %v478
    %v1374 = vunpack.c.l.b16 %v479
    %v1375 = vunpack.c.h.b16 %v479
    %v1376 = vunpack.c.l.b16 %v480
    %v1377 = vunpack.c.h.b16 %v480
    %v1378 = vunpack.c.l.b16 %v481
    %v1379 = vunpack.c.h.b16 %v481
    %v1380 = vunpack.c.l.b16 %v482
    %v1381 = vunpack.c.h.b16 %v482
    %v1382 = vunpack.c.l.b16 %v483
    %v1383 = vunpack.c.h.b16 %v483
    %v1384 = vunpack.c.l.b16 %v484
    %v1385 = vunpack.c.h.b16 %v484
    %v1386 = vunpack.c.l.b16 %v485
    %v1387 = vunpack.c.h.b16 %v485
    %v1388 = vunpack.c.l.b16 %v486
    %v1389 = vunpack.c.h.b16 %v486
    %v1390 = vunpack.c.l.b16 %v487
    %v1391 = vunpack.c.h.b16 %v487
    %v1392 = vunpack.c.l.b16 %v488
    %v1393 = vunpack.c.h.b16 %v488
    %v1394 = vunpack.c.l.b16 %v489
    %v1395 = vunpack.c.h.b16 %v489
    %v1396 = vunpack.c.l.b16 %v490
    %v1397 = vunpack.c.h.b16 %v490
    %v1398 = vunpack.c.l.b16 %v491
    %v1399 = vunpack.c.h.b16 %v491
    %v1400 = vunpack.c.l.b16 %v492
    %v1401 = vunpack.c.h.b16 %v492
    %v1402 = vunpack.c.l.b16 %v493
    %v1403 = vunpack.c.h.b16 %v493
    %v1404 = vunpack.c.l.b16 %v494
    %v1405 = vunpack.c.h.b16 %v494
    %v1406 = vunpack.c.l.b16 %v495
    %v1407 = vunpack.c.h.b16 %v495
    %v1408 = vunpack.c.l.b16 %v496
    %v1409 = vunpack.c.h.b16 %v496
    %v1410 = vunpack.c.l.b16 %v497
    %v1411 = vunpack.c.h.b16 %v497
    %v1412 = vunpack.c.l.b16 %v498
    %v1413 = vunpack.c.h.b16 %v498
    %v1414 = vunpack.c.l.b16 %v499
    %v1415 = vunpack.c.h.b16 %v499
    %v1416 = vunpack.c.l.b16 %v500
    %v1417 = vunpack.c.h.b16 %v500
    %v1418 = vunpack.c.l.b16 %v501
    %v1419 = vunpack.c.h.b16 %v501
    %v1420 = vunpack.c.l.b16 %v502
    %v1421 = vunpack.c.h.b16 %v502
    %v1422 = vunpack.c.l.b16 %v503
    %v1423 = vunpack.c.h.b16 %v503
    %v1424 = vunpack.c.l.b16 %v504
    %v1425 = vunpack.c.h.b16 %v504
    %v1426 = vunpack.c.l.b16 %v505
    %v1427 = vunpack.c.h.b16 %v505
    %v1428 = vunpack.c.l.b16 %v506
    %v1429 = vunpack.c.h.b16 %v506
    %v1430 = vunpack.c.l.b16 %v507
    %v1431 = vunpack.c.h.b16 %v507
    %v1432 = vunpack.c.l.b16 %v508
    %v1433 = vunpack.c.h.b16 %v508
    %v1434 = vunpack.c.l.b16 %v509
    %v1435 = vunpack.c.h.b16 %v509
    %v1436 = vunpack.c.l.b16 %v510
    %v1437 = vunpack.c.h.b16 %v510
    %v1438 = vunpack.c.l.b16 %v511
    %v1439 = vunpack.c.h.b16 %v511
    %v1440 = vunpack.c.l.b16 %v512
    %v1441 = vunpack.c.h.b16 %v512
    %v1442 = vunpack.c.l.b16 %v513
    %v1443 = vunpack.c.h.b16 %v513
    %v1444 = vunpack.c.l.b16 %v514
    %v1445 = vunpack.c.h.b16 %v514
    %v1446 = vunpack.c.l.b16 %v515
    %v1447 = vunpack.c.h.b16 %v515
    %v1448 = vunpack.c.l.b16 %v516
    %v1449 = vunpack.c.h.b16 %v516
    %v1450 = vunpack.c.l.b16 %v517
    %v1451 = vunpack.c.h.b16 %v517
    %v1452 = vunpack.c.l.b16 %v518
    %v1453 = vunpack.c.h.b16 %v518
    %v1454 = vunpack.c.l.b16 %v519
    %v1455 = vunpack.c.h.b16 %v519
    %v1456 = vunpack.c.l.b16 %v520
    %v1457 = vunpack.c.h.b16 %v520
    %v1458 = vunpack.c.l.b16 %v521
    %v1459 = vunpack.c.h.b16 %v521
    %v1460 = vunpack.c.l.b16 %v522
    %v1461 = vunpack.c.h.b16 %v522
    %v1462 = vunpack.c.l.b16 %v523
    %v1463 = vunpack.c.h.b16 %v523
    %v1464 = vunpack.c.l.b16 %v524
    %v1465 = vunpack.c.h.b16 %v524
    %v1466 = vunpack.c.l.b16 %v525
    %v1467 = vunpack.c.h.b16 %v525
    %v1468 = vunpack.c.l.b16 %v526
    %v1469 = vunpack.c.h.b16 %v526
    %v1470 = vunpack.c.l.b16 %v527
    %v1471 = vunpack.c.h.b16 %v527
    %v1472 = vunpack.c.l.b16 %v528
    %v1473 = vunpack.c.h.b16 %v528
    %v1474 = vunpack.c.l.b16 %v529
    %v1475 = vunpack.c.h.b16 %v529
    %v1476 = vunpack.c.l.b16 %v530
    %v1477 = vunpack.c.h.b16 %v530
    %v1478 = vunpack.c.l.b16 %v531
    %v1479 = vunpack.c.h.b16 %v531
    %v1480 = vunpack.c.l.b16 %v532
    %v1481 = vunpack.c.h.b16 %v532
    %v1482 = vunpack.c.l.b16 %v533
    %v1483 = vunpack.c.h.b16 %v533
    %v1484 = vunpack.c.l.b16 %v534
    %v1485 = vunpack.c.h.b16 %v534
    %v1486 = vunpack.c.l.b16 %v535
    %v1487 = vunpack.c.h.b16 %v535
    %v1488 = vunpack.c.l.b16 %v536
    %v1489 = vunpack.c.h.b16 %v536
    %v1490 = vunpack.c.l.b16 %v537
    %v1491 = vunpack.c.h.b16 %v537
    %v1492 = vunpack.c.l.b16 %v538
    %v1493 = vunpack.c.h.b16 %v538
    %v1494 = vunpack.c.l.b16 %v539
    %v1495 = vunpack.c.h.b16 %v539
    %v1496 = vunpack.c.l.b16 %v540
    %v1497 = vunpack.c.h.b16 %v540
    %v1498 = vunpack.c.l.b16 %v541
    %v1499 = vunpack.c.h.b16 %v541
    %v1500 = vunpack.c.l.b16 %v542
    %v1501 = vunpack.c.h.b16 %v542
    %v1502 = vunpack.c.l.b16 %v543
    %v1503 = vunpack.c.h.b16 %v543
    %v1504 = vunpack.c.l.b16 %v544
    %v1505 = vunpack.c.h.b16 %v544
    %v1506 = vunpack.c.l.b16 %v545
    %v1507 = vunpack.c.h.b16 %v545
    %v1508 = vunpack.c.l.b16 %v546
    %v1509 = vunpack.c.h.b16 %v546
    %v1510 = vunpack.c.l.b16 %v547
    %v1511 = vunpack.c.h.b16 %v547
    %v1512 = vunpack.c.l.b16 %v548
    %v1513 = vunpack.c.h.b16 %v548
    %v1514 = vunpack.c.l.b16 %v549
    %v1515 = vunpack.c.h.b16 %v549
    %v1516 = vunpack.c.l.b16 %v550
    %v1517 = vunpack.c.h.b16 %v550
    %v1518 = vunpack.c.l.b16 %v551
    %v1519 = vunpack.c.h.b16 %v551
    %v1520 = vunpack.c.l.b16 %v552
    %v1521 = vunpack.c.h.b16 %v552
    %v1522 = vunpack.c.l.b16 %v553
    %v1523 = vunpack.c.h.b16 %v553
    %v1524 = vunpack.c.l.b16 %v554
    %v1525 = vunpack.c.h.b16 %v554
    %v1526 = vunpack.c.l.b16 %v555
    %v1527 = vunpack.c.h.b16 %v555
    %v1528 = vunpack.c.l.b16 %v556
    %v1529 = vunpack.c.h.b16 %v556
    %v1530 = vunpack.c.l.b16 %v557
    %v1531 = vunpack.c.h.b16 %v557
    %v1532 = vunpack.c.l.b16 %v558
    %v1533 = vunpack.c.h.b16 %v558
    %v1534 = vunpack.c.l.b16 %v559
    %v1535 = vunpack.c.h.b16 %v559
    %v1536 = vunpack.c.l.b16 %v560
    %v1537 = vunpack.c.h.b16 %v560
    %v1538 = vunpack.c.l.b16 %v561
    %v1539 = vunpack.c.h.b16 %v561
    %v1540 = vunpack.c.l.b16 %v562
    %v1541 = vunpack.c.h.b16 %v562
    %v1542 = vunpack.c.l.b16 %v563
    %v1543 = vunpack.c.h.b16 %v563
    %v1544 = vunpack.c.l.b16 %v564
    %v1545 = vunpack.c.h.b16 %v564
    %v1546 = vunpack.c.l.b16 %v565
    %v1547 = vunpack.c.h.b16 %v565
    %v1548 = vpack.c.b16 %v912, %v908
    %v1549 = vpack.c.b16 %v913, %v909
    %v1550 = vpack.c.b16 %v914, %v910
    %v1551 = vpack.c.b16 %v915, %v911
    %v1552 = vpack.c.b16 %v920, %v916
    %v1553 = vpack.c.b16 %v921, %v917
    %v1554 = vpack.c.b16 %v922, %v918
    %v1555 = vpack.c.b16 %v923, %v919
    %v1556 = vpack.c.b16 %v928, %v924
    %v1557 = vpack.c.b16 %v929, %v925
    %v1558 = vpack.c.b16 %v930, %v926
    %v1559 = vpack.c.b16 %v931, %v927
    %v1560 = vpack.c.b16 %v936, %v932
    %v1561 = vpack.c.b16 %v937, %v933
    %v1562 = vpack.c.b16 %v938, %v934
    %v1563 = vpack.c.b16 %v939, %v935
    %v1564 = vpack.c.b16 %v944, %v940
    %v1565 = vpack.c.b16 %v945, %v941
    %v1566 = vpack.c.b16 %v946, %v942
    %v1567 = vpack.c.b16 %v947, %v943
    %v1568 = vpack.c.b16 %v952, %v948
    %v1569 = vpack.c.b16 %v953, %v949
    %v1570 = vpack.c.b16 %v954, %v950
    %v1571 = vpack.c.b16 %v955, %v951
    %v1572 = vpack.c.b16 %v960, %v956
    %v1573 = vpack.c.b16 %v961, %v957
    %v1574 = vpack.c.b16 %v962, %v958
    %v1575 = vpack.c.b16 %v963, %v959
    %v1576 = vpack.c.b16 %v968, %v964
    %v1577 = vpack.c.b16 %v969, %v965
    %v1578 = vpack.c.b16 %v970, %v966
    %v1579 = vpack.c.b16 %v971, %v967
    %v1580 = vpack.c.b16 %v976, %v972
    %v1581 = vpack.c.b16 %v977, %v973
    %v1582 = vpack.c.b16 %v978, %v974
    %v1583 = vpack.c.b16 %v979, %v975
    %v1584 = vpack.c.b16 %v984, %v980
    %v1585 = vpack.c.b16 %v985, %v981
    %v1586 = vpack.c.b16 %v986, %v982
    %v1587 = vpack.c.b16 %v987, %v983
    %v1588 = vpack.c.b16 %v992, %v988
    %v1589 = vpack.c.b16 %v993, %v989
    %v1590 = vpack.c.b16 %v994, %v990
    %v1591 = vpack.c.b16 %v995, %v991
    %v1592 = vpack.c.b16 %v1000, %v996
    %v1593 = vpack.c.b16 %v1001, %v997
    %v1594 = vpack.c.b16 %v1002, %v998
    %v1595 = vpack.c.b16 %v1003, %v999
    %v1596 = vpack.c.b16 %v1008, %v1004
    %v1597 = vpack.c.b16 %v1009, %v1005
    %v1598 = vpack.c.b16 %v1010, %v1006
    %v1599 = vpack.c.b16 %v1011, %v1007
    %v1600 = vpack.c.b16 %v1016, %v1012
    %v1601 = vpack.c.b16 %v1017, %v1013
    %v1602 = vpack.c.b16 %v1018, %v1014
    %v1603 = vpack.c.b16 %v1019, %v1015
    %v1604 = vpack.c.b16 %v1024, %v1020
    %v1605 = vpack.c.b16 %v1025, %v1021
    %v1606 = vpack.c.b16 %v1026, %v1022
    %v1607 = vpack.c.b16 %v1027, %v1023
    %v1608 = vpack.c.b16 %v1032, %v1028
    %v1609 = vpack.c.b16 %v1033, %v1029
    %v1610 = vpack.c.b16 %v1034, %v1030
    %v1611 = vpack.c.b16 %v1035, %v1031
    %v1612 = vpack.c.b16 %v1040, %v1036
    %v1613 = vpack.c.b16 %v1041, %v1037
    %v1614 = vpack.c.b16 %v1042, %v1038
    %v1615 = vpack.c.b16 %v1043, %v1039
    %v1616 = vpack.c.b16 %v1048, %v1044
    %v1617 = vpack.c.b16 %v1049, %v1045
    %v1618 = vpack.c.b16 %v1050, %v1046
    %v1619 = vpack.c.b16 %v1051, %v1047
    %v1620 = vpack.c.b16 %v1056, %v1052
    %v1621 = vpack.c.b16 %v1057, %v1053
    %v1622 = vpack.c.b16 %v1058, %v1054
    %v1623 = vpack.c.b16 %v1059, %v1055
    %v1624 = vpack.c.b16 %v1064, %v1060
    %v1625 = vpack.c.b16 %v1065, %v1061
    %v1626 = vpack.c.b16 %v1066, %v1062
    %v1627 = vpack.c.b16 %v1067, %v1063
    %v1628 = vpack.c.b16 %v1072, %v1068
    %v1629 = vpack.c.b16 %v1073, %v1069
    %v1630 = vpack.c.b16 %v1074, %v1070
    %v1631 = vpack.c.b16 %v1075, %v1071
    %v1632 = vpack.c.b16 %v1080, %v1076
    %v1633 = vpack.c.b16 %v1081, %v1077
    %v1634 = vpack.c.b16 %v1082, %v1078
    %v1635 = vpack.c.b16 %v1083, %v1079
    %v1636 = vpack.c.b16 %v1088, %v1084
    %v1637 = vpack.c.b16 %v1089, %v1085
    %v1638 = vpack.c.b16 %v1090, %v1086
    %v1639 = vpack.c.b16 %v1091, %v1087
    %v1640 = vpack.c.b16 %v1096, %v1092
    %v1641 = vpack.c.b16 %v1097, %v1093
    %v1642 = vpack.c.b16 %v1098, %v1094
    %v1643 = vpack.c.b16 %v1099, %v1095
    %v1644 = vpack.c.b16 %v1104, %v1100
    %v1645 = vpack.c.b16 %v1105, %v1101
    %v1646 = vpack.c.b16 %v1106, %v1102
    %v1647 = vpack.c.b16 %v1107, %v1103
    %v1648 = vpack.c.b16 %v1112, %v1108
    %v1649 = vpack.c.b16 %v1113, %v1109
    %v1650 = vpack.c.b16 %v1114, %v1110
    %v1651 = vpack.c.b16 %v1115, %v1111
    %v1652 = vpack.c.b16 %v1120, %v1116
    %v1653 = vpack.c.b16 %v1121, %v1117
    %v1654 = vpack.c.b16 %v1122, %v1118
    %v1655 = vpack.c.b16 %v1123, %v1119
    %v1656 = vpack.c.b16 %v1128, %v1124
    %v1657 = vpack.c.b16 %v1129, %v1125
    %v1658 = vpack.c.b16 %v1130, %v1126
    %v1659 = vpack.c.b16 %v1131, %v1127
    %v1660 = vpack.c.b16 %v1136, %v1132
    %v1661 = vpack.c.b16 %v1137, %v1133
    %v1662 = vpack.c.b16 %v1138, %v1134
    %v1663 = vpack.c.b16 %v1139, %v1135
    %v1664 = vpack.c.b16 %v1144, %v1140
    %v1665 = vpack.c.b16 %v1145, %v1141
    %v1666 = vpack.c.b16 %v1146, %v1142
    %v1667 = vpack.c.b16 %v1147, %v1143
    %v1668 = vpack.c.b16 %v1152, %v1148
    %v1669 = vpack.c.b16 %v1153, %v1149
    %v1670 = vpack.c.b16 %v1154, %v1150
    %v1671 = vpack.c.b16 %v1155, %v1151
    %v1672 = vpack.c.b16 %v1160, %v1156
    %v1673 = vpack.c.b16 %v1161, %v1157
    %v1674 = vpack.c.b16 %v1162, %v1158
    %v1675 = vpack.c.b16 %v1163, %v1159
    %v1676 = vpack.c.b16 %v1168, %v1164
    %v1677 = vpack.c.b16 %v1169, %v1165
    %v1678 = vpack.c.b16 %v1170, %v1166
    %v1679 = vpack.c.b16 %v1171, %v1167
    %v1680 = vpack.c.b16 %v1176, %v1172
    %v1681 = vpack.c.b16 %v1177, %v1173
    %v1682 = vpack.c.b16 %v1178, %v1174
    %v1683 = vpack.c.b16 %v1179, %v1175
    %v1684 = vpack.c.b16 %v1184, %v1180
    %v1685 = vpack.c.b16 %v1185, %v1181
    %v1686 = vpack.c.b16 %v1186, %v1182
    %v1687 = vpack.c.b16 %v1187, %v1183
    %v1688 = vpack.c.b16 %v1192, %v1188
    %v1689 = vpack.c.b16 %v1193, %v1189
    %v1690 = vpack.c.b16 %v1194, %v1190
    %v1691 = vpack.c.b16 %v1195, %v1191
    %v1692 = vpack.c.b16 %v1200, %v1196
    %v1693 = vpack.c.b16 %v1201, %v1197
    %v1694 = vpack.c.b16 %v1202, %v1198
    %v1695 = vpack.c.b16 %v1203, %v1199
    %v1696 = vpack.c.b16 %v1208, %v1204
    %v1697 = vpack.c.b16 %v1209, %v1205
    %v1698 = vpack.c.b16 %v1210, %v1206
    %v1699 = vpack.c.b16 %v1211, %v1207
    %v1700 = vpack.c.b16 %v1216, %v1212
    %v1701 = vpack.c.b16 %v1217, %v1213
    %v1702 = vpack.c.b16 %v1218, %v1214
    %v1703 = vpack.c.b16 %v1219, %v1215
    %v1704 = vpack.c.b16 %v1224, %v1220
    %v1705 = vpack.c.b16 %v1225, %v1221
    %v1706 = vpack.c.b16 %v1226, %v1222
    %v1707 = vpack.c.b16 %v1227, %v1223
    %v1708 = vpack.c.b16 %v1232, %v1228
    %v1709 = vpack.c.b16 %v1233, %v1229
    %v1710 = vpack.c.b16 %v1234, %v1230
    %v1711 = vpack.c.b16 %v1235, %v1231
    %v1712 = vpack.c.b16 %v1240, %v1236
    %v1713 = vpack.c.b16 %v1241, %v1237
    %v1714 = vpack.c.b16 %v1242, %v1238
    %v1715 = vpack.c.b16 %v1243, %v1239
    %v1716 = vpack.c.b16 %v1248, %v1244
    %v1717 = vpack.c.b16 %v1249, %v1245
    %v1718 = vpack.c.b16 %v1250, %v1246
    %v1719 = vpack.c.b16 %v1251, %v1247
    %v1720 = vpack.c.b16 %v1256, %v1252
    %v1721 = vpack.c.b16 %v1257, %v1253
    %v1722 = vpack.c.b16 %v1258, %v1254
    %v1723 = vpack.c.b16 %v1259, %v1255
    %v1724 = vpack.c.b16 %v1264, %v1260
    %v1725 = vpack.c.b16 %v1265, %v1261
    %v1726 = vpack.c.b16 %v1266, %v1262
    %v1727 = vpack.c.b16 %v1267, %v1263
    %v1728 = vpack.c.b16 %v1272, %v1268
    %v1729 = vpack.c.b16 %v1273, %v1269
    %v1730 = vpack.c.b16 %v1274, %v1270
    %v1731 = vpack.c.b16 %v1275, %v1271
    %v1732 = vpack.c.b16 %v1280, %v1276
    %v1733 = vpack.c.b16 %v1281, %v1277
    %v1734 = vpack.c.b16 %v1282, %v1278
    %v1735 = vpack.c.b16 %v1283, %v1279
    %v1736 = vpack.c.b16 %v1288, %v1284
    %v1737 = vpack.c.b16 %v1289, %v1285
    %v1738 = vpack.c.b16 %v1290, %v1286
    %v1739 = vpack.c.b16 %v1291, %v1287
    %v1740 = vpack.c.b16 %v1296, %v1292
    %v1741 = vpack.c.b16 %v1297, %v1293
    %v1742 = vpack.c.b16 %v1298, %v1294
    %v1743 = vpack.c.b16 %v1299, %v1295
    %v1744 = vpack.c.b16 %v1304, %v1300
    %v1745 = vpack.c.b16 %v1305, %v1301
    %v1746 = vpack.c.b16 %v1306, %v1302
    %v1747 = vpack.c.b16 %v1307, %v1303
    %v1748 = vpack.c.b16 %v1312, %v1308
    %v1749 = vpack.c.b16 %v1313, %v1309
    %v1750 = vpack.c.b16 %v1314, %v1310
    %v1751 = vpack.c.b16 %v1315, %v1311
    %v1752 = vpack.c.b16 %v1320, %v1316
    %v1753 = vpack.c.b16 %v1321, %v1317
    %v1754 = vpack.c.b16 %v1322, %v1318
    %v1755 = vpack.c.b16 %v1323, %v1319
    %v1756 = vpack.c.b16 %v1328, %v1324
    %v1757 = vpack.c.b16 %v1329, %v1325
    %v1758 = vpack.c.b16 %v1330, %v1326
    %v1759 = vpack.c.b16 %v1331, %v1327
    %v1760 = vpack.c.b16 %v1336, %v1332
    %v1761 = vpack.c.b16 %v1337, %v1333
    %v1762 = vpack.c.b16 %v1338, %v1334
    %v1763 = vpack.c.b16 %v1339, %v1335
    %v1764 = vpack.c.b16 %v1344, %v1340
    %v1765 = vpack.c.b16 %v1345, %v1341
    %v1766 = vpack.c.b16 %v1346, %v1342
    %v1767 = vpack.c.b16 %v1347, %v1343
    %v1768 = vpack.c.b16 %v1352, %v1348
    %v1769 = vpack.c.b16 %v1353, %v1349
    %v1770 = vpack.c.b16 %v1354, %v1350
    %v1771 = vpack.c.b16 %v1355, %v1351
    %v1772 = vpack.c.b16 %v1360, %v1356
    %v1773 = vpack.c.b16 %v1361, %v1357
    %v1774 = vpack.c.b16 %v1362, %v1358
    %v1775 = vpack.c.b16 %v1363, %v1359
    %v1776 = vpack.c.b16 %v1368, %v1364
    %v1777 = vpack.c.b16 %v1369, %v1365
    %v1778 = vpack.c.b16 %v1370, %v1366
    %v1779 = vpack.c.b16 %v1371, %v1367
    %v1780 = vpack.c.b16 %v1376, %v1372
    %v1781 = vpack.c.b16 %v1377, %v1373
    %v1782 = vpack.c.b16 %v1378, %v1374
    %v1783 = vpack.c.b16 %v1379, %v1375
    %v1784 = vpack.c.b16 %v1384, %v1380
    %v1785 = vpack.c.b16 %v1385, %v1381
    %v1786 = vpack.c.b16 %v1386, %v1382
    %v1787 = vpack.c.b16 %v1387, %v1383
    %v1788 = vpack.c.b16 %v1392, %v1388
    %v1789 = vpack.c.b16 %v1393, %v1389
    %v1790 = vpack.c.b16 %v1394, %v1390
    %v1791 = vpack.c.b16 %v1395, %v1391
    %v1792 = vpack.c.b16 %v1400, %v1396
    %v1793 = vpack.c.b16 %v1401, %v1397
    %v1794 = vpack.c.b16 %v1402, %v1398
    %v1795 = vpack.c.b16 %v1403, %v1399
    %v1796 = vpack.c.b16 %v1408, %v1404
    %v1797 = vpack.c.b16 %v1409, %v1405
    %v1798 = vpack.c.b16 %v1410, %v1406
    %v1799 = vpack.c.b16 %v1411, %v1407
    %v1800 = vpack.c.b16 %v1416, %v1412
    %v1801 = vpack.c.b16 %v1417, %v1413
    %v1802 = vpack.c.b16 %v1418, %v1414
    %v1803 = vpack.c.b16 %v1419, %v1415
    %v1804 = vpack.c.b16 %v1424, %v1420
    %v1805 = vpack.c.b16 %v1425, %v1421
    %v1806 = vpack.c.b16 %v1426, %v1422
    %v1807 = vpack.c.b16 %v1427, %v1423
    %v1808 = vpack.c.b16 %v1432, %v1428
    %v1809 = vpack.c.b16 %v1433, %v1429
    %v1810 = vpack.c.b16 %v1434, %v1430
    %v1811 = vpack.c.b16 %v1435, %v1431
    %v1812 = vpack.c.b16 %v1440, %v1436
    %v1813 = vpack.c.b16 %v1441, %v1437
    %v1814 = vpack.c.b16 %v1442, %v1438
    %v1815 = vpack.c.b16 %v1443, %v1439
    %v1816 = vpack.c.b16 %v1448, %v1444
    %v1817 = vpack.c.b16 %v1449, %v1445
    %v1818 = vpack.c.b16 %v1450, %v1446
    %v1819 = vpack.c.b16 %v1451, %v1447
    %v1820 = vpack.c.b16 %v1456, %v1452
    %v1821 = vpack.c.b16 %v1457, %v1453
    %v1822 = vpack.c.b16 %v1458, %v1454
    %v1823 = vpack.c.b16 %v1459, %v1455
    %v1824 = vpack.c.b16 %v1464, %v1460
    %v1825 = vpack.c.b16 %v1465, %v1461
    %v1826 = vpack.c.b16 %v1466, %v1462
    %v1827 = vpack.c.b16 %v1467, %v1463
    %v1828 = vpack.c.b16 %v1472, %v1468
    %v1829 = vpack.c.b16 %v1473, %v1469
    %v1830 = vpack.c.b16 %v1474, %v1470
    %v1831 = vpack.c.b16 %v1475, %v1471
    %v1832 = vpack.c.b16 %v1480, %v1476
    %v1833 = vpack.c.b16 %v1481, %v1477
    %v1834 = vpack.c.b16 %v1482, %v1478
    %v1835 = vpack.c.b16 %v1483, %v1479
    %v1836 = vpack.c.b16 %v1488, %v1484
    %v1837 = vpack.c.b16 %v1489, %v1485
    %v1838 = vpack.c.b16 %v1490, %v1486
    %v1839 = vpack.c.b16 %v1491, %v1487
    %v1840 = vpack.c.b16 %v1496, %v1492
    %v1841 = vpack.c.b16 %v1497, %v1493
    %v1842 = vpack.c.b16 %v1498, %v1494
    %v1843 = vpack.c.b16 %v1499, %v1495
    %v1844 = vpack.c.b16 %v1504, %v1500
    %v1845 = vpack.c.b16 %v1505, %v1501
    %v1846 = vpack.c.b16 %v1506, %v1502
    %v1847 = vpack.c.b16 %v1507, %v1503
    %v1848 = vpack.c.b16 %v1512, %v1508
    %v1849 = vpack.c.b16 %v1513, %v1509
    %v1850 = vpack.c.b16 %v1514, %v1510
    %v1851 = vpack.c.b16 %v1515, %v1511
    %v1852 = vpack.c.b16 %v1520, %v1516
    %v1853 = vpack.c.b16 %v1521, %v1517
    %v1854 = vpack.c.b16 %v1522, %v1518
    %v1855 = vpack.c.b16 %v1523, %v1519
    %v1856 = vpack.c.b16 %v1528, %v1524
    %v1857 = vpack.c.b16 %v1529, %v1525
    %v1858 = vpack.c.b16 %v1530, %v1526
    %v1859 = vpack.c.b16 %v1531, %v1527
    %v1860 = vpack.c.b16 %v1536, %v1532
    %v1861 = vpack.c.b16 %v1537, %v1533
    %v1862 = vpack.c.b16 %v1538, %v1534
    %v1863 = vpack.c.b16 %v1539, %v1535
    %v1864 = vpack.c.b16 %v1544, %v1540
    %v1865 = vpack.c.b16 %v1545, %v1541
    %v1866 = vpack.c.b16 %v1546, %v1542
    %v1867 = vpack.c.b16 %v1547, %v1543
    %2188 = vmatprep.subr.bf16.mxu0 %v1577
    %2189 = vmatpush1.bf16.msra.mxu0 %v1576
    %2190 = vmatprep.subr.bf16.mxu0 %v1573
    %2191 = vmatpush1.bf16.msra.mxu0 %v1572
    %2192 = vmatprep.subr.bf16.mxu0 %v1569
    %2193 = vmatpush1.bf16.msra.mxu0 %v1568
    %2194 = vmatprep.subr.bf16.mxu0 %v1565
    %2195 = vmatpush1.bf16.msra.mxu0 %v1564
    %2196 = vmatprep.subr.bf16.mxu0 %v1561
    %2197 = vmatpush1.bf16.msra.mxu0 %v1560
    %2198 = vmatprep.subr.bf16.mxu0 %v1557
    %2199 = vmatpush1.bf16.msra.mxu0 %v1556
    %2200 = vmatprep.subr.bf16.mxu0 %v1553
    %2201 = vmatpush1.bf16.msra.mxu0 %v1552
    %2202 = vmatprep.subr.bf16.mxu0 %v1549
    %2203 = vmatpush1.bf16.msra.mxu0 %v1548
    %2204 = vmatprep.subr.bf16.mxu0 %v1609
    %2205 = vmatpush2.bf16.msra.mxu0 %v1608
    %2206 = vmatprep.subr.bf16.mxu0 %v1605
    %2207 = vmatpush2.bf16.msra.mxu0 %v1604
    %2208 = vmatprep.subr.bf16.mxu0 %v1601
    %2209 = vmatpush2.bf16.msra.mxu0 %v1600
    %2210 = vmatprep.subr.bf16.mxu0 %v1597
    %2211 = vmatpush2.bf16.msra.mxu0 %v1596
    %2212 = vmatprep.subr.bf16.mxu0 %v1593
    %2213 = vmatpush2.bf16.msra.mxu0 %v1592
    %2214 = vmatprep.subr.bf16.mxu0 %v1589
    %2215 = vmatpush2.bf16.msra.mxu0 %v1588
    %2216 = vmatprep.subr.bf16.mxu0 %v1585
    %2217 = vmatpush2.bf16.msra.mxu0 %v1584
    %2218 = vmatprep.subr.bf16.mxu0 %v1581
    %2219 = vmatpush2.bf16.msra.mxu0 %v1580
    %2220 = vmatprep.mubr.bf16.mxu0 %v237
    %2221 = vmatmul.mubr.bf16.gmra.mxu0 %v236
    %v2222 = vpop.f32.mrf.mxu0
    %v2223 = vadd.f32 %v571, %v2222
    %v2224 = vpop.f32.mrf.mxu0
    %v2225 = vadd.f32 %v575, %v2224
    %v2226 = vpop.f32.mrf.mxu0
    %v2227 = vpop.f32.mrf.mxu0
    %2228 = vdwg.mxu0
    %2229 = vmatprep.subr.bf16.mxu0 %v1641
    %2230 = vmatpush1.bf16.msra.mxu0 %v1640
    %2231 = vmatprep.subr.bf16.mxu0 %v1637
    %2232 = vmatpush1.bf16.msra.mxu0 %v1636
    %2233 = vmatprep.subr.bf16.mxu0 %v1633
    %2234 = vmatpush1.bf16.msra.mxu0 %v1632
    %2235 = vmatprep.subr.bf16.mxu0 %v1629
    %2236 = vmatpush1.bf16.msra.mxu0 %v1628
    %2237 = vmatprep.subr.bf16.mxu0 %v1625
    %2238 = vmatpush1.bf16.msra.mxu0 %v1624
    %2239 = vmatprep.subr.bf16.mxu0 %v1621
    %2240 = vmatpush1.bf16.msra.mxu0 %v1620
    %2241 = vmatprep.subr.bf16.mxu0 %v1617
    %2242 = vmatpush1.bf16.msra.mxu0 %v1616
    %2243 = vmatprep.subr.bf16.mxu0 %v1613
    %2244 = vmatpush1.bf16.msra.mxu0 %v1612
    %2245 = vmatprep.subr.bf16.mxu0 %v1673
    %2246 = vmatpush2.bf16.msra.mxu0 %v1672
    %2247 = vmatprep.subr.bf16.mxu0 %v1669
    %2248 = vmatpush2.bf16.msra.mxu0 %v1668
    %2249 = vmatprep.subr.bf16.mxu0 %v1665
    %2250 = vmatpush2.bf16.msra.mxu0 %v1664
    %2251 = vmatprep.subr.bf16.mxu0 %v1661
    %2252 = vmatpush2.bf16.msra.mxu0 %v1660
    %2253 = vmatprep.subr.bf16.mxu0 %v1657
    %2254 = vmatpush2.bf16.msra.mxu0 %v1656
    %2255 = vmatprep.subr.bf16.mxu0 %v1653
    %2256 = vmatpush2.bf16.msra.mxu0 %v1652
    %2257 = vmatprep.subr.bf16.mxu0 %v1649
    %2258 = vmatpush2.bf16.msra.mxu0 %v1648
    %2259 = vmatprep.subr.bf16.mxu0 %v1645
    %2260 = vmatpush2.bf16.msra.mxu0 %v1644
    %2261 = vmatprep.mubr.bf16.mxu0 %v239
    %2262 = vmatmul.mubr.bf16.gmra.mxu0 %v238
    %v2263 = vpop.f32.mrf.mxu0
    %v2264 = vadd.f32 %v2223, %v2263
    %v2265 = vpop.f32.mrf.mxu0
    %v2266 = vadd.f32 %v2225, %v2265
    %v2267 = vpop.f32.mrf.mxu0
    %v2268 = vpop.f32.mrf.mxu0
    %2269 = vdwg.mxu0
    %2270 = vmatprep.subr.bf16.mxu0 %v1705
    %2271 = vmatpush1.bf16.msra.mxu0 %v1704
    %2272 = vmatprep.subr.bf16.mxu0 %v1701
    %2273 = vmatpush1.bf16.msra.mxu0 %v1700
    %2274 = vmatprep.subr.bf16.mxu0 %v1697
    %2275 = vmatpush1.bf16.msra.mxu0 %v1696
    %2276 = vmatprep.subr.bf16.mxu0 %v1693
    %2277 = vmatpush1.bf16.msra.mxu0 %v1692
    %2278 = vmatprep.subr.bf16.mxu0 %v1689
    %2279 = vmatpush1.bf16.msra.mxu0 %v1688
    %2280 = vmatprep.subr.bf16.mxu0 %v1685
    %2281 = vmatpush1.bf16.msra.mxu0 %v1684
    %2282 = vmatprep.subr.bf16.mxu0 %v1681
    %2283 = vmatpush1.bf16.msra.mxu0 %v1680
    %2284 = vmatprep.subr.bf16.mxu0 %v1677
    %2285 = vmatpush1.bf16.msra.mxu0 %v1676
    %2286 = vmatprep.subr.bf16.mxu0 %v1737
    %2287 = vmatpush2.bf16.msra.mxu0 %v1736
    %2288 = vmatprep.subr.bf16.mxu0 %v1733
    %2289 = vmatpush2.bf16.msra.mxu0 %v1732
    %2290 = vmatprep.subr.bf16.mxu0 %v1729
    %2291 = vmatpush2.bf16.msra.mxu0 %v1728
    %2292 = vmatprep.subr.bf16.mxu0 %v1725
    %2293 = vmatpush2.bf16.msra.mxu0 %v1724
    %2294 = vmatprep.subr.bf16.mxu0 %v1721
    %2295 = vmatpush2.bf16.msra.mxu0 %v1720
    %2296 = vmatprep.subr.bf16.mxu0 %v1717
    %2297 = vmatpush2.bf16.msra.mxu0 %v1716
    %2298 = vmatprep.subr.bf16.mxu0 %v1713
    %2299 = vmatpush2.bf16.msra.mxu0 %v1712
    %2300 = vmatprep.subr.bf16.mxu0 %v1709
    %2301 = vmatpush2.bf16.msra.mxu0 %v1708
    %2302 = vmatprep.mubr.bf16.mxu0 %v241
    %2303 = vmatmul.mubr.bf16.gmra.mxu0 %v240
    %v2304 = vpop.f32.mrf.mxu0
    %v2305 = vadd.f32 %v2264, %v2304
    %v2306 = vpop.f32.mrf.mxu0
    %v2307 = vadd.f32 %v2266, %v2306
    %v2308 = vpop.f32.mrf.mxu0
    %v2309 = vpop.f32.mrf.mxu0
    %2310 = vdwg.mxu0
    %2311 = vmatprep.subr.bf16.mxu0 %v1769
    %2312 = vmatpush1.bf16.msra.mxu0 %v1768
    %2313 = vmatprep.subr.bf16.mxu0 %v1765
    %2314 = vmatpush1.bf16.msra.mxu0 %v1764
    %2315 = vmatprep.subr.bf16.mxu0 %v1761
    %2316 = vmatpush1.bf16.msra.mxu0 %v1760
    %2317 = vmatprep.subr.bf16.mxu0 %v1757
    %2318 = vmatpush1.bf16.msra.mxu0 %v1756
    %2319 = vmatprep.subr.bf16.mxu0 %v1753
    %2320 = vmatpush1.bf16.msra.mxu0 %v1752
    %2321 = vmatprep.subr.bf16.mxu0 %v1749
    %2322 = vmatpush1.bf16.msra.mxu0 %v1748
    %2323 = vmatprep.subr.bf16.mxu0 %v1745
    %2324 = vmatpush1.bf16.msra.mxu0 %v1744
    %2325 = vmatprep.subr.bf16.mxu0 %v1741
    %2326 = vmatpush1.bf16.msra.mxu0 %v1740
    %2327 = vmatprep.subr.bf16.mxu0 %v1801
    %2328 = vmatpush2.bf16.msra.mxu0 %v1800
    %2329 = vmatprep.subr.bf16.mxu0 %v1797
    %2330 = vmatpush2.bf16.msra.mxu0 %v1796
    %2331 = vmatprep.subr.bf16.mxu0 %v1793
    %2332 = vmatpush2.bf16.msra.mxu0 %v1792
    %2333 = vmatprep.subr.bf16.mxu0 %v1789
    %2334 = vmatpush2.bf16.msra.mxu0 %v1788
    %2335 = vmatprep.subr.bf16.mxu0 %v1785
    %2336 = vmatpush2.bf16.msra.mxu0 %v1784
    %2337 = vmatprep.subr.bf16.mxu0 %v1781
    %2338 = vmatpush2.bf16.msra.mxu0 %v1780
    %2339 = vmatprep.subr.bf16.mxu0 %v1777
    %2340 = vmatpush2.bf16.msra.mxu0 %v1776
    %2341 = vmatprep.subr.bf16.mxu0 %v1773
    %2342 = vmatpush2.bf16.msra.mxu0 %v1772
    %2343 = vmatprep.mubr.bf16.mxu0 %v243
    %2344 = vmatmul.mubr.bf16.gmra.mxu0 %v242
    %v2345 = vpop.f32.mrf.mxu0
    %v2346 = vadd.f32 %v2305, %v2345
    %v2347 = vpop.f32.mrf.mxu0
    %v2348 = vadd.f32 %v2307, %v2347
    %v2349 = vpop.f32.mrf.mxu0
    %v2350 = vpop.f32.mrf.mxu0
    %2351 = vdwg.mxu0
    %2352 = vmatprep.subr.bf16.mxu0 %v1833
    %2353 = vmatpush1.bf16.msra.mxu0 %v1832
    %2354 = vmatprep.subr.bf16.mxu0 %v1829
    %2355 = vmatpush1.bf16.msra.mxu0 %v1828
    %2356 = vmatprep.subr.bf16.mxu0 %v1825
    %2357 = vmatpush1.bf16.msra.mxu0 %v1824
    %2358 = vmatprep.subr.bf16.mxu0 %v1821
    %2359 = vmatpush1.bf16.msra.mxu0 %v1820
    %2360 = vmatprep.subr.bf16.mxu0 %v1817
    %2361 = vmatpush1.bf16.msra.mxu0 %v1816
    %2362 = vmatprep.subr.bf16.mxu0 %v1813
    %2363 = vmatpush1.bf16.msra.mxu0 %v1812
    %2364 = vmatprep.subr.bf16.mxu0 %v1809
    %2365 = vmatpush1.bf16.msra.mxu0 %v1808
    %2366 = vmatprep.subr.bf16.mxu0 %v1805
    %2367 = vmatpush1.bf16.msra.mxu0 %v1804
    %2368 = vmatprep.subr.bf16.mxu0 %v1865
    %2369 = vmatpush2.bf16.msra.mxu0 %v1864
    %2370 = vmatprep.subr.bf16.mxu0 %v1861
    %2371 = vmatpush2.bf16.msra.mxu0 %v1860
    %2372 = vmatprep.subr.bf16.mxu0 %v1857
    %2373 = vmatpush2.bf16.msra.mxu0 %v1856
    %2374 = vmatprep.subr.bf16.mxu0 %v1853
    %2375 = vmatpush2.bf16.msra.mxu0 %v1852
    %2376 = vmatprep.subr.bf16.mxu0 %v1849
    %2377 = vmatpush2.bf16.msra.mxu0 %v1848
    %2378 = vmatprep.subr.bf16.mxu0 %v1845
    %2379 = vmatpush2.bf16.msra.mxu0 %v1844
    %2380 = vmatprep.subr.bf16.mxu0 %v1841
    %2381 = vmatpush2.bf16.msra.mxu0 %v1840
    %2382 = vmatprep.subr.bf16.mxu0 %v1837
    %2383 = vmatpush2.bf16.msra.mxu0 %v1836
    %2384 = vmatprep.mubr.bf16.mxu0 %v245
    %2385 = vmatmul.mubr.bf16.gmra.mxu0 %v244
    %v2386 = vpop.f32.mrf.mxu0
    %v2387 = vadd.f32 %v2346, %v2386
    %v2388 = vpop.f32.mrf.mxu0
    %v2389 = vadd.f32 %v2348, %v2388
    %v2390 = vpop.f32.mrf.mxu0
    %v2391 = vpop.f32.mrf.mxu0
    %2392 = vdwg.mxu0
    %2393 = vmatprep.subr.bf16.mxu0 %v1579
    %2394 = vmatpush1.bf16.msra.mxu0 %v1578
    %2395 = vmatprep.subr.bf16.mxu0 %v1575
    %2396 = vmatpush1.bf16.msra.mxu0 %v1574
    %2397 = vmatprep.subr.bf16.mxu0 %v1571
    %2398 = vmatpush1.bf16.msra.mxu0 %v1570
    %2399 = vmatprep.subr.bf16.mxu0 %v1567
    %2400 = vmatpush1.bf16.msra.mxu0 %v1566
    %2401 = vmatprep.subr.bf16.mxu0 %v1563
    %2402 = vmatpush1.bf16.msra.mxu0 %v1562
    %2403 = vmatprep.subr.bf16.mxu0 %v1559
    %2404 = vmatpush1.bf16.msra.mxu0 %v1558
    %2405 = vmatprep.subr.bf16.mxu0 %v1555
    %2406 = vmatpush1.bf16.msra.mxu0 %v1554
    %2407 = vmatprep.subr.bf16.mxu0 %v1551
    %2408 = vmatpush1.bf16.msra.mxu0 %v1550
    %2409 = vmatprep.subr.bf16.mxu0 %v1611
    %2410 = vmatpush2.bf16.msra.mxu0 %v1610
    %2411 = vmatprep.subr.bf16.mxu0 %v1607
    %2412 = vmatpush2.bf16.msra.mxu0 %v1606
    %2413 = vmatprep.subr.bf16.mxu0 %v1603
    %2414 = vmatpush2.bf16.msra.mxu0 %v1602
    %2415 = vmatprep.subr.bf16.mxu0 %v1599
    %2416 = vmatpush2.bf16.msra.mxu0 %v1598
    %2417 = vmatprep.subr.bf16.mxu0 %v1595
    %2418 = vmatpush2.bf16.msra.mxu0 %v1594
    %2419 = vmatprep.subr.bf16.mxu0 %v1591
    %2420 = vmatpush2.bf16.msra.mxu0 %v1590
    %2421 = vmatprep.subr.bf16.mxu0 %v1587
    %2422 = vmatpush2.bf16.msra.mxu0 %v1586
    %2423 = vmatprep.subr.bf16.mxu0 %v1583
    %2424 = vmatpush2.bf16.msra.mxu0 %v1582
    %2425 = vmatprep.mubr.bf16.mxu0 %v237
    %2426 = vmatmul.mubr.bf16.gmra.mxu0 %v236
    %v2427 = vpop.f32.mrf.mxu0
    %v2428 = vadd.f32 %v579, %v2427
    %v2429 = vpop.f32.mrf.mxu0
    %v2430 = vadd.f32 %v583, %v2429
    %v2431 = vpop.f32.mrf.mxu0
    %v2432 = vpop.f32.mrf.mxu0
    %2433 = vdwg.mxu0
    %2434 = vmatprep.subr.bf16.mxu0 %v1643
    %2435 = vmatpush1.bf16.msra.mxu0 %v1642
    %2436 = vmatprep.subr.bf16.mxu0 %v1639
    %2437 = vmatpush1.bf16.msra.mxu0 %v1638
    %2438 = vmatprep.subr.bf16.mxu0 %v1635
    %2439 = vmatpush1.bf16.msra.mxu0 %v1634
    %2440 = vmatprep.subr.bf16.mxu0 %v1631
    %2441 = vmatpush1.bf16.msra.mxu0 %v1630
    %2442 = vmatprep.subr.bf16.mxu0 %v1627
    %2443 = vmatpush1.bf16.msra.mxu0 %v1626
    %2444 = vmatprep.subr.bf16.mxu0 %v1623
    %2445 = vmatpush1.bf16.msra.mxu0 %v1622
    %2446 = vmatprep.subr.bf16.mxu0 %v1619
    %2447 = vmatpush1.bf16.msra.mxu0 %v1618
    %2448 = vmatprep.subr.bf16.mxu0 %v1615
    %2449 = vmatpush1.bf16.msra.mxu0 %v1614
    %2450 = vmatprep.subr.bf16.mxu0 %v1675
    %2451 = vmatpush2.bf16.msra.mxu0 %v1674
    %2452 = vmatprep.subr.bf16.mxu0 %v1671
    %2453 = vmatpush2.bf16.msra.mxu0 %v1670
    %2454 = vmatprep.subr.bf16.mxu0 %v1667
    %2455 = vmatpush2.bf16.msra.mxu0 %v1666
    %2456 = vmatprep.subr.bf16.mxu0 %v1663
    %2457 = vmatpush2.bf16.msra.mxu0 %v1662
    %2458 = vmatprep.subr.bf16.mxu0 %v1659
    %2459 = vmatpush2.bf16.msra.mxu0 %v1658
    %2460 = vmatprep.subr.bf16.mxu0 %v1655
    %2461 = vmatpush2.bf16.msra.mxu0 %v1654
    %2462 = vmatprep.subr.bf16.mxu0 %v1651
    %2463 = vmatpush2.bf16.msra.mxu0 %v1650
    %2464 = vmatprep.subr.bf16.mxu0 %v1647
    %2465 = vmatpush2.bf16.msra.mxu0 %v1646
    %2466 = vmatprep.mubr.bf16.mxu0 %v239
    %2467 = vmatmul.mubr.bf16.gmra.mxu0 %v238
    %v2468 = vpop.f32.mrf.mxu0
    %v2469 = vadd.f32 %v2428, %v2468
    %v2470 = vpop.f32.mrf.mxu0
    %v2471 = vadd.f32 %v2430, %v2470
    %v2472 = vpop.f32.mrf.mxu0
    %v2473 = vpop.f32.mrf.mxu0
    %2474 = vdwg.mxu0
    %2475 = vmatprep.subr.bf16.mxu0 %v1707
    %2476 = vmatpush1.bf16.msra.mxu0 %v1706
    %2477 = vmatprep.subr.bf16.mxu0 %v1703
    %2478 = vmatpush1.bf16.msra.mxu0 %v1702
    %2479 = vmatprep.subr.bf16.mxu0 %v1699
    %2480 = vmatpush1.bf16.msra.mxu0 %v1698
    %2481 = vmatprep.subr.bf16.mxu0 %v1695
    %2482 = vmatpush1.bf16.msra.mxu0 %v1694
    %2483 = vmatprep.subr.bf16.mxu0 %v1691
    %2484 = vmatpush1.bf16.msra.mxu0 %v1690
    %2485 = vmatprep.subr.bf16.mxu0 %v1687
    %2486 = vmatpush1.bf16.msra.mxu0 %v1686
    %2487 = vmatprep.subr.bf16.mxu0 %v1683
    %2488 = vmatpush1.bf16.msra.mxu0 %v1682
    %2489 = vmatprep.subr.bf16.mxu0 %v1679
    %2490 = vmatpush1.bf16.msra.mxu0 %v1678
    %2491 = vmatprep.subr.bf16.mxu0 %v1739
    %2492 = vmatpush2.bf16.msra.mxu0 %v1738
    %2493 = vmatprep.subr.bf16.mxu0 %v1735
    %2494 = vmatpush2.bf16.msra.mxu0 %v1734
    %2495 = vmatprep.subr.bf16.mxu0 %v1731
    %2496 = vmatpush2.bf16.msra.mxu0 %v1730
    %2497 = vmatprep.subr.bf16.mxu0 %v1727
    %2498 = vmatpush2.bf16.msra.mxu0 %v1726
    %2499 = vmatprep.subr.bf16.mxu0 %v1723
    %2500 = vmatpush2.bf16.msra.mxu0 %v1722
    %2501 = vmatprep.subr.bf16.mxu0 %v1719
    %2502 = vmatpush2.bf16.msra.mxu0 %v1718
    %2503 = vmatprep.subr.bf16.mxu0 %v1715
    %2504 = vmatpush2.bf16.msra.mxu0 %v1714
    %2505 = vmatprep.subr.bf16.mxu0 %v1711
    %2506 = vmatpush2.bf16.msra.mxu0 %v1710
    %2507 = vmatprep.mubr.bf16.mxu0 %v241
    %2508 = vmatmul.mubr.bf16.gmra.mxu0 %v240
    %v2509 = vpop.f32.mrf.mxu0
    %v2510 = vadd.f32 %v2469, %v2509
    %v2511 = vpop.f32.mrf.mxu0
    %v2512 = vadd.f32 %v2471, %v2511
    %v2513 = vpop.f32.mrf.mxu0
    %v2514 = vpop.f32.mrf.mxu0
    %2515 = vdwg.mxu0
    %2516 = vmatprep.subr.bf16.mxu0 %v1771
    %2517 = vmatpush1.bf16.msra.mxu0 %v1770
    %2518 = vmatprep.subr.bf16.mxu0 %v1767
    %2519 = vmatpush1.bf16.msra.mxu0 %v1766
    %2520 = vmatprep.subr.bf16.mxu0 %v1763
    %2521 = vmatpush1.bf16.msra.mxu0 %v1762
    %2522 = vmatprep.subr.bf16.mxu0 %v1759
    %2523 = vmatpush1.bf16.msra.mxu0 %v1758
    %2524 = vmatprep.subr.bf16.mxu0 %v1755
    %2525 = vmatpush1.bf16.msra.mxu0 %v1754
    %2526 = vmatprep.subr.bf16.mxu0 %v1751
    %2527 = vmatpush1.bf16.msra.mxu0 %v1750
    %2528 = vmatprep.subr.bf16.mxu0 %v1747
    %2529 = vmatpush1.bf16.msra.mxu0 %v1746
    %2530 = vmatprep.subr.bf16.mxu0 %v1743
    %2531 = vmatpush1.bf16.msra.mxu0 %v1742
    %2532 = vmatprep.subr.bf16.mxu0 %v1803
    %2533 = vmatpush2.bf16.msra.mxu0 %v1802
    %2534 = vmatprep.subr.bf16.mxu0 %v1799
    %2535 = vmatpush2.bf16.msra.mxu0 %v1798
    %2536 = vmatprep.subr.bf16.mxu0 %v1795
    %2537 = vmatpush2.bf16.msra.mxu0 %v1794
    %2538 = vmatprep.subr.bf16.mxu0 %v1791
    %2539 = vmatpush2.bf16.msra.mxu0 %v1790
    %2540 = vmatprep.subr.bf16.mxu0 %v1787
    %2541 = vmatpush2.bf16.msra.mxu0 %v1786
    %2542 = vmatprep.subr.bf16.mxu0 %v1783
    %2543 = vmatpush2.bf16.msra.mxu0 %v1782
    %2544 = vmatprep.subr.bf16.mxu0 %v1779
    %2545 = vmatpush2.bf16.msra.mxu0 %v1778
    %2546 = vmatprep.subr.bf16.mxu0 %v1775
    %2547 = vmatpush2.bf16.msra.mxu0 %v1774
    %2548 = vmatprep.mubr.bf16.mxu0 %v243
    %2549 = vmatmul.mubr.bf16.gmra.mxu0 %v242
    %v2550 = vpop.f32.mrf.mxu0
    %v2551 = vadd.f32 %v2510, %v2550
    %v2552 = vpop.f32.mrf.mxu0
    %v2553 = vadd.f32 %v2512, %v2552
    %v2554 = vpop.f32.mrf.mxu0
    %v2555 = vpop.f32.mrf.mxu0
    %2556 = vdwg.mxu0
    %2557 = vmatprep.subr.bf16.mxu0 %v1835
    %2558 = vmatpush1.bf16.msra.mxu0 %v1834
    %2559 = vmatprep.subr.bf16.mxu0 %v1831
    %2560 = vmatpush1.bf16.msra.mxu0 %v1830
    %2561 = vmatprep.subr.bf16.mxu0 %v1827
    %2562 = vmatpush1.bf16.msra.mxu0 %v1826
    %2563 = vmatprep.subr.bf16.mxu0 %v1823
    %2564 = vmatpush1.bf16.msra.mxu0 %v1822
    %2565 = vmatprep.subr.bf16.mxu0 %v1819
    %2566 = vmatpush1.bf16.msra.mxu0 %v1818
    %2567 = vmatprep.subr.bf16.mxu0 %v1815
    %2568 = vmatpush1.bf16.msra.mxu0 %v1814
    %2569 = vmatprep.subr.bf16.mxu0 %v1811
    %2570 = vmatpush1.bf16.msra.mxu0 %v1810
    %2571 = vmatprep.subr.bf16.mxu0 %v1807
    %2572 = vmatpush1.bf16.msra.mxu0 %v1806
    %2573 = vmatprep.subr.bf16.mxu0 %v1867
    %2574 = vmatpush2.bf16.msra.mxu0 %v1866
    %2575 = vmatprep.subr.bf16.mxu0 %v1863
    %2576 = vmatpush2.bf16.msra.mxu0 %v1862
    %2577 = vmatprep.subr.bf16.mxu0 %v1859
    %2578 = vmatpush2.bf16.msra.mxu0 %v1858
    %2579 = vmatprep.subr.bf16.mxu0 %v1855
    %2580 = vmatpush2.bf16.msra.mxu0 %v1854
    %2581 = vmatprep.subr.bf16.mxu0 %v1851
    %2582 = vmatpush2.bf16.msra.mxu0 %v1850
    %2583 = vmatprep.subr.bf16.mxu0 %v1847
    %2584 = vmatpush2.bf16.msra.mxu0 %v1846
    %2585 = vmatprep.subr.bf16.mxu0 %v1843
    %2586 = vmatpush2.bf16.msra.mxu0 %v1842
    %2587 = vmatprep.subr.bf16.mxu0 %v1839
    %2588 = vmatpush2.bf16.msra.mxu0 %v1838
    %2589 = vmatprep.mubr.bf16.mxu0 %v245
    %2590 = vmatmul.mubr.bf16.gmra.mxu0 %v244
    %v2591 = vpop.f32.mrf.mxu0
    %v2592 = vadd.f32 %v2551, %v2591
    %v2593 = vpop.f32.mrf.mxu0
    %v2594 = vadd.f32 %v2553, %v2593
    %v2595 = vpop.f32.mrf.mxu0
    %v2596 = vpop.f32.mrf.mxu0
    %2597 = vdwg.mxu0
    %v2598 = vmax.f32 %v2387, 0.0
    %v2599 = vmax.f32 %v2389, 0.0
    %v2600 = vmax.f32 %v2592, 0.0
    %v2601 = vmax.f32 %v2594, 0.0
    %v2602 = vpack.c.bf16 %v2598, %v2598
    %v2603 = vpack.c.bf16 %v2599, %v2599
    %v2604 = vpack.c.bf16 %v2600, %v2600
    %v2605 = vpack.c.bf16 %v2601, %v2601
    %v2606 = vld [vmem:[#allocation10] sm:$0xff]
    %v2607 = vld [vmem:[#allocation10 + $0x8] sm:$0xff]
    %v2608 = vld [vmem:[#allocation10 + $0x10] sm:$0xff]
    %v2609 = vld [vmem:[#allocation10 + $0x18] sm:$0xff]
    %v2610 = vld [vmem:[#allocation10 + $0x20] sm:$0xff]
    %v2611 = vld [vmem:[#allocation10 + $0x28] sm:$0xff]
    %v2612 = vld [vmem:[#allocation10 + $0x30] sm:$0xff]
    %v2613 = vld [vmem:[#allocation10 + $0x38] sm:$0xff]
    %v2614 = vld [vmem:[#allocation10 + $0x40] sm:$0xff]
    %v2615 = vld [vmem:[#allocation10 + $0x48] sm:$0xff]
    %v2616 = vld [vmem:[#allocation10 + $0x50] sm:$0xff]
    %v2617 = vld [vmem:[#allocation10 + $0x58] sm:$0xff]
    %v2618 = vld [vmem:[#allocation10 + $0x60] sm:$0xff]
    %v2619 = vld [vmem:[#allocation10 + $0x68] sm:$0xff]
    %v2620 = vld [vmem:[#allocation10 + $0x70] sm:$0xff]
    %v2621 = vld [vmem:[#allocation10 + $0x78] sm:$0xff]
    %v2622 = vld [vmem:[#allocation10 + $0x80] sm:$0xff]
    %v2623 = vld [vmem:[#allocation10 + $0x88] sm:$0xff]
    %v2624 = vld [vmem:[#allocation10 + $0x90] sm:$0xff]
    %v2625 = vld [vmem:[#allocation10 + $0x98] sm:$0xff]
    %v2626 = vld [vmem:[#allocation10 + $0xa0] sm:$0xff]
    %v2627 = vld [vmem:[#allocation10 + $0xa8] sm:$0xff]
    %v2628 = vld [vmem:[#allocation10 + $0xb0] sm:$0xff]
    %v2629 = vld [vmem:[#allocation10 + $0xb8] sm:$0xff]
    %v2630 = vld [vmem:[#allocation10 + $0xc0] sm:$0xff]
    %v2631 = vld [vmem:[#allocation10 + $0xc8] sm:$0xff]
    %v2632 = vld [vmem:[#allocation10 + $0xd0] sm:$0xff]
    %v2633 = vld [vmem:[#allocation10 + $0xd8] sm:$0xff]
    %v2634 = vld [vmem:[#allocation10 + $0xe0] sm:$0xff]
    %v2635 = vld [vmem:[#allocation10 + $0xe8] sm:$0xff]
    %v2636 = vld [vmem:[#allocation10 + $0xf0] sm:$0xff]
    %v2637 = vld [vmem:[#allocation10 + $0xf8] sm:$0xff]
    %v2638 = vld [vmem:[#allocation10 + $0x100] sm:$0xff]
    %v2639 = vld [vmem:[#allocation10 + $0x108] sm:$0xff]
    %v2640 = vld [vmem:[#allocation10 + $0x110] sm:$0xff]
    %v2641 = vld [vmem:[#allocation10 + $0x118] sm:$0xff]
    %v2642 = vld [vmem:[#allocation10 + $0x120] sm:$0xff]
    %v2643 = vld [vmem:[#allocation10 + $0x128] sm:$0xff]
    %v2644 = vld [vmem:[#allocation10 + $0x130] sm:$0xff]
    %v2645 = vld [vmem:[#allocation10 + $0x138] sm:$0xff]
    %v2646 = vld [vmem:[#allocation10 + $0x140] sm:$0xff]
    %v2647 = vld [vmem:[#allocation10 + $0x148] sm:$0xff]
    %v2648 = vld [vmem:[#allocation10 + $0x150] sm:$0xff]
    %v2649 = vld [vmem:[#allocation10 + $0x158] sm:$0xff]
    %v2650 = vld [vmem:[#allocation10 + $0x160] sm:$0xff]
    %v2651 = vld [vmem:[#allocation10 + $0x168] sm:$0xff]
    %v2652 = vld [vmem:[#allocation10 + $0x170] sm:$0xff]
    %v2653 = vld [vmem:[#allocation10 + $0x178] sm:$0xff]
    %v2654 = vld [vmem:[#allocation10 + $0x180] sm:$0xff]
    %v2655 = vld [vmem:[#allocation10 + $0x188] sm:$0xff]
    %v2656 = vld [vmem:[#allocation10 + $0x190] sm:$0xff]
    %v2657 = vld [vmem:[#allocation10 + $0x198] sm:$0xff]
    %v2658 = vld [vmem:[#allocation10 + $0x1a0] sm:$0xff]
    %v2659 = vld [vmem:[#allocation10 + $0x1a8] sm:$0xff]
    %v2660 = vld [vmem:[#allocation10 + $0x1b0] sm:$0xff]
    %v2661 = vld [vmem:[#allocation10 + $0x1b8] sm:$0xff]
    %v2662 = vld [vmem:[#allocation10 + $0x1c0] sm:$0xff]
    %v2663 = vld [vmem:[#allocation10 + $0x1c8] sm:$0xff]
    %v2664 = vld [vmem:[#allocation10 + $0x1d0] sm:$0xff]
    %v2665 = vld [vmem:[#allocation10 + $0x1d8] sm:$0xff]
    %v2666 = vld [vmem:[#allocation10 + $0x1e0] sm:$0xff]
    %v2667 = vld [vmem:[#allocation10 + $0x1e8] sm:$0xff]
    %v2668 = vld [vmem:[#allocation10 + $0x1f0] sm:$0xff]
    %v2669 = vld [vmem:[#allocation10 + $0x1f8] sm:$0xff]
    %v2670 = vld [vmem:[#allocation11] sm:$0x3]
    %v2672 = vlaneseq
    %v2673 = vshrl.u32 %v2672, 7
    %v2674 = vsub.s32 0, %v2673
    %v2675 = vrot.slane %v2670, %v2674
    %v2676 = vlaneseq
    %v2677 = vshrl.u32 %v2676, 7
    %v2678 = vsub.s32 1, %v2677
    %v2679 = vrot.slane %v2670, %v2678
    %v2746 = vunpack.c.l.b16 %v2606
    %v2747 = vunpack.c.h.b16 %v2606
    %v2748 = vunpack.c.l.b16 %v2607
    %v2749 = vunpack.c.h.b16 %v2607
    %v2750 = vunpack.c.l.b16 %v2608
    %v2751 = vunpack.c.h.b16 %v2608
    %v2752 = vunpack.c.l.b16 %v2609
    %v2753 = vunpack.c.h.b16 %v2609
    %v2754 = vunpack.c.l.b16 %v2610
    %v2755 = vunpack.c.h.b16 %v2610
    %v2756 = vunpack.c.l.b16 %v2611
    %v2757 = vunpack.c.h.b16 %v2611
    %v2758 = vunpack.c.l.b16 %v2612
    %v2759 = vunpack.c.h.b16 %v2612
    %v2760 = vunpack.c.l.b16 %v2613
    %v2761 = vunpack.c.h.b16 %v2613
    %v2762 = vunpack.c.l.b16 %v2614
    %v2763 = vunpack.c.h.b16 %v2614
    %v2764 = vunpack.c.l.b16 %v2615
    %v2765 = vunpack.c.h.b16 %v2615
    %v2766 = vunpack.c.l.b16 %v2616
    %v2767 = vunpack.c.h.b16 %v2616
    %v2768 = vunpack.c.l.b16 %v2617
    %v2769 = vunpack.c.h.b16 %v2617
    %v2770 = vunpack.c.l.b16 %v2618
    %v2771 = vunpack.c.h.b16 %v2618
    %v2772 = vunpack.c.l.b16 %v2619
    %v2773 = vunpack.c.h.b16 %v2619
    %v2774 = vunpack.c.l.b16 %v2620
    %v2775 = vunpack.c.h.b16 %v2620
    %v2776 = vunpack.c.l.b16 %v2621
    %v2777 = vunpack.c.h.b16 %v2621
    %v2778 = vunpack.c.l.b16 %v2622
    %v2779 = vunpack.c.h.b16 %v2622
    %v2780 = vunpack.c.l.b16 %v2623
    %v2781 = vunpack.c.h.b16 %v2623
    %v2782 = vunpack.c.l.b16 %v2624
    %v2783 = vunpack.c.h.b16 %v2624
    %v2784 = vunpack.c.l.b16 %v2625
    %v2785 = vunpack.c.h.b16 %v2625
    %v2786 = vunpack.c.l.b16 %v2626
    %v2787 = vunpack.c.h.b16 %v2626
    %v2788 = vunpack.c.l.b16 %v2627
    %v2789 = vunpack.c.h.b16 %v2627
    %v2790 = vunpack.c.l.b16 %v2628
    %v2791 = vunpack.c.h.b16 %v2628
    %v2792 = vunpack.c.l.b16 %v2629
    %v2793 = vunpack.c.h.b16 %v2629
    %v2794 = vunpack.c.l.b16 %v2630
    %v2795 = vunpack.c.h.b16 %v2630
    %v2796 = vunpack.c.l.b16 %v2631
    %v2797 = vunpack.c.h.b16 %v2631
    %v2798 = vunpack.c.l.b16 %v2632
    %v2799 = vunpack.c.h.b16 %v2632
    %v2800 = vunpack.c.l.b16 %v2633
    %v2801 = vunpack.c.h.b16 %v2633
    %v2802 = vunpack.c.l.b16 %v2634
    %v2803 = vunpack.c.h.b16 %v2634
    %v2804 = vunpack.c.l.b16 %v2635
    %v2805 = vunpack.c.h.b16 %v2635
    %v2806 = vunpack.c.l.b16 %v2636
    %v2807 = vunpack.c.h.b16 %v2636
    %v2808 = vunpack.c.l.b16 %v2637
    %v2809 = vunpack.c.h.b16 %v2637
    %v2810 = vunpack.c.l.b16 %v2638
    %v2811 = vunpack.c.h.b16 %v2638
    %v2812 = vunpack.c.l.b16 %v2639
    %v2813 = vunpack.c.h.b16 %v2639
    %v2814 = vunpack.c.l.b16 %v2640
    %v2815 = vunpack.c.h.b16 %v2640
    %v2816 = vunpack.c.l.b16 %v2641
    %v2817 = vunpack.c.h.b16 %v2641
    %v2818 = vunpack.c.l.b16 %v2642
    %v2819 = vunpack.c.h.b16 %v2642
    %v2820 = vunpack.c.l.b16 %v2643
    %v2821 = vunpack.c.h.b16 %v2643
    %v2822 = vunpack.c.l.b16 %v2644
    %v2823 = vunpack.c.h.b16 %v2644
    %v2824 = vunpack.c.l.b16 %v2645
    %v2825 = vunpack.c.h.b16 %v2645
    %v2826 = vunpack.c.l.b16 %v2646
    %v2827 = vunpack.c.h.b16 %v2646
    %v2828 = vunpack.c.l.b16 %v2647
    %v2829 = vunpack.c.h.b16 %v2647
    %v2830 = vunpack.c.l.b16 %v2648
    %v2831 = vunpack.c.h.b16 %v2648
    %v2832 = vunpack.c.l.b16 %v2649
    %v2833 = vunpack.c.h.b16 %v2649
    %v2834 = vunpack.c.l.b16 %v2650
    %v2835 = vunpack.c.h.b16 %v2650
    %v2836 = vunpack.c.l.b16 %v2651
    %v2837 = vunpack.c.h.b16 %v2651
    %v2838 = vunpack.c.l.b16 %v2652
    %v2839 = vunpack.c.h.b16 %v2652
    %v2840 = vunpack.c.l.b16 %v2653
    %v2841 = vunpack.c.h.b16 %v2653
    %v2842 = vunpack.c.l.b16 %v2654
    %v2843 = vunpack.c.h.b16 %v2654
    %v2844 = vunpack.c.l.b16 %v2655
    %v2845 = vunpack.c.h.b16 %v2655
    %v2846 = vunpack.c.l.b16 %v2656
    %v2847 = vunpack.c.h.b16 %v2656
    %v2848 = vunpack.c.l.b16 %v2657
    %v2849 = vunpack.c.h.b16 %v2657
    %v2850 = vunpack.c.l.b16 %v2658
    %v2851 = vunpack.c.h.b16 %v2658
    %v2852 = vunpack.c.l.b16 %v2659
    %v2853 = vunpack.c.h.b16 %v2659
    %v2854 = vunpack.c.l.b16 %v2660
    %v2855 = vunpack.c.h.b16 %v2660
    %v2856 = vunpack.c.l.b16 %v2661
    %v2857 = vunpack.c.h.b16 %v2661
    %v2858 = vunpack.c.l.b16 %v2662
    %v2859 = vunpack.c.h.b16 %v2662
    %v2860 = vunpack.c.l.b16 %v2663
    %v2861 = vunpack.c.h.b16 %v2663
    %v2862 = vunpack.c.l.b16 %v2664
    %v2863 = vunpack.c.h.b16 %v2664
    %v2864 = vunpack.c.l.b16 %v2665
    %v2865 = vunpack.c.h.b16 %v2665
    %v2866 = vunpack.c.l.b16 %v2666
    %v2867 = vunpack.c.h.b16 %v2666
    %v2868 = vunpack.c.l.b16 %v2667
    %v2869 = vunpack.c.h.b16 %v2667
    %v2870 = vunpack.c.l.b16 %v2668
    %v2871 = vunpack.c.h.b16 %v2668
    %v2872 = vunpack.c.l.b16 %v2669
    %v2873 = vunpack.c.h.b16 %v2669
    %v2874 = vpack.c.b16 %v2748, %v2746
    %v2875 = vpack.c.b16 %v2749, %v2747
    %v2876 = vpack.c.b16 %v2752, %v2750
    %v2877 = vpack.c.b16 %v2753, %v2751
    %v2878 = vpack.c.b16 %v2756, %v2754
    %v2879 = vpack.c.b16 %v2757, %v2755
    %v2880 = vpack.c.b16 %v2760, %v2758
    %v2881 = vpack.c.b16 %v2761, %v2759
    %v2882 = vpack.c.b16 %v2764, %v2762
    %v2883 = vpack.c.b16 %v2765, %v2763
    %v2884 = vpack.c.b16 %v2768, %v2766
    %v2885 = vpack.c.b16 %v2769, %v2767
    %v2886 = vpack.c.b16 %v2772, %v2770
    %v2887 = vpack.c.b16 %v2773, %v2771
    %v2888 = vpack.c.b16 %v2776, %v2774
    %v2889 = vpack.c.b16 %v2777, %v2775
    %v2890 = vpack.c.b16 %v2780, %v2778
    %v2891 = vpack.c.b16 %v2781, %v2779
    %v2892 = vpack.c.b16 %v2784, %v2782
    %v2893 = vpack.c.b16 %v2785, %v2783
    %v2894 = vpack.c.b16 %v2788, %v2786
    %v2895 = vpack.c.b16 %v2789, %v2787
    %v2896 = vpack.c.b16 %v2792, %v2790
    %v2897 = vpack.c.b16 %v2793, %v2791
    %v2898 = vpack.c.b16 %v2796, %v2794
    %v2899 = vpack.c.b16 %v2797, %v2795
    %v2900 = vpack.c.b16 %v2800, %v2798
    %v2901 = vpack.c.b16 %v2801, %v2799
    %v2902 = vpack.c.b16 %v2804, %v2802
    %v2903 = vpack.c.b16 %v2805, %v2803
    %v2904 = vpack.c.b16 %v2808, %v2806
    %v2905 = vpack.c.b16 %v2809, %v2807
    %v2906 = vpack.c.b16 %v2812, %v2810
    %v2907 = vpack.c.b16 %v2813, %v2811
    %v2908 = vpack.c.b16 %v2816, %v2814
    %v2909 = vpack.c.b16 %v2817, %v2815
    %v2910 = vpack.c.b16 %v2820, %v2818
    %v2911 = vpack.c.b16 %v2821, %v2819
    %v2912 = vpack.c.b16 %v2824, %v2822
    %v2913 = vpack.c.b16 %v2825, %v2823
    %v2914 = vpack.c.b16 %v2828, %v2826
    %v2915 = vpack.c.b16 %v2829, %v2827
    %v2916 = vpack.c.b16 %v2832, %v2830
    %v2917 = vpack.c.b16 %v2833, %v2831
    %v2918 = vpack.c.b16 %v2836, %v2834
    %v2919 = vpack.c.b16 %v2837, %v2835
    %v2920 = vpack.c.b16 %v2840, %v2838
    %v2921 = vpack.c.b16 %v2841, %v2839
    %v2922 = vpack.c.b16 %v2844, %v2842
    %v2923 = vpack.c.b16 %v2845, %v2843
    %v2924 = vpack.c.b16 %v2848, %v2846
    %v2925 = vpack.c.b16 %v2849, %v2847
    %v2926 = vpack.c.b16 %v2852, %v2850
    %v2927 = vpack.c.b16 %v2853, %v2851
    %v2928 = vpack.c.b16 %v2856, %v2854
    %v2929 = vpack.c.b16 %v2857, %v2855
    %v2930 = vpack.c.b16 %v2860, %v2858
    %v2931 = vpack.c.b16 %v2861, %v2859
    %v2932 = vpack.c.b16 %v2864, %v2862
    %v2933 = vpack.c.b16 %v2865, %v2863
    %v2934 = vpack.c.b16 %v2868, %v2866
    %v2935 = vpack.c.b16 %v2869, %v2867
    %v2936 = vpack.c.b16 %v2872, %v2870
    %v2937 = vpack.c.b16 %v2873, %v2871
    %3002 = vmatprep.subr.bf16.mxu0 %v2889
    %3003 = vmatpush1.bf16.msra.mxu0 %v2888
    %3004 = vmatprep.subr.bf16.mxu0 %v2887
    %3005 = vmatpush1.bf16.msra.mxu0 %v2886
    %3006 = vmatprep.subr.bf16.mxu0 %v2885
    %3007 = vmatpush1.bf16.msra.mxu0 %v2884
    %3008 = vmatprep.subr.bf16.mxu0 %v2883
    %3009 = vmatpush1.bf16.msra.mxu0 %v2882
    %3010 = vmatprep.subr.bf16.mxu0 %v2881
    %3011 = vmatpush1.bf16.msra.mxu0 %v2880
    %3012 = vmatprep.subr.bf16.mxu0 %v2879
    %3013 = vmatpush1.bf16.msra.mxu0 %v2878
    %3014 = vmatprep.subr.bf16.mxu0 %v2877
    %3015 = vmatpush1.bf16.msra.mxu0 %v2876
    %3016 = vmatprep.subr.bf16.mxu0 %v2875
    %3017 = vmatpush1.bf16.msra.mxu0 %v2874
    %3018 = vmatprep.subr.bf16.mxu0 %v2905
    %3019 = vmatpush2.bf16.msra.mxu0 %v2904
    %3020 = vmatprep.subr.bf16.mxu0 %v2903
    %3021 = vmatpush2.bf16.msra.mxu0 %v2902
    %3022 = vmatprep.subr.bf16.mxu0 %v2901
    %3023 = vmatpush2.bf16.msra.mxu0 %v2900
    %3024 = vmatprep.subr.bf16.mxu0 %v2899
    %3025 = vmatpush2.bf16.msra.mxu0 %v2898
    %3026 = vmatprep.subr.bf16.mxu0 %v2897
    %3027 = vmatpush2.bf16.msra.mxu0 %v2896
    %3028 = vmatprep.subr.bf16.mxu0 %v2895
    %3029 = vmatpush2.bf16.msra.mxu0 %v2894
    %3030 = vmatprep.subr.bf16.mxu0 %v2893
    %3031 = vmatpush2.bf16.msra.mxu0 %v2892
    %3032 = vmatprep.subr.bf16.mxu0 %v2891
    %3033 = vmatpush2.bf16.msra.mxu0 %v2890
    %3034 = vmatprep.mubr.bf16.mxu0 %v2603
    %3035 = vmatmul.mubr.bf16.gmra.mxu0 %v2602
    %v3036 = vpop.f32.mrf.mxu0
    %v3037 = vadd.f32 %v2675, %v3036
    %v3038 = vpop.f32.mrf.mxu0
    %v3039 = vadd.f32 %v2679, %v3038
    %v3040 = vpop.f32.mrf.mxu0
    %v3041 = vpop.f32.mrf.mxu0
    %3042 = vdwg.mxu0
    %3043 = vmatprep.subr.bf16.mxu0 %v2921
    %3044 = vmatpush1.bf16.msra.mxu0 %v2920
    %3045 = vmatprep.subr.bf16.mxu0 %v2919
    %3046 = vmatpush1.bf16.msra.mxu0 %v2918
    %3047 = vmatprep.subr.bf16.mxu0 %v2917
    %3048 = vmatpush1.bf16.msra.mxu0 %v2916
    %3049 = vmatprep.subr.bf16.mxu0 %v2915
    %3050 = vmatpush1.bf16.msra.mxu0 %v2914
    %3051 = vmatprep.subr.bf16.mxu0 %v2913
    %3052 = vmatpush1.bf16.msra.mxu0 %v2912
    %3053 = vmatprep.subr.bf16.mxu0 %v2911
    %3054 = vmatpush1.bf16.msra.mxu0 %v2910
    %3055 = vmatprep.subr.bf16.mxu0 %v2909
    %3056 = vmatpush1.bf16.msra.mxu0 %v2908
    %3057 = vmatprep.subr.bf16.mxu0 %v2907
    %3058 = vmatpush1.bf16.msra.mxu0 %v2906
    %3059 = vmatprep.subr.bf16.mxu0 %v2937
    %3060 = vmatpush2.bf16.msra.mxu0 %v2936
    %3061 = vmatprep.subr.bf16.mxu0 %v2935
    %3062 = vmatpush2.bf16.msra.mxu0 %v2934
    %3063 = vmatprep.subr.bf16.mxu0 %v2933
    %3064 = vmatpush2.bf16.msra.mxu0 %v2932
    %3065 = vmatprep.subr.bf16.mxu0 %v2931
    %3066 = vmatpush2.bf16.msra.mxu0 %v2930
    %3067 = vmatprep.subr.bf16.mxu0 %v2929
    %3068 = vmatpush2.bf16.msra.mxu0 %v2928
    %3069 = vmatprep.subr.bf16.mxu0 %v2927
    %3070 = vmatpush2.bf16.msra.mxu0 %v2926
    %3071 = vmatprep.subr.bf16.mxu0 %v2925
    %3072 = vmatpush2.bf16.msra.mxu0 %v2924
    %3073 = vmatprep.subr.bf16.mxu0 %v2923
    %3074 = vmatpush2.bf16.msra.mxu0 %v2922
    %3075 = vmatprep.mubr.bf16.mxu0 %v2605
    %3076 = vmatmul.mubr.bf16.gmra.mxu0 %v2604
    %v3077 = vpop.f32.mrf.mxu0
    %v3078 = vadd.f32 %v3037, %v3077
    %v3079 = vpop.f32.mrf.mxu0
    %v3080 = vadd.f32 %v3039, %v3079
    %v3081 = vpop.f32.mrf.mxu0
    %v3082 = vpop.f32.mrf.mxu0
    %3083 = vdwg.mxu0
    %v3084 = vmax.f32 %v3078, 0.0
    %v3085 = vmax.f32 %v3080, 0.0
    %v3086 = vpack.c.bf16 %v3084, %v3084
    %v3087 = vpack.c.bf16 %v3085, %v3085
    %v3088 = vld [vmem:[#allocation13] sm:$0xff]
    %v3089 = vld [vmem:[#allocation13 + $0x8] sm:$0xff]
    %v3090 = vld [vmem:[#allocation13 + $0x10] sm:$0xff]
    %v3091 = vld [vmem:[#allocation13 + $0x18] sm:$0xff]
    %v3092 = vld [vmem:[#allocation13 + $0x20] sm:$0xff]
    %v3093 = vld [vmem:[#allocation13 + $0x28] sm:$0xff]
    %v3094 = vld [vmem:[#allocation13 + $0x30] sm:$0xff]
    %v3095 = vld [vmem:[#allocation13 + $0x38] sm:$0xff]
    %v3096 = vld [vmem:[#allocation13 + $0x40] sm:$0xff]
    %v3097 = vld [vmem:[#allocation13 + $0x48] sm:$0xff]
    %v3098 = vld [vmem:[#allocation13 + $0x50] sm:$0xff]
    %v3099 = vld [vmem:[#allocation13 + $0x58] sm:$0xff]
    %v3100 = vld [vmem:[#allocation13 + $0x60] sm:$0xff]
    %v3101 = vld [vmem:[#allocation13 + $0x68] sm:$0xff]
    %v3102 = vld [vmem:[#allocation13 + $0x70] sm:$0xff]
    %v3103 = vld [vmem:[#allocation13 + $0x78] sm:$0xff]
    %v3104 = vld [vmem:[#allocation13 + $0x80] sm:$0xff]
    %v3105 = vld [vmem:[#allocation13 + $0x88] sm:$0xff]
    %v3106 = vld [vmem:[#allocation13 + $0x90] sm:$0xff]
    %v3107 = vld [vmem:[#allocation13 + $0x98] sm:$0xff]
    %v3108 = vld [vmem:[#allocation13 + $0xa0] sm:$0xff]
    %v3109 = vld [vmem:[#allocation13 + $0xa8] sm:$0xff]
    %v3110 = vld [vmem:[#allocation13 + $0xb0] sm:$0xff]
    %v3111 = vld [vmem:[#allocation13 + $0xb8] sm:$0xff]
    %v3112 = vld [vmem:[#allocation13 + $0xc0] sm:$0xff]
    %v3113 = vld [vmem:[#allocation13 + $0xc8] sm:$0xff]
    %v3114 = vld [vmem:[#allocation13 + $0xd0] sm:$0xff]
    %v3115 = vld [vmem:[#allocation13 + $0xd8] sm:$0xff]
    %v3116 = vld [vmem:[#allocation13 + $0xe0] sm:$0xff]
    %v3117 = vld [vmem:[#allocation13 + $0xe8] sm:$0xff]
    %v3118 = vld [vmem:[#allocation13 + $0xf0] sm:$0xff]
    %v3119 = vld [vmem:[#allocation13 + $0xf8] sm:$0xff]
    %v3120 = vld [vmem:[#allocation14] sm:$0x3]
    %v3122 = vlaneseq
    %v3123 = vshrl.u32 %v3122, 7
    %v3124 = vsub.s32 0, %v3123
    %v3125 = vrot.slane %v3120, %v3124
    %v3126 = vlaneseq
    %v3127 = vshrl.u32 %v3126, 7
    %v3128 = vsub.s32 1, %v3127
    %v3129 = vrot.slane %v3120, %v3128
    %v3164 = vunpack.c.l.b16 %v3088
    %v3165 = vunpack.c.h.b16 %v3088
    %v3166 = vunpack.c.l.b16 %v3089
    %v3167 = vunpack.c.h.b16 %v3089
    %v3168 = vunpack.c.l.b16 %v3090
    %v3169 = vunpack.c.h.b16 %v3090
    %v3170 = vunpack.c.l.b16 %v3091
    %v3171 = vunpack.c.h.b16 %v3091
    %v3172 = vunpack.c.l.b16 %v3092
    %v3173 = vunpack.c.h.b16 %v3092
    %v3174 = vunpack.c.l.b16 %v3093
    %v3175 = vunpack.c.h.b16 %v3093
    %v3176 = vunpack.c.l.b16 %v3094
    %v3177 = vunpack.c.h.b16 %v3094
    %v3178 = vunpack.c.l.b16 %v3095
    %v3179 = vunpack.c.h.b16 %v3095
    %v3180 = vunpack.c.l.b16 %v3096
    %v3181 = vunpack.c.h.b16 %v3096
    %v3182 = vunpack.c.l.b16 %v3097
    %v3183 = vunpack.c.h.b16 %v3097
    %v3184 = vunpack.c.l.b16 %v3098
    %v3185 = vunpack.c.h.b16 %v3098
    %v3186 = vunpack.c.l.b16 %v3099
    %v3187 = vunpack.c.h.b16 %v3099
    %v3188 = vunpack.c.l.b16 %v3100
    %v3189 = vunpack.c.h.b16 %v3100
    %v3190 = vunpack.c.l.b16 %v3101
    %v3191 = vunpack.c.h.b16 %v3101
    %v3192 = vunpack.c.l.b16 %v3102
    %v3193 = vunpack.c.h.b16 %v3102
    %v3194 = vunpack.c.l.b16 %v3103
    %v3195 = vunpack.c.h.b16 %v3103
    %v3196 = vunpack.c.l.b16 %v3104
    %v3197 = vunpack.c.h.b16 %v3104
    %v3198 = vunpack.c.l.b16 %v3105
    %v3199 = vunpack.c.h.b16 %v3105
    %v3200 = vunpack.c.l.b16 %v3106
    %v3201 = vunpack.c.h.b16 %v3106
    %v3202 = vunpack.c.l.b16 %v3107
    %v3203 = vunpack.c.h.b16 %v3107
    %v3204 = vunpack.c.l.b16 %v3108
    %v3205 = vunpack.c.h.b16 %v3108
    %v3206 = vunpack.c.l.b16 %v3109
    %v3207 = vunpack.c.h.b16 %v3109
    %v3208 = vunpack.c.l.b16 %v3110
    %v3209 = vunpack.c.h.b16 %v3110
    %v3210 = vunpack.c.l.b16 %v3111
    %v3211 = vunpack.c.h.b16 %v3111
    %v3212 = vunpack.c.l.b16 %v3112
    %v3213 = vunpack.c.h.b16 %v3112
    %v3214 = vunpack.c.l.b16 %v3113
    %v3215 = vunpack.c.h.b16 %v3113
    %v3216 = vunpack.c.l.b16 %v3114
    %v3217 = vunpack.c.h.b16 %v3114
    %v3218 = vunpack.c.l.b16 %v3115
    %v3219 = vunpack.c.h.b16 %v3115
    %v3220 = vunpack.c.l.b16 %v3116
    %v3221 = vunpack.c.h.b16 %v3116
    %v3222 = vunpack.c.l.b16 %v3117
    %v3223 = vunpack.c.h.b16 %v3117
    %v3224 = vunpack.c.l.b16 %v3118
    %v3225 = vunpack.c.h.b16 %v3118
    %v3226 = vunpack.c.l.b16 %v3119
    %v3227 = vunpack.c.h.b16 %v3119
    %v3228 = vpack.c.b16 %v3166, %v3164
    %v3229 = vpack.c.b16 %v3167, %v3165
    %v3230 = vpack.c.b16 %v3170, %v3168
    %v3231 = vpack.c.b16 %v3171, %v3169
    %v3232 = vpack.c.b16 %v3174, %v3172
    %v3233 = vpack.c.b16 %v3175, %v3173
    %v3234 = vpack.c.b16 %v3178, %v3176
    %v3235 = vpack.c.b16 %v3179, %v3177
    %v3236 = vpack.c.b16 %v3182, %v3180
    %v3237 = vpack.c.b16 %v3183, %v3181
    %v3238 = vpack.c.b16 %v3186, %v3184
    %v3239 = vpack.c.b16 %v3187, %v3185
    %v3240 = vpack.c.b16 %v3190, %v3188
    %v3241 = vpack.c.b16 %v3191, %v3189
    %v3242 = vpack.c.b16 %v3194, %v3192
    %v3243 = vpack.c.b16 %v3195, %v3193
    %v3244 = vpack.c.b16 %v3198, %v3196
    %v3245 = vpack.c.b16 %v3199, %v3197
    %v3246 = vpack.c.b16 %v3202, %v3200
    %v3247 = vpack.c.b16 %v3203, %v3201
    %v3248 = vpack.c.b16 %v3206, %v3204
    %v3249 = vpack.c.b16 %v3207, %v3205
    %v3250 = vpack.c.b16 %v3210, %v3208
    %v3251 = vpack.c.b16 %v3211, %v3209
    %v3252 = vpack.c.b16 %v3214, %v3212
    %v3253 = vpack.c.b16 %v3215, %v3213
    %v3254 = vpack.c.b16 %v3218, %v3216
    %v3255 = vpack.c.b16 %v3219, %v3217
    %v3256 = vpack.c.b16 %v3222, %v3220
    %v3257 = vpack.c.b16 %v3223, %v3221
    %v3258 = vpack.c.b16 %v3226, %v3224
    %v3259 = vpack.c.b16 %v3227, %v3225
    %3292 = vmatprep.subr.bf16.mxu0 %v3243
    %3293 = vmatpush1.bf16.msra.mxu0 %v3242
    %3294 = vmatprep.subr.bf16.mxu0 %v3241
    %3295 = vmatpush1.bf16.msra.mxu0 %v3240
    %3296 = vmatprep.subr.bf16.mxu0 %v3239
    %3297 = vmatpush1.bf16.msra.mxu0 %v3238
    %3298 = vmatprep.subr.bf16.mxu0 %v3237
    %3299 = vmatpush1.bf16.msra.mxu0 %v3236
    %3300 = vmatprep.subr.bf16.mxu0 %v3235
    %3301 = vmatpush1.bf16.msra.mxu0 %v3234
    %3302 = vmatprep.subr.bf16.mxu0 %v3233
    %3303 = vmatpush1.bf16.msra.mxu0 %v3232
    %3304 = vmatprep.subr.bf16.mxu0 %v3231
    %3305 = vmatpush1.bf16.msra.mxu0 %v3230
    %3306 = vmatprep.subr.bf16.mxu0 %v3229
    %3307 = vmatpush1.bf16.msra.mxu0 %v3228
    %3308 = vmatprep.subr.bf16.mxu0 %v3259
    %3309 = vmatpush2.bf16.msra.mxu0 %v3258
    %3310 = vmatprep.subr.bf16.mxu0 %v3257
    %3311 = vmatpush2.bf16.msra.mxu0 %v3256
    %3312 = vmatprep.subr.bf16.mxu0 %v3255
    %3313 = vmatpush2.bf16.msra.mxu0 %v3254
    %3314 = vmatprep.subr.bf16.mxu0 %v3253
    %3315 = vmatpush2.bf16.msra.mxu0 %v3252
    %3316 = vmatprep.subr.bf16.mxu0 %v3251
    %3317 = vmatpush2.bf16.msra.mxu0 %v3250
    %3318 = vmatprep.subr.bf16.mxu0 %v3249
    %3319 = vmatpush2.bf16.msra.mxu0 %v3248
    %3320 = vmatprep.subr.bf16.mxu0 %v3247
    %3321 = vmatpush2.bf16.msra.mxu0 %v3246
    %3322 = vmatprep.subr.bf16.mxu0 %v3245
    %3323 = vmatpush2.bf16.msra.mxu0 %v3244
    %3324 = vmatprep.mubr.bf16.mxu0 %v3087
    %3325 = vmatmul.mubr.bf16.gmra.mxu0 %v3086
    %v3326 = vpop.f32.mrf.mxu0
    %v3327 = vadd.f32 %v3125, %v3326
    %v3328 = vpop.f32.mrf.mxu0
    %v3329 = vadd.f32 %v3129, %v3328
    %v3330 = vpop.f32.mrf.mxu0
    %v3331 = vpop.f32.mrf.mxu0
    %3332 = vdwg.mxu0
    %v3333 = vld [vmem:[#allocation5] sm:$0xff]
    %v3334 = vmul.f32 %v3329, 0.5
    %v3335 = vmul.f32 %v3334, 1.442695
    %v3336 = vpow.pop %v3335
    %v3337 = vmul.f32 %v3333, %v3336
    %v3338 = vadd.f32 %v3327, %v3337
    %v3339 = vpack.c.bf16 %v3338, %v3338
    %v3340 = vld [vmem:[#allocation16] sm:$0xff]
    %v3341 = vld [vmem:[#allocation16 + $0x8] sm:$0xff]
    %v3342 = vld [vmem:[#allocation16 + $0x10] sm:$0xff]
    %v3343 = vld [vmem:[#allocation16 + $0x18] sm:$0xff]
    %v3344 = vld [vmem:[#allocation16 + $0x20] sm:$0xff]
    %v3345 = vld [vmem:[#allocation16 + $0x28] sm:$0xff]
    %v3346 = vld [vmem:[#allocation16 + $0x30] sm:$0xff]
    %v3347 = vld [vmem:[#allocation16 + $0x38] sm:$0xff]
    %v3348 = vld [vmem:[#allocation16 + $0x40] sm:$0xff]
    %v3349 = vld [vmem:[#allocation16 + $0x48] sm:$0xff]
    %v3350 = vld [vmem:[#allocation16 + $0x50] sm:$0xff]
    %v3351 = vld [vmem:[#allocation16 + $0x58] sm:$0xff]
    %v3352 = vld [vmem:[#allocation16 + $0x60] sm:$0xff]
    %v3353 = vld [vmem:[#allocation16 + $0x68] sm:$0xff]
    %v3354 = vld [vmem:[#allocation16 + $0x70] sm:$0xff]
    %v3355 = vld [vmem:[#allocation16 + $0x78] sm:$0xff]
    %v3356 = vld [vmem:[#allocation17] sm:$0x3]
    %v3358 = vlaneseq
    %v3359 = vshrl.u32 %v3358, 7
    %v3360 = vsub.s32 0, %v3359
    %v3361 = vrot.slane %v3356, %v3360
    %v3362 = vlaneseq
    %v3363 = vshrl.u32 %v3362, 7
    %v3364 = vsub.s32 1, %v3363
    %v3365 = vrot.slane %v3356, %v3364
    %v3384 = vunpack.c.l.b16 %v3340
    %v3385 = vunpack.c.h.b16 %v3340
    %v3386 = vunpack.c.l.b16 %v3341
    %v3387 = vunpack.c.h.b16 %v3341
    %v3388 = vunpack.c.l.b16 %v3342
    %v3389 = vunpack.c.h.b16 %v3342
    %v3390 = vunpack.c.l.b16 %v3343
    %v3391 = vunpack.c.h.b16 %v3343
    %v3392 = vunpack.c.l.b16 %v3344
    %v3393 = vunpack.c.h.b16 %v3344
    %v3394 = vunpack.c.l.b16 %v3345
    %v3395 = vunpack.c.h.b16 %v3345
    %v3396 = vunpack.c.l.b16 %v3346
    %v3397 = vunpack.c.h.b16 %v3346
    %v3398 = vunpack.c.l.b16 %v3347
    %v3399 = vunpack.c.h.b16 %v3347
    %v3400 = vunpack.c.l.b16 %v3348
    %v3401 = vunpack.c.h.b16 %v3348
    %v3402 = vunpack.c.l.b16 %v3349
    %v3403 = vunpack.c.h.b16 %v3349
    %v3404 = vunpack.c.l.b16 %v3350
    %v3405 = vunpack.c.h.b16 %v3350
    %v3406 = vunpack.c.l.b16 %v3351
    %v3407 = vunpack.c.h.b16 %v3351
    %v3408 = vunpack.c.l.b16 %v3352
    %v3409 = vunpack.c.h.b16 %v3352
    %v3410 = vunpack.c.l.b16 %v3353
    %v3411 = vunpack.c.h.b16 %v3353
    %v3412 = vunpack.c.l.b16 %v3354
    %v3413 = vunpack.c.h.b16 %v3354
    %v3414 = vunpack.c.l.b16 %v3355
    %v3415 = vunpack.c.h.b16 %v3355
    %v3416 = vpack.c.b16 %v3386, %v3384
    %v3417 = vpack.c.b16 %v3387, %v3385
    %v3418 = vpack.c.b16 %v3390, %v3388
    %v3419 = vpack.c.b16 %v3391, %v3389
    %v3420 = vpack.c.b16 %v3394, %v3392
    %v3421 = vpack.c.b16 %v3395, %v3393
    %v3422 = vpack.c.b16 %v3398, %v3396
    %v3423 = vpack.c.b16 %v3399, %v3397
    %v3424 = vpack.c.b16 %v3402, %v3400
    %v3425 = vpack.c.b16 %v3403, %v3401
    %v3426 = vpack.c.b16 %v3406, %v3404
    %v3427 = vpack.c.b16 %v3407, %v3405
    %v3428 = vpack.c.b16 %v3410, %v3408
    %v3429 = vpack.c.b16 %v3411, %v3409
    %v3430 = vpack.c.b16 %v3414, %v3412
    %v3431 = vpack.c.b16 %v3415, %v3413
    %3448 = vmatprep.subr.bf16.mxu0 %v3431
    %3449 = vmatpush1.bf16.msra.mxu0 %v3430
    %3450 = vmatprep.subr.bf16.mxu0 %v3429
    %3451 = vmatpush1.bf16.msra.mxu0 %v3428
    %3452 = vmatprep.subr.bf16.mxu0 %v3427
    %3453 = vmatpush1.bf16.msra.mxu0 %v3426
    %3454 = vmatprep.subr.bf16.mxu0 %v3425
    %3455 = vmatpush1.bf16.msra.mxu0 %v3424
    %3456 = vmatprep.subr.bf16.mxu0 %v3423
    %3457 = vmatpush1.bf16.msra.mxu0 %v3422
    %3458 = vmatprep.subr.bf16.mxu0 %v3421
    %3459 = vmatpush1.bf16.msra.mxu0 %v3420
    %3460 = vmatprep.subr.bf16.mxu0 %v3419
    %3461 = vmatpush1.bf16.msra.mxu0 %v3418
    %3462 = vmatprep.subr.bf16.mxu0 %v3417
    %3463 = vmatpush1.bf16.msra.mxu0 %v3416
    %3464 = vmatprep.subr.bf16.mxu0 0
    %3465 = vmatpush2.bf16.msra.mxu0 0
    %3466 = vmatprep.subr.bf16.mxu0 0
    %3467 = vmatpush2.bf16.msra.mxu0 0
    %3468 = vmatprep.subr.bf16.mxu0 0
    %3469 = vmatpush2.bf16.msra.mxu0 0
    %3470 = vmatprep.subr.bf16.mxu0 0
    %3471 = vmatpush2.bf16.msra.mxu0 0
    %3472 = vmatprep.subr.bf16.mxu0 0
    %3473 = vmatpush2.bf16.msra.mxu0 0
    %3474 = vmatprep.subr.bf16.mxu0 0
    %3475 = vmatpush2.bf16.msra.mxu0 0
    %3476 = vmatprep.subr.bf16.mxu0 0
    %3477 = vmatpush2.bf16.msra.mxu0 0
    %3478 = vmatprep.subr.bf16.mxu0 0
    %3479 = vmatpush2.bf16.msra.mxu0 0
    %3480 = vmatprep.mubr.bf16.mxu0 0
    %3481 = vmatmul.mubr.bf16.gmra.mxu0 %v3339
    %v3482 = vpop.f32.mrf.mxu0
    %v3483 = vadd.f32 %v3361, %v3482
    %v3484 = vpop.f32.mrf.mxu0
    %v3485 = vadd.f32 %v3365, %v3484
    %v3486 = vpop.f32.mrf.mxu0
    %v3487 = vpop.f32.mrf.mxu0
    %3488 = vdwg.mxu0
    %v3489 = vmax.f32 %v3483, 0.0
    %v3490 = vmax.f32 %v3485, 0.0
    %v3491 = vpack.c.bf16 %v3489, %v3489
    %v3492 = vpack.c.bf16 %v3490, %v3490
    %v3493 = vld [vmem:[#allocation19] sm:$0xff]
    %v3494 = vld [vmem:[#allocation19 + $0x8] sm:$0xff]
    %v3495 = vld [vmem:[#allocation19 + $0x10] sm:$0xff]
    %v3496 = vld [vmem:[#allocation19 + $0x18] sm:$0xff]
    %v3497 = vld [vmem:[#allocation19 + $0x20] sm:$0xff]
    %v3498 = vld [vmem:[#allocation19 + $0x28] sm:$0xff]
    %v3499 = vld [vmem:[#allocation19 + $0x30] sm:$0xff]
    %v3500 = vld [vmem:[#allocation19 + $0x38] sm:$0xff]
    %v3501 = vld [vmem:[#allocation19 + $0x40] sm:$0xff]
    %v3502 = vld [vmem:[#allocation19 + $0x48] sm:$0xff]
    %v3503 = vld [vmem:[#allocation19 + $0x50] sm:$0xff]
    %v3504 = vld [vmem:[#allocation19 + $0x58] sm:$0xff]
    %v3505 = vld [vmem:[#allocation19 + $0x60] sm:$0xff]
    %v3506 = vld [vmem:[#allocation19 + $0x68] sm:$0xff]
    %v3507 = vld [vmem:[#allocation19 + $0x70] sm:$0xff]
    %v3508 = vld [vmem:[#allocation19 + $0x78] sm:$0xff]
    %v3509 = vld [vmem:[#allocation19 + $0x80] sm:$0xff]
    %v3510 = vld [vmem:[#allocation19 + $0x88] sm:$0xff]
    %v3511 = vld [vmem:[#allocation19 + $0x90] sm:$0xff]
    %v3512 = vld [vmem:[#allocation19 + $0x98] sm:$0xff]
    %v3513 = vld [vmem:[#allocation19 + $0xa0] sm:$0xff]
    %v3514 = vld [vmem:[#allocation19 + $0xa8] sm:$0xff]
    %v3515 = vld [vmem:[#allocation19 + $0xb0] sm:$0xff]
    %v3516 = vld [vmem:[#allocation19 + $0xb8] sm:$0xff]
    %v3517 = vld [vmem:[#allocation19 + $0xc0] sm:$0xff]
    %v3518 = vld [vmem:[#allocation19 + $0xc8] sm:$0xff]
    %v3519 = vld [vmem:[#allocation19 + $0xd0] sm:$0xff]
    %v3520 = vld [vmem:[#allocation19 + $0xd8] sm:$0xff]
    %v3521 = vld [vmem:[#allocation19 + $0xe0] sm:$0xff]
    %v3522 = vld [vmem:[#allocation19 + $0xe8] sm:$0xff]
    %v3523 = vld [vmem:[#allocation19 + $0xf0] sm:$0xff]
    %v3524 = vld [vmem:[#allocation19 + $0xf8] sm:$0xff]
    %v3525 = vld [vmem:[#allocation19 + $0x100] sm:$0xff]
    %v3526 = vld [vmem:[#allocation19 + $0x108] sm:$0xff]
    %v3527 = vld [vmem:[#allocation19 + $0x110] sm:$0xff]
    %v3528 = vld [vmem:[#allocation19 + $0x118] sm:$0xff]
    %v3529 = vld [vmem:[#allocation19 + $0x120] sm:$0xff]
    %v3530 = vld [vmem:[#allocation19 + $0x128] sm:$0xff]
    %v3531 = vld [vmem:[#allocation19 + $0x130] sm:$0xff]
    %v3532 = vld [vmem:[#allocation19 + $0x138] sm:$0xff]
    %v3533 = vld [vmem:[#allocation19 + $0x140] sm:$0xff]
    %v3534 = vld [vmem:[#allocation19 + $0x148] sm:$0xff]
    %v3535 = vld [vmem:[#allocation19 + $0x150] sm:$0xff]
    %v3536 = vld [vmem:[#allocation19 + $0x158] sm:$0xff]
    %v3537 = vld [vmem:[#allocation19 + $0x160] sm:$0xff]
    %v3538 = vld [vmem:[#allocation19 + $0x168] sm:$0xff]
    %v3539 = vld [vmem:[#allocation19 + $0x170] sm:$0xff]
    %v3540 = vld [vmem:[#allocation19 + $0x178] sm:$0xff]
    %v3541 = vld [vmem:[#allocation19 + $0x180] sm:$0xff]
    %v3542 = vld [vmem:[#allocation19 + $0x188] sm:$0xff]
    %v3543 = vld [vmem:[#allocation19 + $0x190] sm:$0xff]
    %v3544 = vld [vmem:[#allocation19 + $0x198] sm:$0xff]
    %v3545 = vld [vmem:[#allocation19 + $0x1a0] sm:$0xff]
    %v3546 = vld [vmem:[#allocation19 + $0x1a8] sm:$0xff]
    %v3547 = vld [vmem:[#allocation19 + $0x1b0] sm:$0xff]
    %v3548 = vld [vmem:[#allocation19 + $0x1b8] sm:$0xff]
    %v3549 = vld [vmem:[#allocation19 + $0x1c0] sm:$0xff]
    %v3550 = vld [vmem:[#allocation19 + $0x1c8] sm:$0xff]
    %v3551 = vld [vmem:[#allocation19 + $0x1d0] sm:$0xff]
    %v3552 = vld [vmem:[#allocation19 + $0x1d8] sm:$0xff]
    %v3553 = vld [vmem:[#allocation19 + $0x1e0] sm:$0xff]
    %v3554 = vld [vmem:[#allocation19 + $0x1e8] sm:$0xff]
    %v3555 = vld [vmem:[#allocation19 + $0x1f0] sm:$0xff]
    %v3556 = vld [vmem:[#allocation19 + $0x1f8] sm:$0xff]
    %v3557 = vld [vmem:[#allocation20] sm:$0xf]
    %v3559 = vlaneseq
    %v3560 = vshrl.u32 %v3559, 7
    %v3561 = vsub.s32 0, %v3560
    %v3562 = vrot.slane %v3557, %v3561
    %v3563 = vlaneseq
    %v3564 = vshrl.u32 %v3563, 7
    %v3565 = vsub.s32 1, %v3564
    %v3566 = vrot.slane %v3557, %v3565
    %v3567 = vlaneseq
    %v3568 = vshrl.u32 %v3567, 7
    %v3569 = vsub.s32 2, %v3568
    %v3570 = vrot.slane %v3557, %v3569
    %v3571 = vlaneseq
    %v3572 = vshrl.u32 %v3571, 7
    %v3573 = vsub.s32 3, %v3572
    %v3574 = vrot.slane %v3557, %v3573
    %v3643 = vunpack.c.l.b16 %v3493
    %v3644 = vunpack.c.h.b16 %v3493
    %v3645 = vunpack.c.l.b16 %v3494
    %v3646 = vunpack.c.h.b16 %v3494
    %v3647 = vunpack.c.l.b16 %v3495
    %v3648 = vunpack.c.h.b16 %v3495
    %v3649 = vunpack.c.l.b16 %v3496
    %v3650 = vunpack.c.h.b16 %v3496
    %v3651 = vunpack.c.l.b16 %v3497
    %v3652 = vunpack.c.h.b16 %v3497
    %v3653 = vunpack.c.l.b16 %v3498
    %v3654 = vunpack.c.h.b16 %v3498
    %v3655 = vunpack.c.l.b16 %v3499
    %v3656 = vunpack.c.h.b16 %v3499
    %v3657 = vunpack.c.l.b16 %v3500
    %v3658 = vunpack.c.h.b16 %v3500
    %v3659 = vunpack.c.l.b16 %v3501
    %v3660 = vunpack.c.h.b16 %v3501
    %v3661 = vunpack.c.l.b16 %v3502
    %v3662 = vunpack.c.h.b16 %v3502
    %v3663 = vunpack.c.l.b16 %v3503
    %v3664 = vunpack.c.h.b16 %v3503
    %v3665 = vunpack.c.l.b16 %v3504
    %v3666 = vunpack.c.h.b16 %v3504
    %v3667 = vunpack.c.l.b16 %v3505
    %v3668 = vunpack.c.h.b16 %v3505
    %v3669 = vunpack.c.l.b16 %v3506
    %v3670 = vunpack.c.h.b16 %v3506
    %v3671 = vunpack.c.l.b16 %v3507
    %v3672 = vunpack.c.h.b16 %v3507
    %v3673 = vunpack.c.l.b16 %v3508
    %v3674 = vunpack.c.h.b16 %v3508
    %v3675 = vunpack.c.l.b16 %v3509
    %v3676 = vunpack.c.h.b16 %v3509
    %v3677 = vunpack.c.l.b16 %v3510
    %v3678 = vunpack.c.h.b16 %v3510
    %v3679 = vunpack.c.l.b16 %v3511
    %v3680 = vunpack.c.h.b16 %v3511
    %v3681 = vunpack.c.l.b16 %v3512
    %v3682 = vunpack.c.h.b16 %v3512
    %v3683 = vunpack.c.l.b16 %v3513
    %v3684 = vunpack.c.h.b16 %v3513
    %v3685 = vunpack.c.l.b16 %v3514
    %v3686 = vunpack.c.h.b16 %v3514
    %v3687 = vunpack.c.l.b16 %v3515
    %v3688 = vunpack.c.h.b16 %v3515
    %v3689 = vunpack.c.l.b16 %v3516
    %v3690 = vunpack.c.h.b16 %v3516
    %v3691 = vunpack.c.l.b16 %v3517
    %v3692 = vunpack.c.h.b16 %v3517
    %v3693 = vunpack.c.l.b16 %v3518
    %v3694 = vunpack.c.h.b16 %v3518
    %v3695 = vunpack.c.l.b16 %v3519
    %v3696 = vunpack.c.h.b16 %v3519
    %v3697 = vunpack.c.l.b16 %v3520
    %v3698 = vunpack.c.h.b16 %v3520
    %v3699 = vunpack.c.l.b16 %v3521
    %v3700 = vunpack.c.h.b16 %v3521
    %v3701 = vunpack.c.l.b16 %v3522
    %v3702 = vunpack.c.h.b16 %v3522
    %v3703 = vunpack.c.l.b16 %v3523
    %v3704 = vunpack.c.h.b16 %v3523
    %v3705 = vunpack.c.l.b16 %v3524
    %v3706 = vunpack.c.h.b16 %v3524
    %v3707 = vunpack.c.l.b16 %v3525
    %v3708 = vunpack.c.h.b16 %v3525
    %v3709 = vunpack.c.l.b16 %v3526
    %v3710 = vunpack.c.h.b16 %v3526
    %v3711 = vunpack.c.l.b16 %v3527
    %v3712 = vunpack.c.h.b16 %v3527
    %v3713 = vunpack.c.l.b16 %v3528
    %v3714 = vunpack.c.h.b16 %v3528
    %v3715 = vunpack.c.l.b16 %v3529
    %v3716 = vunpack.c.h.b16 %v3529
    %v3717 = vunpack.c.l.b16 %v3530
    %v3718 = vunpack.c.h.b16 %v3530
    %v3719 = vunpack.c.l.b16 %v3531
    %v3720 = vunpack.c.h.b16 %v3531
    %v3721 = vunpack.c.l.b16 %v3532
    %v3722 = vunpack.c.h.b16 %v3532
    %v3723 = vunpack.c.l.b16 %v3533
    %v3724 = vunpack.c.h.b16 %v3533
    %v3725 = vunpack.c.l.b16 %v3534
    %v3726 = vunpack.c.h.b16 %v3534
    %v3727 = vunpack.c.l.b16 %v3535
    %v3728 = vunpack.c.h.b16 %v3535
    %v3729 = vunpack.c.l.b16 %v3536
    %v3730 = vunpack.c.h.b16 %v3536
    %v3731 = vunpack.c.l.b16 %v3537
    %v3732 = vunpack.c.h.b16 %v3537
    %v3733 = vunpack.c.l.b16 %v3538
    %v3734 = vunpack.c.h.b16 %v3538
    %v3735 = vunpack.c.l.b16 %v3539
    %v3736 = vunpack.c.h.b16 %v3539
    %v3737 = vunpack.c.l.b16 %v3540
    %v3738 = vunpack.c.h.b16 %v3540
    %v3739 = vunpack.c.l.b16 %v3541
    %v3740 = vunpack.c.h.b16 %v3541
    %v3741 = vunpack.c.l.b16 %v3542
    %v3742 = vunpack.c.h.b16 %v3542
    %v3743 = vunpack.c.l.b16 %v3543
    %v3744 = vunpack.c.h.b16 %v3543
    %v3745 = vunpack.c.l.b16 %v3544
    %v3746 = vunpack.c.h.b16 %v3544
    %v3747 = vunpack.c.l.b16 %v3545
    %v3748 = vunpack.c.h.b16 %v3545
    %v3749 = vunpack.c.l.b16 %v3546
    %v3750 = vunpack.c.h.b16 %v3546
    %v3751 = vunpack.c.l.b16 %v3547
    %v3752 = vunpack.c.h.b16 %v3547
    %v3753 = vunpack.c.l.b16 %v3548
    %v3754 = vunpack.c.h.b16 %v3548
    %v3755 = vunpack.c.l.b16 %v3549
    %v3756 = vunpack.c.h.b16 %v3549
    %v3757 = vunpack.c.l.b16 %v3550
    %v3758 = vunpack.c.h.b16 %v3550
    %v3759 = vunpack.c.l.b16 %v3551
    %v3760 = vunpack.c.h.b16 %v3551
    %v3761 = vunpack.c.l.b16 %v3552
    %v3762 = vunpack.c.h.b16 %v3552
    %v3763 = vunpack.c.l.b16 %v3553
    %v3764 = vunpack.c.h.b16 %v3553
    %v3765 = vunpack.c.l.b16 %v3554
    %v3766 = vunpack.c.h.b16 %v3554
    %v3767 = vunpack.c.l.b16 %v3555
    %v3768 = vunpack.c.h.b16 %v3555
    %v3769 = vunpack.c.l.b16 %v3556
    %v3770 = vunpack.c.h.b16 %v3556
    %v3771 = vpack.c.b16 %v3647, %v3643
    %v3772 = vpack.c.b16 %v3648, %v3644
    %v3773 = vpack.c.b16 %v3649, %v3645
    %v3774 = vpack.c.b16 %v3650, %v3646
    %v3775 = vpack.c.b16 %v3655, %v3651
    %v3776 = vpack.c.b16 %v3656, %v3652
    %v3777 = vpack.c.b16 %v3657, %v3653
    %v3778 = vpack.c.b16 %v3658, %v3654
    %v3779 = vpack.c.b16 %v3663, %v3659
    %v3780 = vpack.c.b16 %v3664, %v3660
    %v3781 = vpack.c.b16 %v3665, %v3661
    %v3782 = vpack.c.b16 %v3666, %v3662
    %v3783 = vpack.c.b16 %v3671, %v3667
    %v3784 = vpack.c.b16 %v3672, %v3668
    %v3785 = vpack.c.b16 %v3673, %v3669
    %v3786 = vpack.c.b16 %v3674, %v3670
    %v3787 = vpack.c.b16 %v3679, %v3675
    %v3788 = vpack.c.b16 %v3680, %v3676
    %v3789 = vpack.c.b16 %v3681, %v3677
    %v3790 = vpack.c.b16 %v3682, %v3678
    %v3791 = vpack.c.b16 %v3687, %v3683
    %v3792 = vpack.c.b16 %v3688, %v3684
    %v3793 = vpack.c.b16 %v3689, %v3685
    %v3794 = vpack.c.b16 %v3690, %v3686
    %v3795 = vpack.c.b16 %v3695, %v3691
    %v3796 = vpack.c.b16 %v3696, %v3692
    %v3797 = vpack.c.b16 %v3697, %v3693
    %v3798 = vpack.c.b16 %v3698, %v3694
    %v3799 = vpack.c.b16 %v3703, %v3699
    %v3800 = vpack.c.b16 %v3704, %v3700
    %v3801 = vpack.c.b16 %v3705, %v3701
    %v3802 = vpack.c.b16 %v3706, %v3702
    %v3803 = vpack.c.b16 %v3711, %v3707
    %v3804 = vpack.c.b16 %v3712, %v3708
    %v3805 = vpack.c.b16 %v3713, %v3709
    %v3806 = vpack.c.b16 %v3714, %v3710
    %v3807 = vpack.c.b16 %v3719, %v3715
    %v3808 = vpack.c.b16 %v3720, %v3716
    %v3809 = vpack.c.b16 %v3721, %v3717
    %v3810 = vpack.c.b16 %v3722, %v3718
    %v3811 = vpack.c.b16 %v3727, %v3723
    %v3812 = vpack.c.b16 %v3728, %v3724
    %v3813 = vpack.c.b16 %v3729, %v3725
    %v3814 = vpack.c.b16 %v3730, %v3726
    %v3815 = vpack.c.b16 %v3735, %v3731
    %v3816 = vpack.c.b16 %v3736, %v3732
    %v3817 = vpack.c.b16 %v3737, %v3733
    %v3818 = vpack.c.b16 %v3738, %v3734
    %v3819 = vpack.c.b16 %v3743, %v3739
    %v3820 = vpack.c.b16 %v3744, %v3740
    %v3821 = vpack.c.b16 %v3745, %v3741
    %v3822 = vpack.c.b16 %v3746, %v3742
    %v3823 = vpack.c.b16 %v3751, %v3747
    %v3824 = vpack.c.b16 %v3752, %v3748
    %v3825 = vpack.c.b16 %v3753, %v3749
    %v3826 = vpack.c.b16 %v3754, %v3750
    %v3827 = vpack.c.b16 %v3759, %v3755
    %v3828 = vpack.c.b16 %v3760, %v3756
    %v3829 = vpack.c.b16 %v3761, %v3757
    %v3830 = vpack.c.b16 %v3762, %v3758
    %v3831 = vpack.c.b16 %v3767, %v3763
    %v3832 = vpack.c.b16 %v3768, %v3764
    %v3833 = vpack.c.b16 %v3769, %v3765
    %v3834 = vpack.c.b16 %v3770, %v3766
    %3899 = vmatprep.subr.bf16.mxu0 %v3800
    %3900 = vmatpush1.bf16.msra.mxu0 %v3799
    %3901 = vmatprep.subr.bf16.mxu0 %v3796
    %3902 = vmatpush1.bf16.msra.mxu0 %v3795
    %3903 = vmatprep.subr.bf16.mxu0 %v3792
    %3904 = vmatpush1.bf16.msra.mxu0 %v3791
    %3905 = vmatprep.subr.bf16.mxu0 %v3788
    %3906 = vmatpush1.bf16.msra.mxu0 %v3787
    %3907 = vmatprep.subr.bf16.mxu0 %v3784
    %3908 = vmatpush1.bf16.msra.mxu0 %v3783
    %3909 = vmatprep.subr.bf16.mxu0 %v3780
    %3910 = vmatpush1.bf16.msra.mxu0 %v3779
    %3911 = vmatprep.subr.bf16.mxu0 %v3776
    %3912 = vmatpush1.bf16.msra.mxu0 %v3775
    %3913 = vmatprep.subr.bf16.mxu0 %v3772
    %3914 = vmatpush1.bf16.msra.mxu0 %v3771
    %3915 = vmatprep.subr.bf16.mxu0 %v3832
    %3916 = vmatpush2.bf16.msra.mxu0 %v3831
    %3917 = vmatprep.subr.bf16.mxu0 %v3828
    %3918 = vmatpush2.bf16.msra.mxu0 %v3827
    %3919 = vmatprep.subr.bf16.mxu0 %v3824
    %3920 = vmatpush2.bf16.msra.mxu0 %v3823
    %3921 = vmatprep.subr.bf16.mxu0 %v3820
    %3922 = vmatpush2.bf16.msra.mxu0 %v3819
    %3923 = vmatprep.subr.bf16.mxu0 %v3816
    %3924 = vmatpush2.bf16.msra.mxu0 %v3815
    %3925 = vmatprep.subr.bf16.mxu0 %v3812
    %3926 = vmatpush2.bf16.msra.mxu0 %v3811
    %3927 = vmatprep.subr.bf16.mxu0 %v3808
    %3928 = vmatpush2.bf16.msra.mxu0 %v3807
    %3929 = vmatprep.subr.bf16.mxu0 %v3804
    %3930 = vmatpush2.bf16.msra.mxu0 %v3803
    %3931 = vmatprep.mubr.bf16.mxu0 %v3492
    %3932 = vmatmul.mubr.bf16.gmra.mxu0 %v3491
    %v3933 = vpop.f32.mrf.mxu0
    %v3934 = vadd.f32 %v3562, %v3933
    %v3935 = vpop.f32.mrf.mxu0
    %v3936 = vadd.f32 %v3566, %v3935
    %v3937 = vpop.f32.mrf.mxu0
    %v3938 = vpop.f32.mrf.mxu0
    %3939 = vdwg.mxu0
    %3940 = vmatprep.subr.bf16.mxu0 %v3802
    %3941 = vmatpush1.bf16.msra.mxu0 %v3801
    %3942 = vmatprep.subr.bf16.mxu0 %v3798
    %3943 = vmatpush1.bf16.msra.mxu0 %v3797
    %3944 = vmatprep.subr.bf16.mxu0 %v3794
    %3945 = vmatpush1.bf16.msra.mxu0 %v3793
    %3946 = vmatprep.subr.bf16.mxu0 %v3790
    %3947 = vmatpush1.bf16.msra.mxu0 %v3789
    %3948 = vmatprep.subr.bf16.mxu0 %v3786
    %3949 = vmatpush1.bf16.msra.mxu0 %v3785
    %3950 = vmatprep.subr.bf16.mxu0 %v3782
    %3951 = vmatpush1.bf16.msra.mxu0 %v3781
    %3952 = vmatprep.subr.bf16.mxu0 %v3778
    %3953 = vmatpush1.bf16.msra.mxu0 %v3777
    %3954 = vmatprep.subr.bf16.mxu0 %v3774
    %3955 = vmatpush1.bf16.msra.mxu0 %v3773
    %3956 = vmatprep.subr.bf16.mxu0 %v3834
    %3957 = vmatpush2.bf16.msra.mxu0 %v3833
    %3958 = vmatprep.subr.bf16.mxu0 %v3830
    %3959 = vmatpush2.bf16.msra.mxu0 %v3829
    %3960 = vmatprep.subr.bf16.mxu0 %v3826
    %3961 = vmatpush2.bf16.msra.mxu0 %v3825
    %3962 = vmatprep.subr.bf16.mxu0 %v3822
    %3963 = vmatpush2.bf16.msra.mxu0 %v3821
    %3964 = vmatprep.subr.bf16.mxu0 %v3818
    %3965 = vmatpush2.bf16.msra.mxu0 %v3817
    %3966 = vmatprep.subr.bf16.mxu0 %v3814
    %3967 = vmatpush2.bf16.msra.mxu0 %v3813
    %3968 = vmatprep.subr.bf16.mxu0 %v3810
    %3969 = vmatpush2.bf16.msra.mxu0 %v3809
    %3970 = vmatprep.subr.bf16.mxu0 %v3806
    %3971 = vmatpush2.bf16.msra.mxu0 %v3805
    %3972 = vmatprep.mubr.bf16.mxu0 %v3492
    %3973 = vmatmul.mubr.bf16.gmra.mxu0 %v3491
    %v3974 = vpop.f32.mrf.mxu0
    %v3975 = vadd.f32 %v3570, %v3974
    %v3976 = vpop.f32.mrf.mxu0
    %v3977 = vadd.f32 %v3574, %v3976
    %v3978 = vpop.f32.mrf.mxu0
    %v3979 = vpop.f32.mrf.mxu0
    %3980 = vdwg.mxu0
    %v3981 = vmax.f32 %v3934, 0.0
    %v3982 = vmax.f32 %v3936, 0.0
    %v3983 = vmax.f32 %v3975, 0.0
    %v3984 = vmax.f32 %v3977, 0.0
    %v3985 = vpack.c.bf16 %v3981, %v3981
    %v3986 = vpack.c.bf16 %v3982, %v3982
    %v3987 = vpack.c.bf16 %v3983, %v3983
    %v3988 = vpack.c.bf16 %v3984, %v3984
    %v3989 = vld [vmem:[#allocation22] sm:$0xff]
    %v3990 = vld [vmem:[#allocation22 + $0x8] sm:$0xff]
    %v3991 = vld [vmem:[#allocation22 + $0x10] sm:$0xff]
    %v3992 = vld [vmem:[#allocation22 + $0x18] sm:$0xff]
    %v3993 = vld [vmem:[#allocation22 + $0x20] sm:$0xff]
    %v3994 = vld [vmem:[#allocation22 + $0x28] sm:$0xff]
    %v3995 = vld [vmem:[#allocation22 + $0x30] sm:$0xff]
    %v3996 = vld [vmem:[#allocation22 + $0x38] sm:$0xff]
    %v3997 = vld [vmem:[#allocation22 + $0x40] sm:$0xff]
    %v3998 = vld [vmem:[#allocation22 + $0x48] sm:$0xff]
    %v3999 = vld [vmem:[#allocation22 + $0x50] sm:$0xff]
    %v4000 = vld [vmem:[#allocation22 + $0x58] sm:$0xff]
    %v4001 = vld [vmem:[#allocation22 + $0x60] sm:$0xff]
    %v4002 = vld [vmem:[#allocation22 + $0x68] sm:$0xff]
    %v4003 = vld [vmem:[#allocation22 + $0x70] sm:$0xff]
    %v4004 = vld [vmem:[#allocation22 + $0x78] sm:$0xff]
    %v4005 = vld [vmem:[#allocation22 + $0x80] sm:$0xff]
    %v4006 = vld [vmem:[#allocation22 + $0x88] sm:$0xff]
    %v4007 = vld [vmem:[#allocation22 + $0x90] sm:$0xff]
    %v4008 = vld [vmem:[#allocation22 + $0x98] sm:$0xff]
    %v4009 = vld [vmem:[#allocation22 + $0xa0] sm:$0xff]
    %v4010 = vld [vmem:[#allocation22 + $0xa8] sm:$0xff]
    %v4011 = vld [vmem:[#allocation22 + $0xb0] sm:$0xff]
    %v4012 = vld [vmem:[#allocation22 + $0xb8] sm:$0xff]
    %v4013 = vld [vmem:[#allocation22 + $0xc0] sm:$0xff]
    %v4014 = vld [vmem:[#allocation22 + $0xc8] sm:$0xff]
    %v4015 = vld [vmem:[#allocation22 + $0xd0] sm:$0xff]
    %v4016 = vld [vmem:[#allocation22 + $0xd8] sm:$0xff]
    %v4017 = vld [vmem:[#allocation22 + $0xe0] sm:$0xff]
    %v4018 = vld [vmem:[#allocation22 + $0xe8] sm:$0xff]
    %v4019 = vld [vmem:[#allocation22 + $0xf0] sm:$0xff]
    %v4020 = vld [vmem:[#allocation22 + $0xf8] sm:$0xff]
    %v4021 = vld [vmem:[#allocation22 + $0x100] sm:$0xff]
    %v4022 = vld [vmem:[#allocation22 + $0x108] sm:$0xff]
    %v4023 = vld [vmem:[#allocation22 + $0x110] sm:$0xff]
    %v4024 = vld [vmem:[#allocation22 + $0x118] sm:$0xff]
    %v4025 = vld [vmem:[#allocation22 + $0x120] sm:$0xff]
    %v4026 = vld [vmem:[#allocation22 + $0x128] sm:$0xff]
    %v4027 = vld [vmem:[#allocation22 + $0x130] sm:$0xff]
    %v4028 = vld [vmem:[#allocation22 + $0x138] sm:$0xff]
    %v4029 = vld [vmem:[#allocation22 + $0x140] sm:$0xff]
    %v4030 = vld [vmem:[#allocation22 + $0x148] sm:$0xff]
    %v4031 = vld [vmem:[#allocation22 + $0x150] sm:$0xff]
    %v4032 = vld [vmem:[#allocation22 + $0x158] sm:$0xff]
    %v4033 = vld [vmem:[#allocation22 + $0x160] sm:$0xff]
    %v4034 = vld [vmem:[#allocation22 + $0x168] sm:$0xff]
    %v4035 = vld [vmem:[#allocation22 + $0x170] sm:$0xff]
    %v4036 = vld [vmem:[#allocation22 + $0x178] sm:$0xff]
    %v4037 = vld [vmem:[#allocation22 + $0x180] sm:$0xff]
    %v4038 = vld [vmem:[#allocation22 + $0x188] sm:$0xff]
    %v4039 = vld [vmem:[#allocation22 + $0x190] sm:$0xff]
    %v4040 = vld [vmem:[#allocation22 + $0x198] sm:$0xff]
    %v4041 = vld [vmem:[#allocation22 + $0x1a0] sm:$0xff]
    %v4042 = vld [vmem:[#allocation22 + $0x1a8] sm:$0xff]
    %v4043 = vld [vmem:[#allocation22 + $0x1b0] sm:$0xff]
    %v4044 = vld [vmem:[#allocation22 + $0x1b8] sm:$0xff]
    %v4045 = vld [vmem:[#allocation22 + $0x1c0] sm:$0xff]
    %v4046 = vld [vmem:[#allocation22 + $0x1c8] sm:$0xff]
    %v4047 = vld [vmem:[#allocation22 + $0x1d0] sm:$0xff]
    %v4048 = vld [vmem:[#allocation22 + $0x1d8] sm:$0xff]
    %v4049 = vld [vmem:[#allocation22 + $0x1e0] sm:$0xff]
    %v4050 = vld [vmem:[#allocation22 + $0x1e8] sm:$0xff]
    %v4051 = vld [vmem:[#allocation22 + $0x1f0] sm:$0xff]
    %v4052 = vld [vmem:[#allocation22 + $0x1f8] sm:$0xff]
    %v4053 = vld [vmem:[#allocation23] sm:$0x3]
    %v4055 = vlaneseq
    %v4056 = vshrl.u32 %v4055, 7
    %v4057 = vsub.s32 0, %v4056
    %v4058 = vrot.slane %v4053, %v4057
    %v4059 = vlaneseq
    %v4060 = vshrl.u32 %v4059, 7
    %v4061 = vsub.s32 1, %v4060
    %v4062 = vrot.slane %v4053, %v4061
    %v4129 = vunpack.c.l.b16 %v3989
    %v4130 = vunpack.c.h.b16 %v3989
    %v4131 = vunpack.c.l.b16 %v3990
    %v4132 = vunpack.c.h.b16 %v3990
    %v4133 = vunpack.c.l.b16 %v3991
    %v4134 = vunpack.c.h.b16 %v3991
    %v4135 = vunpack.c.l.b16 %v3992
    %v4136 = vunpack.c.h.b16 %v3992
    %v4137 = vunpack.c.l.b16 %v3993
    %v4138 = vunpack.c.h.b16 %v3993
    %v4139 = vunpack.c.l.b16 %v3994
    %v4140 = vunpack.c.h.b16 %v3994
    %v4141 = vunpack.c.l.b16 %v3995
    %v4142 = vunpack.c.h.b16 %v3995
    %v4143 = vunpack.c.l.b16 %v3996
    %v4144 = vunpack.c.h.b16 %v3996
    %v4145 = vunpack.c.l.b16 %v3997
    %v4146 = vunpack.c.h.b16 %v3997
    %v4147 = vunpack.c.l.b16 %v3998
    %v4148 = vunpack.c.h.b16 %v3998
    %v4149 = vunpack.c.l.b16 %v3999
    %v4150 = vunpack.c.h.b16 %v3999
    %v4151 = vunpack.c.l.b16 %v4000
    %v4152 = vunpack.c.h.b16 %v4000
    %v4153 = vunpack.c.l.b16 %v4001
    %v4154 = vunpack.c.h.b16 %v4001
    %v4155 = vunpack.c.l.b16 %v4002
    %v4156 = vunpack.c.h.b16 %v4002
    %v4157 = vunpack.c.l.b16 %v4003
    %v4158 = vunpack.c.h.b16 %v4003
    %v4159 = vunpack.c.l.b16 %v4004
    %v4160 = vunpack.c.h.b16 %v4004
    %v4161 = vunpack.c.l.b16 %v4005
    %v4162 = vunpack.c.h.b16 %v4005
    %v4163 = vunpack.c.l.b16 %v4006
    %v4164 = vunpack.c.h.b16 %v4006
    %v4165 = vunpack.c.l.b16 %v4007
    %v4166 = vunpack.c.h.b16 %v4007
    %v4167 = vunpack.c.l.b16 %v4008
    %v4168 = vunpack.c.h.b16 %v4008
    %v4169 = vunpack.c.l.b16 %v4009
    %v4170 = vunpack.c.h.b16 %v4009
    %v4171 = vunpack.c.l.b16 %v4010
    %v4172 = vunpack.c.h.b16 %v4010
    %v4173 = vunpack.c.l.b16 %v4011
    %v4174 = vunpack.c.h.b16 %v4011
    %v4175 = vunpack.c.l.b16 %v4012
    %v4176 = vunpack.c.h.b16 %v4012
    %v4177 = vunpack.c.l.b16 %v4013
    %v4178 = vunpack.c.h.b16 %v4013
    %v4179 = vunpack.c.l.b16 %v4014
    %v4180 = vunpack.c.h.b16 %v4014
    %v4181 = vunpack.c.l.b16 %v4015
    %v4182 = vunpack.c.h.b16 %v4015
    %v4183 = vunpack.c.l.b16 %v4016
    %v4184 = vunpack.c.h.b16 %v4016
    %v4185 = vunpack.c.l.b16 %v4017
    %v4186 = vunpack.c.h.b16 %v4017
    %v4187 = vunpack.c.l.b16 %v4018
    %v4188 = vunpack.c.h.b16 %v4018
    %v4189 = vunpack.c.l.b16 %v4019
    %v4190 = vunpack.c.h.b16 %v4019
    %v4191 = vunpack.c.l.b16 %v4020
    %v4192 = vunpack.c.h.b16 %v4020
    %v4193 = vunpack.c.l.b16 %v4021
    %v4194 = vunpack.c.h.b16 %v4021
    %v4195 = vunpack.c.l.b16 %v4022
    %v4196 = vunpack.c.h.b16 %v4022
    %v4197 = vunpack.c.l.b16 %v4023
    %v4198 = vunpack.c.h.b16 %v4023
    %v4199 = vunpack.c.l.b16 %v4024
    %v4200 = vunpack.c.h.b16 %v4024
    %v4201 = vunpack.c.l.b16 %v4025
    %v4202 = vunpack.c.h.b16 %v4025
    %v4203 = vunpack.c.l.b16 %v4026
    %v4204 = vunpack.c.h.b16 %v4026
    %v4205 = vunpack.c.l.b16 %v4027
    %v4206 = vunpack.c.h.b16 %v4027
    %v4207 = vunpack.c.l.b16 %v4028
    %v4208 = vunpack.c.h.b16 %v4028
    %v4209 = vunpack.c.l.b16 %v4029
    %v4210 = vunpack.c.h.b16 %v4029
    %v4211 = vunpack.c.l.b16 %v4030
    %v4212 = vunpack.c.h.b16 %v4030
    %v4213 = vunpack.c.l.b16 %v4031
    %v4214 = vunpack.c.h.b16 %v4031
    %v4215 = vunpack.c.l.b16 %v4032
    %v4216 = vunpack.c.h.b16 %v4032
    %v4217 = vunpack.c.l.b16 %v4033
    %v4218 = vunpack.c.h.b16 %v4033
    %v4219 = vunpack.c.l.b16 %v4034
    %v4220 = vunpack.c.h.b16 %v4034
    %v4221 = vunpack.c.l.b16 %v4035
    %v4222 = vunpack.c.h.b16 %v4035
    %v4223 = vunpack.c.l.b16 %v4036
    %v4224 = vunpack.c.h.b16 %v4036
    %v4225 = vunpack.c.l.b16 %v4037
    %v4226 = vunpack.c.h.b16 %v4037
    %v4227 = vunpack.c.l.b16 %v4038
    %v4228 = vunpack.c.h.b16 %v4038
    %v4229 = vunpack.c.l.b16 %v4039
    %v4230 = vunpack.c.h.b16 %v4039
    %v4231 = vunpack.c.l.b16 %v4040
    %v4232 = vunpack.c.h.b16 %v4040
    %v4233 = vunpack.c.l.b16 %v4041
    %v4234 = vunpack.c.h.b16 %v4041
    %v4235 = vunpack.c.l.b16 %v4042
    %v4236 = vunpack.c.h.b16 %v4042
    %v4237 = vunpack.c.l.b16 %v4043
    %v4238 = vunpack.c.h.b16 %v4043
    %v4239 = vunpack.c.l.b16 %v4044
    %v4240 = vunpack.c.h.b16 %v4044
    %v4241 = vunpack.c.l.b16 %v4045
    %v4242 = vunpack.c.h.b16 %v4045
    %v4243 = vunpack.c.l.b16 %v4046
    %v4244 = vunpack.c.h.b16 %v4046
    %v4245 = vunpack.c.l.b16 %v4047
    %v4246 = vunpack.c.h.b16 %v4047
    %v4247 = vunpack.c.l.b16 %v4048
    %v4248 = vunpack.c.h.b16 %v4048
    %v4249 = vunpack.c.l.b16 %v4049
    %v4250 = vunpack.c.h.b16 %v4049
    %v4251 = vunpack.c.l.b16 %v4050
    %v4252 = vunpack.c.h.b16 %v4050
    %v4253 = vunpack.c.l.b16 %v4051
    %v4254 = vunpack.c.h.b16 %v4051
    %v4255 = vunpack.c.l.b16 %v4052
    %v4256 = vunpack.c.h.b16 %v4052
    %v4257 = vpack.c.b16 %v4131, %v4129
    %v4258 = vpack.c.b16 %v4132, %v4130
    %v4259 = vpack.c.b16 %v4135, %v4133
    %v4260 = vpack.c.b16 %v4136, %v4134
    %v4261 = vpack.c.b16 %v4139, %v4137
    %v4262 = vpack.c.b16 %v4140, %v4138
    %v4263 = vpack.c.b16 %v4143, %v4141
    %v4264 = vpack.c.b16 %v4144, %v4142
    %v4265 = vpack.c.b16 %v4147, %v4145
    %v4266 = vpack.c.b16 %v4148, %v4146
    %v4267 = vpack.c.b16 %v4151, %v4149
    %v4268 = vpack.c.b16 %v4152, %v4150
    %v4269 = vpack.c.b16 %v4155, %v4153
    %v4270 = vpack.c.b16 %v4156, %v4154
    %v4271 = vpack.c.b16 %v4159, %v4157
    %v4272 = vpack.c.b16 %v4160, %v4158
    %v4273 = vpack.c.b16 %v4163, %v4161
    %v4274 = vpack.c.b16 %v4164, %v4162
    %v4275 = vpack.c.b16 %v4167, %v4165
    %v4276 = vpack.c.b16 %v4168, %v4166
    %v4277 = vpack.c.b16 %v4171, %v4169
    %v4278 = vpack.c.b16 %v4172, %v4170
    %v4279 = vpack.c.b16 %v4175, %v4173
    %v4280 = vpack.c.b16 %v4176, %v4174
    %v4281 = vpack.c.b16 %v4179, %v4177
    %v4282 = vpack.c.b16 %v4180, %v4178
    %v4283 = vpack.c.b16 %v4183, %v4181
    %v4284 = vpack.c.b16 %v4184, %v4182
    %v4285 = vpack.c.b16 %v4187, %v4185
    %v4286 = vpack.c.b16 %v4188, %v4186
    %v4287 = vpack.c.b16 %v4191, %v4189
    %v4288 = vpack.c.b16 %v4192, %v4190
    %v4289 = vpack.c.b16 %v4195, %v4193
    %v4290 = vpack.c.b16 %v4196, %v4194
    %v4291 = vpack.c.b16 %v4199, %v4197
    %v4292 = vpack.c.b16 %v4200, %v4198
    %v4293 = vpack.c.b16 %v4203, %v4201
    %v4294 = vpack.c.b16 %v4204, %v4202
    %v4295 = vpack.c.b16 %v4207, %v4205
    %v4296 = vpack.c.b16 %v4208, %v4206
    %v4297 = vpack.c.b16 %v4211, %v4209
    %v4298 = vpack.c.b16 %v4212, %v4210
    %v4299 = vpack.c.b16 %v4215, %v4213
    %v4300 = vpack.c.b16 %v4216, %v4214
    %v4301 = vpack.c.b16 %v4219, %v4217
    %v4302 = vpack.c.b16 %v4220, %v4218
    %v4303 = vpack.c.b16 %v4223, %v4221
    %v4304 = vpack.c.b16 %v4224, %v4222
    %v4305 = vpack.c.b16 %v4227, %v4225
    %v4306 = vpack.c.b16 %v4228, %v4226
    %v4307 = vpack.c.b16 %v4231, %v4229
    %v4308 = vpack.c.b16 %v4232, %v4230
    %v4309 = vpack.c.b16 %v4235, %v4233
    %v4310 = vpack.c.b16 %v4236, %v4234
    %v4311 = vpack.c.b16 %v4239, %v4237
    %v4312 = vpack.c.b16 %v4240, %v4238
    %v4313 = vpack.c.b16 %v4243, %v4241
    %v4314 = vpack.c.b16 %v4244, %v4242
    %v4315 = vpack.c.b16 %v4247, %v4245
    %v4316 = vpack.c.b16 %v4248, %v4246
    %v4317 = vpack.c.b16 %v4251, %v4249
    %v4318 = vpack.c.b16 %v4252, %v4250
    %v4319 = vpack.c.b16 %v4255, %v4253
    %v4320 = vpack.c.b16 %v4256, %v4254
    %4385 = vmatprep.subr.bf16.mxu0 %v4272
    %4386 = vmatpush1.bf16.msra.mxu0 %v4271
    %4387 = vmatprep.subr.bf16.mxu0 %v4270
    %4388 = vmatpush1.bf16.msra.mxu0 %v4269
    %4389 = vmatprep.subr.bf16.mxu0 %v4268
    %4390 = vmatpush1.bf16.msra.mxu0 %v4267
    %4391 = vmatprep.subr.bf16.mxu0 %v4266
    %4392 = vmatpush1.bf16.msra.mxu0 %v4265
    %4393 = vmatprep.subr.bf16.mxu0 %v4264
    %4394 = vmatpush1.bf16.msra.mxu0 %v4263
    %4395 = vmatprep.subr.bf16.mxu0 %v4262
    %4396 = vmatpush1.bf16.msra.mxu0 %v4261
    %4397 = vmatprep.subr.bf16.mxu0 %v4260
    %4398 = vmatpush1.bf16.msra.mxu0 %v4259
    %4399 = vmatprep.subr.bf16.mxu0 %v4258
    %4400 = vmatpush1.bf16.msra.mxu0 %v4257
    %4401 = vmatprep.subr.bf16.mxu0 %v4288
    %4402 = vmatpush2.bf16.msra.mxu0 %v4287
    %4403 = vmatprep.subr.bf16.mxu0 %v4286
    %4404 = vmatpush2.bf16.msra.mxu0 %v4285
    %4405 = vmatprep.subr.bf16.mxu0 %v4284
    %4406 = vmatpush2.bf16.msra.mxu0 %v4283
    %4407 = vmatprep.subr.bf16.mxu0 %v4282
    %4408 = vmatpush2.bf16.msra.mxu0 %v4281
    %4409 = vmatprep.subr.bf16.mxu0 %v4280
    %4410 = vmatpush2.bf16.msra.mxu0 %v4279
    %4411 = vmatprep.subr.bf16.mxu0 %v4278
    %4412 = vmatpush2.bf16.msra.mxu0 %v4277
    %4413 = vmatprep.subr.bf16.mxu0 %v4276
    %4414 = vmatpush2.bf16.msra.mxu0 %v4275
    %4415 = vmatprep.subr.bf16.mxu0 %v4274
    %4416 = vmatpush2.bf16.msra.mxu0 %v4273
    %4417 = vmatprep.mubr.bf16.mxu0 %v3986
    %4418 = vmatmul.mubr.bf16.gmra.mxu0 %v3985
    %v4419 = vpop.f32.mrf.mxu0
    %v4420 = vadd.f32 %v4058, %v4419
    %v4421 = vpop.f32.mrf.mxu0
    %v4422 = vadd.f32 %v4062, %v4421
    %v4423 = vpop.f32.mrf.mxu0
    %v4424 = vpop.f32.mrf.mxu0
    %4425 = vdwg.mxu0
    %4426 = vmatprep.subr.bf16.mxu0 %v4304
    %4427 = vmatpush1.bf16.msra.mxu0 %v4303
    %4428 = vmatprep.subr.bf16.mxu0 %v4302
    %4429 = vmatpush1.bf16.msra.mxu0 %v4301
    %4430 = vmatprep.subr.bf16.mxu0 %v4300
    %4431 = vmatpush1.bf16.msra.mxu0 %v4299
    %4432 = vmatprep.subr.bf16.mxu0 %v4298
    %4433 = vmatpush1.bf16.msra.mxu0 %v4297
    %4434 = vmatprep.subr.bf16.mxu0 %v4296
    %4435 = vmatpush1.bf16.msra.mxu0 %v4295
    %4436 = vmatprep.subr.bf16.mxu0 %v4294
    %4437 = vmatpush1.bf16.msra.mxu0 %v4293
    %4438 = vmatprep.subr.bf16.mxu0 %v4292
    %4439 = vmatpush1.bf16.msra.mxu0 %v4291
    %4440 = vmatprep.subr.bf16.mxu0 %v4290
    %4441 = vmatpush1.bf16.msra.mxu0 %v4289
    %4442 = vmatprep.subr.bf16.mxu0 %v4320
    %4443 = vmatpush2.bf16.msra.mxu0 %v4319
    %4444 = vmatprep.subr.bf16.mxu0 %v4318
    %4445 = vmatpush2.bf16.msra.mxu0 %v4317
    %4446 = vmatprep.subr.bf16.mxu0 %v4316
    %4447 = vmatpush2.bf16.msra.mxu0 %v4315
    %4448 = vmatprep.subr.bf16.mxu0 %v4314
    %4449 = vmatpush2.bf16.msra.mxu0 %v4313
    %4450 = vmatprep.subr.bf16.mxu0 %v4312
    %4451 = vmatpush2.bf16.msra.mxu0 %v4311
    %4452 = vmatprep.subr.bf16.mxu0 %v4310
    %4453 = vmatpush2.bf16.msra.mxu0 %v4309
    %4454 = vmatprep.subr.bf16.mxu0 %v4308
    %4455 = vmatpush2.bf16.msra.mxu0 %v4307
    %4456 = vmatprep.subr.bf16.mxu0 %v4306
    %4457 = vmatpush2.bf16.msra.mxu0 %v4305
    %4458 = vmatprep.mubr.bf16.mxu0 %v3988
    %4459 = vmatmul.mubr.bf16.gmra.mxu0 %v3987
    %v4460 = vpop.f32.mrf.mxu0
    %v4461 = vadd.f32 %v4420, %v4460
    %v4462 = vpop.f32.mrf.mxu0
    %v4463 = vadd.f32 %v4422, %v4462
    %v4464 = vpop.f32.mrf.mxu0
    %v4465 = vpop.f32.mrf.mxu0
    %4466 = vdwg.mxu0
    %v4467 = vtanh.pop %v4461
    %v4468 = vtanh.pop %v4463
    %v4469 = vmul.f32 %v4467, 6.0
    %v4470 = vmul.f32 %v4468, 6.0
    %4471 = vst [vmem:[#allocation25] sm:$0xff] %v4469
    %4472 = vst [vmem:[#allocation25 + $0x8] sm:$0xff] %v4470
    %4473 = vst [vmem:[#allocation26] sm:$0xff] %v3327
    %4474 = vst [vmem:[#allocation26 + $0x8] sm:$0xff] %v3329
    // Predicated region
    $region114: #{tpu_custom_call.1} parent=1 // pred_check
      _
    $region115: #{tpu_custom_call.1} parent=1 // pred_check_branch
      %4476 = sbr.rel (0) target = $region117
    $region116: #{tpu_custom_call.1} parent=1 // pred_region
      %s4478 = ssub.s32 256, 256
      %4479 = vsyncadd [#allocation4], %s4478
      %s4481 = sshll.u32 [#allocation25], 4
      %s4482 = int_to_ptr.vmem [resolvable:$true] %s4481
      %4484 = dma.vmem_to_hbm [thread:$0]  %s4482, 256, %s14, [#allocation4]
    $region117: #{tpu_custom_call.1} parent=1 // pred_fallthru
      _
    // Predicated region
    $region118: #{tpu_custom_call.1} parent=1 // pred_check
      _
    $region119: #{tpu_custom_call.1} parent=1 // pred_check_branch
      %4486 = sbr.rel (0) target = $region121
    $region120: #{tpu_custom_call.1} parent=1 // pred_region
      %s4488 = ssub.s32 256, 256
      %4489 = vsyncadd [#allocation27], %s4488
      %s4491 = sshll.u32 [#allocation26], 4
      %s4492 = int_to_ptr.vmem [resolvable:$true] %s4491
      %4494 = dma.vmem_to_hbm [thread:$0]  %s4492, 256, %s15, [#allocation27]
    $region121: #{tpu_custom_call.1} parent=1 // pred_fallthru
      _
    // Predicated region
    $region122: #{tpu_custom_call.1} parent=1 // pred_check
      _
    $region123: #{tpu_custom_call.1} parent=1 // pred_check_branch
      %4496 = sbr.rel (0) target = $region125
    $region124: #{tpu_custom_call.1} parent=1 // pred_region
      %4497 = dma.done [#allocation4], 256
    $region125: #{tpu_custom_call.1} parent=1 // pred_fallthru
      _
    // Predicated region
    $region126: #{tpu_custom_call.1} parent=1 // pred_check
      _
    $region127: #{tpu_custom_call.1} parent=1 // pred_check_branch
      %4499 = sbr.rel (0) target = $region129
    $region128: #{tpu_custom_call.1} parent=1 // pred_region
      %4500 = dma.done [#allocation27], 256
    $region129: #{tpu_custom_call.1} parent=1 // pred_fallthru
      _
    %4501 = vsyncpa [#allocation3], 1
    %4502 = vsyncpa [#allocation6], 1
    %4503 = vsyncpa [#allocation9], 1
    %4504 = vsyncpa [#allocation12], 1
    %4505 = vsyncpa [#allocation15], 1
    %4506 = vsyncpa [#allocation18], 1
    %4507 = vsyncpa [#allocation21], 1
    %4508 = vsyncpa [#allocation24], 1
    %4509 = vsyncpa [#allocation4], 1
    %4510 = vsyncpa [#allocation27], 1

</llo_original>
